<compile_context>
chip_gen: v7x
topology: tpu7x:2x2x1
jax: 0.10.0
libtpu: 0.0.40
codegen_flags: <defaults>
</compile_context>

<pallas_src>
import functools

import jax
import jax.numpy as jnp
from jax.experimental import pallas as pl
from jax.experimental.pallas import tpu as pltpu


def _elman_rnn_kernel(*refs, num_layers, t_blk, b_blk, d):
    """One grid step == one (batch-block, time-block) tile.

    Refs (L > 1): x, wh0, b0, uh0, wh_rest, uh_rest, b_rest, out, xp_stage, h
    Refs (L == 1): x, wh0, b0, uh0, out, xp_stage, h
      x:        (b_blk, t_blk, D)   raw input tile (f32)
      wh0/uh0:  (D, D)              layer-0 weights (param_dtype, resident)
      b0:       (1, D)              layer-0 bias (f32, resident)
      wh_rest:  (L-1, D, D)         input->hidden weights, layers 1..L-1
      uh_rest:  (L-1, D, D)         hidden->hidden weights, layers 1..L-1
      b_rest:   (L-1, 1, D)         biases, layers 1..L-1 (f32)
      out:      (b_blk, t_blk, D)   top-layer hidden states for this tile
      xp_stage: (b_blk, t_blk, D)   f32 scratch for x @ Wh0 + b0
      h:        (L, b_blk, D)       f32 hidden state carried across time blocks
    """
    if num_layers > 1:
        (x_ref, wh0_ref, b0_ref, uh0_ref, whr_ref, uhr_ref, br_ref,
         out_ref, xp_ref, h_ref) = refs
    else:
        (x_ref, wh0_ref, b0_ref, uh0_ref, out_ref, xp_ref, h_ref) = refs
        whr_ref = uhr_ref = br_ref = None

    cdt = wh0_ref.dtype  # dtype of the MXU operands (bf16 or f32)

    # The hidden state is carried across time blocks in VMEM scratch; this is
    # only correct because the time axis is the innermost ("arbitrary") grid
    # axis, so each batch block sees its time blocks contiguously in order.
    @pl.when(pl.program_id(1) == 0)
    def _():
        h_ref[...] = jnp.zeros_like(h_ref)

    # ---- Layer-0 input projection for the whole tile, off the serial path:
    # one large (b_blk*t_blk, D) @ (D, D) MXU matmul, f32 accumulation.
    x2d = x_ref[...].reshape(b_blk * t_blk, d).astype(cdt)
    xp = jnp.dot(x2d, wh0_ref[...], preferred_element_type=jnp.float32)
    xp = xp + b0_ref[...]                       # (1, D) bias, once per tile
    xp_ref[...] = xp.reshape(b_blk, t_blk, d)

    # ---- Hoisted per-layer bias broadcasts (JAX would re-emit them per step).
    biases = [jnp.broadcast_to(br_ref[l], (b_blk, d))
              for l in range(num_layers - 1)]

    # ---- Serial recurrence.  t_blk is capped (<=16) by the wrapper so this
    # static unroll stays within the vreg budget.
    for j in range(t_blk):
        # Layer 0: only the recurrent term h0 @ Uh0 remains on the serial path.
        pre = xp_ref[:, j, :] + jnp.dot(
            h_ref[0].astype(cdt), uh0_ref[...],
            preferred_element_type=jnp.float32)
        h = jnp.tanh(pre)
        h_ref[0] = h
        inp = h

        # Layers 1..L-1: two accumulating dots; no per-step concat copy.
        for l in range(1, num_layers):
            pre = (jnp.dot(inp.astype(cdt), whr_ref[l - 1],
                           preferred_element_type=jnp.float32)
                   + jnp.dot(h_ref[l].astype(cdt), uhr_ref[l - 1],
                             preferred_element_type=jnp.float32)
                   + biases[l - 1])
            h = jnp.tanh(pre)
            h_ref[l] = h
            inp = h

        out_ref[:, j, :] = inp.astype(out_ref.dtype)


def _pick_time_block(T, max_blk=16):
    """Return (t_blk, T_pad): a sublane-dense time block and the padded
    sequence length.  Never falls back to a (b_blk, T, D) mega-tile."""
    if T <= max_blk:
        return T, T                       # block == full dim is always legal
    for cand in range(max_blk, 7, -1):
        if cand % 8 == 0 and T % cand == 0:
            return cand, T
    t_blk = 8
    return t_blk, ((T + t_blk - 1) // t_blk) * t_blk


def _num_tensorcores():
    """Best-effort TensorCore count (2 on v7x, 1 on v5e/v6e)."""
    try:
        info = pltpu.get_tpu_info()
    except Exception:
        return 1
    for name in ("num_cores", "num_tensorcores", "num_tensor_cores",
                 "core_count", "cores_per_chip", "num_cores_per_chip"):
        v = getattr(info, name, None)
        if isinstance(v, int) and 1 <= v <= 8:
            return v
    return 1


def _pick_batch_block(B, num_cores):
    """Split the batch only when a second TensorCore exists to shard the
    'parallel' axis (v7x) and each shard stays sublane-dense; on single-TC
    v5e/v6e a split would just serialize two recurrences."""
    if num_cores >= 2 and B >= 16 and B % num_cores == 0:
        bb = B // num_cores
        if bb % 8 == 0:
            return bb
    return B


def _vmem_limit_bytes(needed_bytes):
    """Generation-aware scoped-VMEM limit: <=80% of physical VMEM, >=32 MiB,
    and at least ~1.5x the estimated working set."""
    try:
        cap = getattr(pltpu.get_tpu_info(), "vmem_capacity_bytes", None)
    except Exception:
        cap = None
    if not cap:
        cap = 64 << 20                    # conservative: v7x per-TC VMEM
    hi = int(cap * 0.8)
    want = int(needed_bytes * 1.5) + (2 << 20)
    return max(min(want, hi), min(32 << 20, hi))


def elman_rnn_forward(x, wh, uh, b, *, param_dtype=jnp.bfloat16):
    """x: (B, T, D); wh/uh: (L, D, D); b: (L, D) -> (B, T, D).

    param_dtype: dtype of the MXU operands (weights + cast LHS).  bf16 is the
    performance default; accumulation, hidden state, biases and tanh are f32.
    """
    B, T, D = x.shape
    L = wh.shape[0]

    t_blk, T_pad = _pick_time_block(T)
    if T_pad != T:
        # Zero-pad the tail; padded steps are computed but discarded and
        # cannot affect earlier outputs (forward recurrence).
        x = jnp.pad(x, ((0, 0), (0, T_pad - T), (0, 0)))
    b_blk = _pick_batch_block(B, _num_tensorcores())
    assert B % b_blk == 0 and T_pad % t_blk == 0

    cdt = param_dtype
    wsize = jnp.dtype(cdt).itemsize

    wh0 = wh[0].astype(cdt)                               # (D, D)
    uh0 = uh[0].astype(cdt)                               # (D, D)
    b0 = b[0].reshape(1, D).astype(jnp.float32)           # (1, D)
    args = [x, wh0, b0, uh0]
    if L > 1:
        args += [wh[1:].astype(cdt),                      # (L-1, D, D)
                 uh[1:].astype(cdt),                      # (L-1, D, D)
                 b[1:].reshape(L - 1, 1, D).astype(jnp.float32)]

    kernel = functools.partial(_elman_rnn_kernel, num_layers=L, t_blk=t_blk,
                               b_blk=b_blk, d=D)

    # VMEM working-set estimate (x/out tiles double-buffered, weights 1 or 2
    # buffers, plus the xp-stage and hidden-state scratch).
    tile_bytes = b_blk * t_blk * D * 4
    weight_bytes = 2 * D * D * wsize + D * 4
    if L > 1:
        weight_bytes += 2 * (L - 1) * D * D * wsize + (L - 1) * D * 4
    scratch_bytes = (L * b_blk * D + b_blk * t_blk * D) * 4

    def make_call(single_buffer_weights):
        def wspec(shape):
            ndim = len(shape)
            idx = lambda bi, ti, _n=ndim: (0,) * _n
            if single_buffer_weights:
                return pl.BlockSpec(shape, idx, pipeline_mode=pl.Buffered(1))
            return pl.BlockSpec(shape, idx)

        in_specs = [pl.BlockSpec((b_blk, t_blk, D), lambda bi, ti: (bi, ti, 0)),
                    wspec((D, D)), wspec((1, D)), wspec((D, D))]
        if L > 1:
            in_specs += [wspec((L - 1, D, D)), wspec((L - 1, D, D)),
                         wspec((L - 1, 1, D))]

        wbufs = 1 if single_buffer_weights else 2
        needed = 2 * 2 * tile_bytes + wbufs * weight_bytes + scratch_bytes

        return pl.pallas_call(
            kernel,
            out_shape=jax.ShapeDtypeStruct((B, T_pad, D), x.dtype),
            grid_spec=pltpu.PrefetchScalarGridSpec(
                num_scalar_prefetch=0,
                # NOTE: the time axis must stay the innermost ("arbitrary")
                # axis -- the hidden-state scratch is carried across time
                # blocks and reset when program_id(1) == 0.
                grid=(B // b_blk, T_pad // t_blk),
                in_specs=in_specs,
                out_specs=pl.BlockSpec((b_blk, t_blk, D),
                                       lambda bi, ti: (bi, ti, 0)),
                scratch_shapes=[
                    pltpu.VMEM((b_blk, t_blk, D), jnp.float32),   # xp stage
                    pltpu.VMEM((L, b_blk, D), jnp.float32),       # hidden state
                ],
            ),
            compiler_params=pltpu.CompilerParams(
                dimension_semantics=("parallel", "arbitrary"),
                vmem_limit_bytes=_vmem_limit_bytes(needed),
            ),
        )

    # Single-buffer the resident weights only when their footprint matters;
    # fall back to default double buffering if Buffered(1) is rejected.
    single_buffer = weight_bytes >= (1 << 20) and hasattr(pl, "Buffered")
    if single_buffer:
        try:
            out = make_call(True)(*args)
        except Exception:
            out = make_call(False)(*args)
    else:
        out = make_call(False)(*args)

    return out[:, :T, :] if T_pad != T else out


def elman_rnn_reference(x, wh, uh, b, compute_dtype=None):
    """Pure-JAX reference mirroring the PyTorch module.  compute_dtype=None
    matches the f32 module (HIGHEST precision); compute_dtype=jnp.bfloat16
    mirrors the kernel's bf16-operand / f32-accumulation policy."""
    B, T, D = x.shape
    L = wh.shape[0]
    if compute_dtype is None:
        cast = lambda a: a
        prec = jax.lax.Precision.HIGHEST
    else:
        cast = lambda a: a.astype(compute_dtype)
        prec = None
    wh_c, uh_c = cast(wh), cast(uh)
    h = [jnp.zeros((B, D), jnp.float32) for _ in range(L)]
    outs = []
    for t in range(T):
        inp = x[:, t]
        for l in range(L):
            pre = (jnp.dot(cast(inp), wh_c[l], precision=prec,
                           preferred_element_type=jnp.float32)
                   + jnp.dot(cast(h[l]), uh_c[l], precision=prec,
                             preferred_element_type=jnp.float32)
                   + b[l])
            h_new = jnp.tanh(pre)
            h[l] = h_new
            inp = h_new
        outs.append(inp)
    return jnp.stack(outs, axis=1)


if __name__ == "__main__":
    # Small shapes consistent with the module's forward.
    batch, seq_len, embedding_dim, num_layers = 2, 8, 32, 2

    key = jax.random.PRNGKey(0)
    kx, kw, ku = jax.random.split(key, 3)

    x = jax.random.normal(kx, (batch, seq_len, embedding_dim), jnp.float32)
    # Deterministic parameter init matching ElmanRnnUnit.__init__:
    #   Uh ~ randn(D, D), Wh ~ randn(D, D), b = zeros(D), one set per layer.
    wh = jax.random.normal(kw, (num_layers, embedding_dim, embedding_dim),
                           jnp.float32)
    uh = jax.random.normal(ku, (num_layers, embedding_dim, embedding_dim),
                           jnp.float32)
    b = jnp.zeros((num_layers, embedding_dim), jnp.float32)

    # 1) f32 path: tight check against the PyTorch-equivalent reference.
    out_f32 = jax.block_until_ready(
        elman_rnn_forward(x, wh, uh, b, param_dtype=jnp.float32))
    ref_f32 = elman_rnn_reference(x, wh, uh, b)
    assert out_f32.shape == (batch, seq_len, embedding_dim)
    assert jnp.allclose(out_f32, ref_f32, atol=5e-3, rtol=5e-3), \
        "f32 kernel mismatch vs reference"

    # 2) bf16-weight path (performance default): check against a
    #    precision-matched reference (bf16 operands, f32 accumulation/tanh).
    out_bf16 = jax.block_until_ready(elman_rnn_forward(x, wh, uh, b))
    ref_bf16 = elman_rnn_reference(x, wh, uh, b, compute_dtype=jnp.bfloat16)
    assert out_bf16.shape == (batch, seq_len, embedding_dim)
    assert jnp.allclose(out_bf16, ref_bf16, atol=5e-3, rtol=5e-3), \
        "bf16 kernel mismatch vs precision-matched reference"

    print("KERNEL_OK")
</pallas_src>

<mosaic_0001>
module attributes {stable_mosaic.version = 11 : i64} {
  func.func @_elman_rnn_kernel(%arg0: i32, %arg1: i32, %arg2: memref<2x8x32xf32, #tpu.memory_space<vmem>>, %arg3: memref<32x32xf32, #tpu.memory_space<vmem>>, %arg4: memref<1x32xf32, #tpu.memory_space<vmem>>, %arg5: memref<32x32xf32, #tpu.memory_space<vmem>>, %arg6: memref<1x32x32xf32, #tpu.memory_space<vmem>>, %arg7: memref<1x32x32xf32, #tpu.memory_space<vmem>>, %arg8: memref<1x1x32xf32, #tpu.memory_space<vmem>>, %arg9: memref<2x8x32xf32, #tpu.memory_space<vmem>>, %arg10: memref<2x8x32xf32, #tpu.memory_space<vmem>>, %arg11: memref<2x2x32xf32, #tpu.memory_space<vmem>>) attributes {dimension_semantics = [#tpu.dimension_semantics<parallel>, #tpu.dimension_semantics<arbitrary>], iteration_bounds = array<i64: 1, 1>, scalar_prefetch = 0 : i64, scratch_operands = 2 : i64, tpu.core_type = #tpu.core_type<tc>, window_params = [{transform_indices = @transform_0, window_bounds = array<i64: 2, 8, 32>}, {pipeline_mode = #tpu.pipeline_mode<synchronous>, transform_indices = @transform_1, window_bounds = array<i64: 32, 32>}, {pipeline_mode = #tpu.pipeline_mode<synchronous>, transform_indices = @transform_2, window_bounds = array<i64: 1, 32>}, {pipeline_mode = #tpu.pipeline_mode<synchronous>, transform_indices = @transform_3, window_bounds = array<i64: 32, 32>}, {pipeline_mode = #tpu.pipeline_mode<synchronous>, transform_indices = @transform_4, window_bounds = array<i64: 1, 32, 32>}, {pipeline_mode = #tpu.pipeline_mode<synchronous>, transform_indices = @transform_5, window_bounds = array<i64: 1, 32, 32>}, {pipeline_mode = #tpu.pipeline_mode<synchronous>, transform_indices = @transform_6, window_bounds = array<i64: 1, 1, 32>}, {transform_indices = @transform_7, window_bounds = array<i64: 2, 8, 32>}]} {
    %c0_i32 = arith.constant 0 : i32
    %0 = arith.cmpi eq, %arg1, %c0_i32 : i32
    %1 = arith.extui %0 : i1 to i32
    %c0_i32_0 = arith.constant 0 : i32
    %2 = arith.cmpi ne, %1, %c0_i32_0 : i32
    scf.if %2 {
      %cst_238 = arith.constant 0.000000e+00 : f32
      %240 = vector.broadcast %cst_238 : f32 to vector<2x2x32xf32>
      %c0_239 = arith.constant 0 : index
      %c0_240 = arith.constant 0 : index
      %c0_241 = arith.constant 0 : index
      %241 = vector.load %arg11[%c0_239, %c0_240, %c0_241] : memref<2x2x32xf32, #tpu.memory_space<vmem>>, vector<2x2x32xf32>
      tpu.vector_store %arg11[%c0_239, %c0_240, %c0_241], %240 {strides = array<i32>} : memref<2x2x32xf32, #tpu.memory_space<vmem>>, vector<2x2x32xf32>,
    } else {
    }
    %c0 = arith.constant 0 : index
    %c0_1 = arith.constant 0 : index
    %c0_2 = arith.constant 0 : index
    %3 = vector.load %arg2[%c0, %c0_1, %c0_2] : memref<2x8x32xf32, #tpu.memory_space<vmem>>, vector<2x8x32xf32>
    %4 = vector.shape_cast %3 : vector<2x8x32xf32> to vector<16x32xf32>
    %c0_3 = arith.constant 0 : index
    %c0_4 = arith.constant 0 : index
    %5 = vector.load %arg3[%c0_3, %c0_4] : memref<32x32xf32, #tpu.memory_space<vmem>>, vector<32x32xf32>
    %cst = arith.constant dense<0.000000e+00> : vector<16x32xf32>
    %6 = tpu.matmul %4, %5, %cst {dimension_numbers = #tpu.dot_dimension_numbers<[1], [0], [0], [1], [0, 0, 1, 1], [], []>} : vector<16x32xf32>, vector<32x32xf32>, vector<16x32xf32> -> vector<16x32xf32>
    %c0_5 = arith.constant 0 : index
    %c0_6 = arith.constant 0 : index
    %7 = vector.load %arg4[%c0_5, %c0_6] : memref<1x32xf32, #tpu.memory_space<vmem>>, vector<1x32xf32>
    %8 = vector.broadcast %7 : vector<1x32xf32> to vector<16x32xf32>
    %9 = arith.addf %6, %8 : vector<16x32xf32>
    %10 = vector.shape_cast %9 : vector<16x32xf32> to vector<2x8x32xf32>
    %c0_7 = arith.constant 0 : index
    %c0_8 = arith.constant 0 : index
    %c0_9 = arith.constant 0 : index
    %11 = vector.load %arg10[%c0_7, %c0_8, %c0_9] : memref<2x8x32xf32, #tpu.memory_space<vmem>>, vector<2x8x32xf32>
    tpu.vector_store %arg10[%c0_7, %c0_8, %c0_9], %10 {strides = array<i32>} : memref<2x8x32xf32, #tpu.memory_space<vmem>>, vector<2x8x32xf32>,
    %c0_10 = arith.constant 0 : index
    %c0_11 = arith.constant 0 : index
    %c0_12 = arith.constant 0 : index
    %12 = vector.load %arg8[%c0_10, %c0_11, %c0_12] : memref<1x1x32xf32, #tpu.memory_space<vmem>>, vector<1x1x32xf32>
    %13 = vector.shape_cast %12 : vector<1x1x32xf32> to vector<1x32xf32>
    %14 = vector.shape_cast %13 : vector<1x32xf32> to vector<1x32xf32>
    %15 = vector.broadcast %14 : vector<1x32xf32> to vector<2x32xf32>
    %c0_13 = arith.constant 0 : index
    %c0_14 = arith.constant 0 : index
    %c0_15 = arith.constant 0 : index
    %16 = vector.load %arg10[%c0_13, %c0_14, %c0_15] : memref<2x8x32xf32, #tpu.memory_space<vmem>>, vector<2x1x32xf32>
    %17 = vector.shape_cast %16 : vector<2x1x32xf32> to vector<2x32xf32>
    %c0_16 = arith.constant 0 : index
    %c0_17 = arith.constant 0 : index
    %c0_18 = arith.constant 0 : index
    %18 = vector.load %arg11[%c0_16, %c0_17, %c0_18] : memref<2x2x32xf32, #tpu.memory_space<vmem>>, vector<1x2x32xf32>
    %19 = vector.shape_cast %18 : vector<1x2x32xf32> to vector<2x32xf32>
    %c0_19 = arith.constant 0 : index
    %c0_20 = arith.constant 0 : index
    %20 = vector.load %arg5[%c0_19, %c0_20] : memref<32x32xf32, #tpu.memory_space<vmem>>, vector<32x32xf32>
    %cst_21 = arith.constant dense<0.000000e+00> : vector<2x32xf32>
    %21 = tpu.matmul %19, %20, %cst_21 {dimension_numbers = #tpu.dot_dimension_numbers<[1], [0], [0], [1], [0, 0, 1, 1], [], []>} : vector<2x32xf32>, vector<32x32xf32>, vector<2x32xf32> -> vector<2x32xf32>
    %22 = arith.addf %17, %21 : vector<2x32xf32>
    %23 = math.tanh %22 : vector<2x32xf32>
    %c0_22 = arith.constant 0 : index
    %c0_23 = arith.constant 0 : index
    %c0_24 = arith.constant 0 : index
    %24 = vector.load %arg11[%c0_22, %c0_23, %c0_24] : memref<2x2x32xf32, #tpu.memory_space<vmem>>, vector<1x2x32xf32>
    %25 = vector.shape_cast %24 : vector<1x2x32xf32> to vector<2x32xf32>
    %26 = vector.shape_cast %23 : vector<2x32xf32> to vector<1x2x32xf32>
    tpu.vector_store %arg11[%c0_22, %c0_23, %c0_24], %26 {strides = array<i32>} : memref<2x2x32xf32, #tpu.memory_space<vmem>>, vector<1x2x32xf32>,
    %c0_25 = arith.constant 0 : index
    %c0_26 = arith.constant 0 : index
    %c0_27 = arith.constant 0 : index
    %27 = vector.load %arg6[%c0_25, %c0_26, %c0_27] : memref<1x32x32xf32, #tpu.memory_space<vmem>>, vector<1x32x32xf32>
    %28 = vector.shape_cast %27 : vector<1x32x32xf32> to vector<32x32xf32>
    %cst_28 = arith.constant dense<0.000000e+00> : vector<2x32xf32>
    %29 = tpu.matmul %23, %28, %cst_28 {dimension_numbers = #tpu.dot_dimension_numbers<[1], [0], [0], [1], [0, 0, 1, 1], [], []>} : vector<2x32xf32>, vector<32x32xf32>, vector<2x32xf32> -> vector<2x32xf32>
    %c1 = arith.constant 1 : index
    %c0_29 = arith.constant 0 : index
    %c0_30 = arith.constant 0 : index
    %30 = vector.load %arg11[%c1, %c0_29, %c0_30] : memref<2x2x32xf32, #tpu.memory_space<vmem>>, vector<1x2x32xf32>
    %31 = vector.shape_cast %30 : vector<1x2x32xf32> to vector<2x32xf32>
    %c0_31 = arith.constant 0 : index
    %c0_32 = arith.constant 0 : index
    %c0_33 = arith.constant 0 : index
    %32 = vector.load %arg7[%c0_31, %c0_32, %c0_33] : memref<1x32x32xf32, #tpu.memory_space<vmem>>, vector<1x32x32xf32>
    %33 = vector.shape_cast %32 : vector<1x32x32xf32> to vector<32x32xf32>
    %cst_34 = arith.constant dense<0.000000e+00> : vector<2x32xf32>
    %34 = tpu.matmul %31, %33, %cst_34 {dimension_numbers = #tpu.dot_dimension_numbers<[1], [0], [0], [1], [0, 0, 1, 1], [], []>} : vector<2x32xf32>, vector<32x32xf32>, vector<2x32xf32> -> vector<2x32xf32>
    %35 = arith.addf %29, %34 : vector<2x32xf32>
    %36 = arith.addf %35, %15 : vector<2x32xf32>
    %37 = math.tanh %36 : vector<2x32xf32>
    %c1_35 = arith.constant 1 : index
    %c0_36 = arith.constant 0 : index
    %c0_37 = arith.constant 0 : index
    %38 = vector.load %arg11[%c1_35, %c0_36, %c0_37] : memref<2x2x32xf32, #tpu.memory_space<vmem>>, vector<1x2x32xf32>
    %39 = vector.shape_cast %38 : vector<1x2x32xf32> to vector<2x32xf32>
    %40 = vector.shape_cast %37 : vector<2x32xf32> to vector<1x2x32xf32>
    tpu.vector_store %arg11[%c1_35, %c0_36, %c0_37], %40 {strides = array<i32>} : memref<2x2x32xf32, #tpu.memory_space<vmem>>, vector<1x2x32xf32>,
    %c0_38 = arith.constant 0 : index
    %c0_39 = arith.constant 0 : index
    %c0_40 = arith.constant 0 : index
    %41 = vector.load %arg9[%c0_38, %c0_39, %c0_40] : memref<2x8x32xf32, #tpu.memory_space<vmem>>, vector<2x1x32xf32>
    %42 = vector.shape_cast %41 : vector<2x1x32xf32> to vector<2x32xf32>
    %43 = vector.shape_cast %37 : vector<2x32xf32> to vector<2x1x32xf32>
    tpu.vector_store %arg9[%c0_38, %c0_39, %c0_40], %43 {strides = array<i32>} : memref<2x8x32xf32, #tpu.memory_space<vmem>>, vector<2x1x32xf32>,
    %c0_41 = arith.constant 0 : index
    %c1_42 = arith.constant 1 : index
    %c0_43 = arith.constant 0 : index
    %44 = vector.load %arg10[%c0_41, %c1_42, %c0_43] : memref<2x8x32xf32, #tpu.memory_space<vmem>>, vector<2x1x32xf32>
    %45 = vector.shape_cast %44 : vector<2x1x32xf32> to vector<2x32xf32>
    %c0_44 = arith.constant 0 : index
    %c0_45 = arith.constant 0 : index
    %c0_46 = arith.constant 0 : index
    %46 = vector.load %arg11[%c0_44, %c0_45, %c0_46] : memref<2x2x32xf32, #tpu.memory_space<vmem>>, vector<1x2x32xf32>
    %47 = vector.shape_cast %46 : vector<1x2x32xf32> to vector<2x32xf32>
    %c0_47 = arith.constant 0 : index
    %c0_48 = arith.constant 0 : index
    %48 = vector.load %arg5[%c0_47, %c0_48] : memref<32x32xf32, #tpu.memory_space<vmem>>, vector<32x32xf32>
    %cst_49 = arith.constant dense<0.000000e+00> : vector<2x32xf32>
    %49 = tpu.matmul %47, %48, %cst_49 {dimension_numbers = #tpu.dot_dimension_numbers<[1], [0], [0], [1], [0, 0, 1, 1], [], []>} : vector<2x32xf32>, vector<32x32xf32>, vector<2x32xf32> -> vector<2x32xf32>
    %50 = arith.addf %45, %49 : vector<2x32xf32>
    %51 = math.tanh %50 : vector<2x32xf32>
    %c0_50 = arith.constant 0 : index
    %c0_51 = arith.constant 0 : index
    %c0_52 = arith.constant 0 : index
    %52 = vector.load %arg11[%c0_50, %c0_51, %c0_52] : memref<2x2x32xf32, #tpu.memory_space<vmem>>, vector<1x2x32xf32>
    %53 = vector.shape_cast %52 : vector<1x2x32xf32> to vector<2x32xf32>
    %54 = vector.shape_cast %51 : vector<2x32xf32> to vector<1x2x32xf32>
    tpu.vector_store %arg11[%c0_50, %c0_51, %c0_52], %54 {strides = array<i32>} : memref<2x2x32xf32, #tpu.memory_space<vmem>>, vector<1x2x32xf32>,
    %c0_53 = arith.constant 0 : index
    %c0_54 = arith.constant 0 : index
    %c0_55 = arith.constant 0 : index
    %55 = vector.load %arg6[%c0_53, %c0_54, %c0_55] : memref<1x32x32xf32, #tpu.memory_space<vmem>>, vector<1x32x32xf32>
    %56 = vector.shape_cast %55 : vector<1x32x32xf32> to vector<32x32xf32>
    %cst_56 = arith.constant dense<0.000000e+00> : vector<2x32xf32>
    %57 = tpu.matmul %51, %56, %cst_56 {dimension_numbers = #tpu.dot_dimension_numbers<[1], [0], [0], [1], [0, 0, 1, 1], [], []>} : vector<2x32xf32>, vector<32x32xf32>, vector<2x32xf32> -> vector<2x32xf32>
    %c1_57 = arith.constant 1 : index
    %c0_58 = arith.constant 0 : index
    %c0_59 = arith.constant 0 : index
    %58 = vector.load %arg11[%c1_57, %c0_58, %c0_59] : memref<2x2x32xf32, #tpu.memory_space<vmem>>, vector<1x2x32xf32>
    %59 = vector.shape_cast %58 : vector<1x2x32xf32> to vector<2x32xf32>
    %c0_60 = arith.constant 0 : index
    %c0_61 = arith.constant 0 : index
    %c0_62 = arith.constant 0 : index
    %60 = vector.load %arg7[%c0_60, %c0_61, %c0_62] : memref<1x32x32xf32, #tpu.memory_space<vmem>>, vector<1x32x32xf32>
    %61 = vector.shape_cast %60 : vector<1x32x32xf32> to vector<32x32xf32>
    %cst_63 = arith.constant dense<0.000000e+00> : vector<2x32xf32>
    %62 = tpu.matmul %59, %61, %cst_63 {dimension_numbers = #tpu.dot_dimension_numbers<[1], [0], [0], [1], [0, 0, 1, 1], [], []>} : vector<2x32xf32>, vector<32x32xf32>, vector<2x32xf32> -> vector<2x32xf32>
    %63 = arith.addf %57, %62 : vector<2x32xf32>
    %64 = arith.addf %63, %15 : vector<2x32xf32>
    %65 = math.tanh %64 : vector<2x32xf32>
    %c1_64 = arith.constant 1 : index
    %c0_65 = arith.constant 0 : index
    %c0_66 = arith.constant 0 : index
    %66 = vector.load %arg11[%c1_64, %c0_65, %c0_66] : memref<2x2x32xf32, #tpu.memory_space<vmem>>, vector<1x2x32xf32>
    %67 = vector.shape_cast %66 : vector<1x2x32xf32> to vector<2x32xf32>
    %68 = vector.shape_cast %65 : vector<2x32xf32> to vector<1x2x32xf32>
    tpu.vector_store %arg11[%c1_64, %c0_65, %c0_66], %68 {strides = array<i32>} : memref<2x2x32xf32, #tpu.memory_space<vmem>>, vector<1x2x32xf32>,
    %c0_67 = arith.constant 0 : index
    %c1_68 = arith.constant 1 : index
    %c0_69 = arith.constant 0 : index
    %69 = vector.load %arg9[%c0_67, %c1_68, %c0_69] : memref<2x8x32xf32, #tpu.memory_space<vmem>>, vector<2x1x32xf32>
    %70 = vector.shape_cast %69 : vector<2x1x32xf32> to vector<2x32xf32>
    %71 = vector.shape_cast %65 : vector<2x32xf32> to vector<2x1x32xf32>
    tpu.vector_store %arg9[%c0_67, %c1_68, %c0_69], %71 {strides = array<i32>} : memref<2x8x32xf32, #tpu.memory_space<vmem>>, vector<2x1x32xf32>,
    %c0_70 = arith.constant 0 : index
    %c2 = arith.constant 2 : index
    %c0_71 = arith.constant 0 : index
    %72 = vector.load %arg10[%c0_70, %c2, %c0_71] : memref<2x8x32xf32, #tpu.memory_space<vmem>>, vector<2x1x32xf32>
    %73 = vector.shape_cast %72 : vector<2x1x32xf32> to vector<2x32xf32>
    %c0_72 = arith.constant 0 : index
    %c0_73 = arith.constant 0 : index
    %c0_74 = arith.constant 0 : index
    %74 = vector.load %arg11[%c0_72, %c0_73, %c0_74] : memref<2x2x32xf32, #tpu.memory_space<vmem>>, vector<1x2x32xf32>
    %75 = vector.shape_cast %74 : vector<1x2x32xf32> to vector<2x32xf32>
    %c0_75 = arith.constant 0 : index
    %c0_76 = arith.constant 0 : index
    %76 = vector.load %arg5[%c0_75, %c0_76] : memref<32x32xf32, #tpu.memory_space<vmem>>, vector<32x32xf32>
    %cst_77 = arith.constant dense<0.000000e+00> : vector<2x32xf32>
    %77 = tpu.matmul %75, %76, %cst_77 {dimension_numbers = #tpu.dot_dimension_numbers<[1], [0], [0], [1], [0, 0, 1, 1], [], []>} : vector<2x32xf32>, vector<32x32xf32>, vector<2x32xf32> -> vector<2x32xf32>
    %78 = arith.addf %73, %77 : vector<2x32xf32>
    %79 = math.tanh %78 : vector<2x32xf32>
    %c0_78 = arith.constant 0 : index
    %c0_79 = arith.constant 0 : index
    %c0_80 = arith.constant 0 : index
    %80 = vector.load %arg11[%c0_78, %c0_79, %c0_80] : memref<2x2x32xf32, #tpu.memory_space<vmem>>, vector<1x2x32xf32>
    %81 = vector.shape_cast %80 : vector<1x2x32xf32> to vector<2x32xf32>
    %82 = vector.shape_cast %79 : vector<2x32xf32> to vector<1x2x32xf32>
    tpu.vector_store %arg11[%c0_78, %c0_79, %c0_80], %82 {strides = array<i32>} : memref<2x2x32xf32, #tpu.memory_space<vmem>>, vector<1x2x32xf32>,
    %c0_81 = arith.constant 0 : index
    %c0_82 = arith.constant 0 : index
    %c0_83 = arith.constant 0 : index
    %83 = vector.load %arg6[%c0_81, %c0_82, %c0_83] : memref<1x32x32xf32, #tpu.memory_space<vmem>>, vector<1x32x32xf32>
    %84 = vector.shape_cast %83 : vector<1x32x32xf32> to vector<32x32xf32>
    %cst_84 = arith.constant dense<0.000000e+00> : vector<2x32xf32>
    %85 = tpu.matmul %79, %84, %cst_84 {dimension_numbers = #tpu.dot_dimension_numbers<[1], [0], [0], [1], [0, 0, 1, 1], [], []>} : vector<2x32xf32>, vector<32x32xf32>, vector<2x32xf32> -> vector<2x32xf32>
    %c1_85 = arith.constant 1 : index
    %c0_86 = arith.constant 0 : index
    %c0_87 = arith.constant 0 : index
    %86 = vector.load %arg11[%c1_85, %c0_86, %c0_87] : memref<2x2x32xf32, #tpu.memory_space<vmem>>, vector<1x2x32xf32>
    %87 = vector.shape_cast %86 : vector<1x2x32xf32> to vector<2x32xf32>
    %c0_88 = arith.constant 0 : index
    %c0_89 = arith.constant 0 : index
    %c0_90 = arith.constant 0 : index
    %88 = vector.load %arg7[%c0_88, %c0_89, %c0_90] : memref<1x32x32xf32, #tpu.memory_space<vmem>>, vector<1x32x32xf32>
    %89 = vector.shape_cast %88 : vector<1x32x32xf32> to vector<32x32xf32>
    %cst_91 = arith.constant dense<0.000000e+00> : vector<2x32xf32>
    %90 = tpu.matmul %87, %89, %cst_91 {dimension_numbers = #tpu.dot_dimension_numbers<[1], [0], [0], [1], [0, 0, 1, 1], [], []>} : vector<2x32xf32>, vector<32x32xf32>, vector<2x32xf32> -> vector<2x32xf32>
    %91 = arith.addf %85, %90 : vector<2x32xf32>
    %92 = arith.addf %91, %15 : vector<2x32xf32>
    %93 = math.tanh %92 : vector<2x32xf32>
    %c1_92 = arith.constant 1 : index
    %c0_93 = arith.constant 0 : index
    %c0_94 = arith.constant 0 : index
    %94 = vector.load %arg11[%c1_92, %c0_93, %c0_94] : memref<2x2x32xf32, #tpu.memory_space<vmem>>, vector<1x2x32xf32>
    %95 = vector.shape_cast %94 : vector<1x2x32xf32> to vector<2x32xf32>
    %96 = vector.shape_cast %93 : vector<2x32xf32> to vector<1x2x32xf32>
    tpu.vector_store %arg11[%c1_92, %c0_93, %c0_94], %96 {strides = array<i32>} : memref<2x2x32xf32, #tpu.memory_space<vmem>>, vector<1x2x32xf32>,
    %c0_95 = arith.constant 0 : index
    %c2_96 = arith.constant 2 : index
    %c0_97 = arith.constant 0 : index
    %97 = vector.load %arg9[%c0_95, %c2_96, %c0_97] : memref<2x8x32xf32, #tpu.memory_space<vmem>>, vector<2x1x32xf32>
    %98 = vector.shape_cast %97 : vector<2x1x32xf32> to vector<2x32xf32>
    %99 = vector.shape_cast %93 : vector<2x32xf32> to vector<2x1x32xf32>
    tpu.vector_store %arg9[%c0_95, %c2_96, %c0_97], %99 {strides = array<i32>} : memref<2x8x32xf32, #tpu.memory_space<vmem>>, vector<2x1x32xf32>,
    %c0_98 = arith.constant 0 : index
    %c3 = arith.constant 3 : index
    %c0_99 = arith.constant 0 : index
    %100 = vector.load %arg10[%c0_98, %c3, %c0_99] : memref<2x8x32xf32, #tpu.memory_space<vmem>>, vector<2x1x32xf32>
    %101 = vector.shape_cast %100 : vector<2x1x32xf32> to vector<2x32xf32>
    %c0_100 = arith.constant 0 : index
    %c0_101 = arith.constant 0 : index
    %c0_102 = arith.constant 0 : index
    %102 = vector.load %arg11[%c0_100, %c0_101, %c0_102] : memref<2x2x32xf32, #tpu.memory_space<vmem>>, vector<1x2x32xf32>
    %103 = vector.shape_cast %102 : vector<1x2x32xf32> to vector<2x32xf32>
    %c0_103 = arith.constant 0 : index
    %c0_104 = arith.constant 0 : index
    %104 = vector.load %arg5[%c0_103, %c0_104] : memref<32x32xf32, #tpu.memory_space<vmem>>, vector<32x32xf32>
    %cst_105 = arith.constant dense<0.000000e+00> : vector<2x32xf32>
    %105 = tpu.matmul %103, %104, %cst_105 {dimension_numbers = #tpu.dot_dimension_numbers<[1], [0], [0], [1], [0, 0, 1, 1], [], []>} : vector<2x32xf32>, vector<32x32xf32>, vector<2x32xf32> -> vector<2x32xf32>
    %106 = arith.addf %101, %105 : vector<2x32xf32>
    %107 = math.tanh %106 : vector<2x32xf32>
    %c0_106 = arith.constant 0 : index
    %c0_107 = arith.constant 0 : index
    %c0_108 = arith.constant 0 : index
    %108 = vector.load %arg11[%c0_106, %c0_107, %c0_108] : memref<2x2x32xf32, #tpu.memory_space<vmem>>, vector<1x2x32xf32>
    %109 = vector.shape_cast %108 : vector<1x2x32xf32> to vector<2x32xf32>
    %110 = vector.shape_cast %107 : vector<2x32xf32> to vector<1x2x32xf32>
    tpu.vector_store %arg11[%c0_106, %c0_107, %c0_108], %110 {strides = array<i32>} : memref<2x2x32xf32, #tpu.memory_space<vmem>>, vector<1x2x32xf32>,
    %c0_109 = arith.constant 0 : index
    %c0_110 = arith.constant 0 : index
    %c0_111 = arith.constant 0 : index
    %111 = vector.load %arg6[%c0_109, %c0_110, %c0_111] : memref<1x32x32xf32, #tpu.memory_space<vmem>>, vector<1x32x32xf32>
    %112 = vector.shape_cast %111 : vector<1x32x32xf32> to vector<32x32xf32>
    %cst_112 = arith.constant dense<0.000000e+00> : vector<2x32xf32>
    %113 = tpu.matmul %107, %112, %cst_112 {dimension_numbers = #tpu.dot_dimension_numbers<[1], [0], [0], [1], [0, 0, 1, 1], [], []>} : vector<2x32xf32>, vector<32x32xf32>, vector<2x32xf32> -> vector<2x32xf32>
    %c1_113 = arith.constant 1 : index
    %c0_114 = arith.constant 0 : index
    %c0_115 = arith.constant 0 : index
    %114 = vector.load %arg11[%c1_113, %c0_114, %c0_115] : memref<2x2x32xf32, #tpu.memory_space<vmem>>, vector<1x2x32xf32>
    %115 = vector.shape_cast %114 : vector<1x2x32xf32> to vector<2x32xf32>
    %c0_116 = arith.constant 0 : index
    %c0_117 = arith.constant 0 : index
    %c0_118 = arith.constant 0 : index
    %116 = vector.load %arg7[%c0_116, %c0_117, %c0_118] : memref<1x32x32xf32, #tpu.memory_space<vmem>>, vector<1x32x32xf32>
    %117 = vector.shape_cast %116 : vector<1x32x32xf32> to vector<32x32xf32>
    %cst_119 = arith.constant dense<0.000000e+00> : vector<2x32xf32>
    %118 = tpu.matmul %115, %117, %cst_119 {dimension_numbers = #tpu.dot_dimension_numbers<[1], [0], [0], [1], [0, 0, 1, 1], [], []>} : vector<2x32xf32>, vector<32x32xf32>, vector<2x32xf32> -> vector<2x32xf32>
    %119 = arith.addf %113, %118 : vector<2x32xf32>
    %120 = arith.addf %119, %15 : vector<2x32xf32>
    %121 = math.tanh %120 : vector<2x32xf32>
    %c1_120 = arith.constant 1 : index
    %c0_121 = arith.constant 0 : index
    %c0_122 = arith.constant 0 : index
    %122 = vector.load %arg11[%c1_120, %c0_121, %c0_122] : memref<2x2x32xf32, #tpu.memory_space<vmem>>, vector<1x2x32xf32>
    %123 = vector.shape_cast %122 : vector<1x2x32xf32> to vector<2x32xf32>
    %124 = vector.shape_cast %121 : vector<2x32xf32> to vector<1x2x32xf32>
    tpu.vector_store %arg11[%c1_120, %c0_121, %c0_122], %124 {strides = array<i32>} : memref<2x2x32xf32, #tpu.memory_space<vmem>>, vector<1x2x32xf32>,
    %c0_123 = arith.constant 0 : index
    %c3_124 = arith.constant 3 : index
    %c0_125 = arith.constant 0 : index
    %125 = vector.load %arg9[%c0_123, %c3_124, %c0_125] : memref<2x8x32xf32, #tpu.memory_space<vmem>>, vector<2x1x32xf32>
    %126 = vector.shape_cast %125 : vector<2x1x32xf32> to vector<2x32xf32>
    %127 = vector.shape_cast %121 : vector<2x32xf32> to vector<2x1x32xf32>
    tpu.vector_store %arg9[%c0_123, %c3_124, %c0_125], %127 {strides = array<i32>} : memref<2x8x32xf32, #tpu.memory_space<vmem>>, vector<2x1x32xf32>,
    %c0_126 = arith.constant 0 : index
    %c4 = arith.constant 4 : index
    %c0_127 = arith.constant 0 : index
    %128 = vector.load %arg10[%c0_126, %c4, %c0_127] : memref<2x8x32xf32, #tpu.memory_space<vmem>>, vector<2x1x32xf32>
    %129 = vector.shape_cast %128 : vector<2x1x32xf32> to vector<2x32xf32>
    %c0_128 = arith.constant 0 : index
    %c0_129 = arith.constant 0 : index
    %c0_130 = arith.constant 0 : index
    %130 = vector.load %arg11[%c0_128, %c0_129, %c0_130] : memref<2x2x32xf32, #tpu.memory_space<vmem>>, vector<1x2x32xf32>
    %131 = vector.shape_cast %130 : vector<1x2x32xf32> to vector<2x32xf32>
    %c0_131 = arith.constant 0 : index
    %c0_132 = arith.constant 0 : index
    %132 = vector.load %arg5[%c0_131, %c0_132] : memref<32x32xf32, #tpu.memory_space<vmem>>, vector<32x32xf32>
    %cst_133 = arith.constant dense<0.000000e+00> : vector<2x32xf32>
    %133 = tpu.matmul %131, %132, %cst_133 {dimension_numbers = #tpu.dot_dimension_numbers<[1], [0], [0], [1], [0, 0, 1, 1], [], []>} : vector<2x32xf32>, vector<32x32xf32>, vector<2x32xf32> -> vector<2x32xf32>
    %134 = arith.addf %129, %133 : vector<2x32xf32>
    %135 = math.tanh %134 : vector<2x32xf32>
    %c0_134 = arith.constant 0 : index
    %c0_135 = arith.constant 0 : index
    %c0_136 = arith.constant 0 : index
    %136 = vector.load %arg11[%c0_134, %c0_135, %c0_136] : memref<2x2x32xf32, #tpu.memory_space<vmem>>, vector<1x2x32xf32>
    %137 = vector.shape_cast %136 : vector<1x2x32xf32> to vector<2x32xf32>
    %138 = vector.shape_cast %135 : vector<2x32xf32> to vector<1x2x32xf32>
    tpu.vector_store %arg11[%c0_134, %c0_135, %c0_136], %138 {strides = array<i32>} : memref<2x2x32xf32, #tpu.memory_space<vmem>>, vector<1x2x32xf32>,
    %c0_137 = arith.constant 0 : index
    %c0_138 = arith.constant 0 : index
    %c0_139 = arith.constant 0 : index
    %139 = vector.load %arg6[%c0_137, %c0_138, %c0_139] : memref<1x32x32xf32, #tpu.memory_space<vmem>>, vector<1x32x32xf32>
    %140 = vector.shape_cast %139 : vector<1x32x32xf32> to vector<32x32xf32>
    %cst_140 = arith.constant dense<0.000000e+00> : vector<2x32xf32>
    %141 = tpu.matmul %135, %140, %cst_140 {dimension_numbers = #tpu.dot_dimension_numbers<[1], [0], [0], [1], [0, 0, 1, 1], [], []>} : vector<2x32xf32>, vector<32x32xf32>, vector<2x32xf32> -> vector<2x32xf32>
    %c1_141 = arith.constant 1 : index
    %c0_142 = arith.constant 0 : index
    %c0_143 = arith.constant 0 : index
    %142 = vector.load %arg11[%c1_141, %c0_142, %c0_143] : memref<2x2x32xf32, #tpu.memory_space<vmem>>, vector<1x2x32xf32>
    %143 = vector.shape_cast %142 : vector<1x2x32xf32> to vector<2x32xf32>
    %c0_144 = arith.constant 0 : index
    %c0_145 = arith.constant 0 : index
    %c0_146 = arith.constant 0 : index
    %144 = vector.load %arg7[%c0_144, %c0_145, %c0_146] : memref<1x32x32xf32, #tpu.memory_space<vmem>>, vector<1x32x32xf32>
    %145 = vector.shape_cast %144 : vector<1x32x32xf32> to vector<32x32xf32>
    %cst_147 = arith.constant dense<0.000000e+00> : vector<2x32xf32>
    %146 = tpu.matmul %143, %145, %cst_147 {dimension_numbers = #tpu.dot_dimension_numbers<[1], [0], [0], [1], [0, 0, 1, 1], [], []>} : vector<2x32xf32>, vector<32x32xf32>, vector<2x32xf32> -> vector<2x32xf32>
    %147 = arith.addf %141, %146 : vector<2x32xf32>
    %148 = arith.addf %147, %15 : vector<2x32xf32>
    %149 = math.tanh %148 : vector<2x32xf32>
    %c1_148 = arith.constant 1 : index
    %c0_149 = arith.constant 0 : index
    %c0_150 = arith.constant 0 : index
    %150 = vector.load %arg11[%c1_148, %c0_149, %c0_150] : memref<2x2x32xf32, #tpu.memory_space<vmem>>, vector<1x2x32xf32>
    %151 = vector.shape_cast %150 : vector<1x2x32xf32> to vector<2x32xf32>
    %152 = vector.shape_cast %149 : vector<2x32xf32> to vector<1x2x32xf32>
    tpu.vector_store %arg11[%c1_148, %c0_149, %c0_150], %152 {strides = array<i32>} : memref<2x2x32xf32, #tpu.memory_space<vmem>>, vector<1x2x32xf32>,
    %c0_151 = arith.constant 0 : index
    %c4_152 = arith.constant 4 : index
    %c0_153 = arith.constant 0 : index
    %153 = vector.load %arg9[%c0_151, %c4_152, %c0_153] : memref<2x8x32xf32, #tpu.memory_space<vmem>>, vector<2x1x32xf32>
    %154 = vector.shape_cast %153 : vector<2x1x32xf32> to vector<2x32xf32>
    %155 = vector.shape_cast %149 : vector<2x32xf32> to vector<2x1x32xf32>
    tpu.vector_store %arg9[%c0_151, %c4_152, %c0_153], %155 {strides = array<i32>} : memref<2x8x32xf32, #tpu.memory_space<vmem>>, vector<2x1x32xf32>,
    %c0_154 = arith.constant 0 : index
    %c5 = arith.constant 5 : index
    %c0_155 = arith.constant 0 : index
    %156 = vector.load %arg10[%c0_154, %c5, %c0_155] : memref<2x8x32xf32, #tpu.memory_space<vmem>>, vector<2x1x32xf32>
    %157 = vector.shape_cast %156 : vector<2x1x32xf32> to vector<2x32xf32>
    %c0_156 = arith.constant 0 : index
    %c0_157 = arith.constant 0 : index
    %c0_158 = arith.constant 0 : index
    %158 = vector.load %arg11[%c0_156, %c0_157, %c0_158] : memref<2x2x32xf32, #tpu.memory_space<vmem>>, vector<1x2x32xf32>
    %159 = vector.shape_cast %158 : vector<1x2x32xf32> to vector<2x32xf32>
    %c0_159 = arith.constant 0 : index
    %c0_160 = arith.constant 0 : index
    %160 = vector.load %arg5[%c0_159, %c0_160] : memref<32x32xf32, #tpu.memory_space<vmem>>, vector<32x32xf32>
    %cst_161 = arith.constant dense<0.000000e+00> : vector<2x32xf32>
    %161 = tpu.matmul %159, %160, %cst_161 {dimension_numbers = #tpu.dot_dimension_numbers<[1], [0], [0], [1], [0, 0, 1, 1], [], []>} : vector<2x32xf32>, vector<32x32xf32>, vector<2x32xf32> -> vector<2x32xf32>
    %162 = arith.addf %157, %161 : vector<2x32xf32>
    %163 = math.tanh %162 : vector<2x32xf32>
    %c0_162 = arith.constant 0 : index
    %c0_163 = arith.constant 0 : index
    %c0_164 = arith.constant 0 : index
    %164 = vector.load %arg11[%c0_162, %c0_163, %c0_164] : memref<2x2x32xf32, #tpu.memory_space<vmem>>, vector<1x2x32xf32>
    %165 = vector.shape_cast %164 : vector<1x2x32xf32> to vector<2x32xf32>
    %166 = vector.shape_cast %163 : vector<2x32xf32> to vector<1x2x32xf32>
    tpu.vector_store %arg11[%c0_162, %c0_163, %c0_164], %166 {strides = array<i32>} : memref<2x2x32xf32, #tpu.memory_space<vmem>>, vector<1x2x32xf32>,
    %c0_165 = arith.constant 0 : index
    %c0_166 = arith.constant 0 : index
    %c0_167 = arith.constant 0 : index
    %167 = vector.load %arg6[%c0_165, %c0_166, %c0_167] : memref<1x32x32xf32, #tpu.memory_space<vmem>>, vector<1x32x32xf32>
    %168 = vector.shape_cast %167 : vector<1x32x32xf32> to vector<32x32xf32>
    %cst_168 = arith.constant dense<0.000000e+00> : vector<2x32xf32>
    %169 = tpu.matmul %163, %168, %cst_168 {dimension_numbers = #tpu.dot_dimension_numbers<[1], [0], [0], [1], [0, 0, 1, 1], [], []>} : vector<2x32xf32>, vector<32x32xf32>, vector<2x32xf32> -> vector<2x32xf32>
    %c1_169 = arith.constant 1 : index
    %c0_170 = arith.constant 0 : index
    %c0_171 = arith.constant 0 : index
    %170 = vector.load %arg11[%c1_169, %c0_170, %c0_171] : memref<2x2x32xf32, #tpu.memory_space<vmem>>, vector<1x2x32xf32>
    %171 = vector.shape_cast %170 : vector<1x2x32xf32> to vector<2x32xf32>
    %c0_172 = arith.constant 0 : index
    %c0_173 = arith.constant 0 : index
    %c0_174 = arith.constant 0 : index
    %172 = vector.load %arg7[%c0_172, %c0_173, %c0_174] : memref<1x32x32xf32, #tpu.memory_space<vmem>>, vector<1x32x32xf32>
    %173 = vector.shape_cast %172 : vector<1x32x32xf32> to vector<32x32xf32>
    %cst_175 = arith.constant dense<0.000000e+00> : vector<2x32xf32>
    %174 = tpu.matmul %171, %173, %cst_175 {dimension_numbers = #tpu.dot_dimension_numbers<[1], [0], [0], [1], [0, 0, 1, 1], [], []>} : vector<2x32xf32>, vector<32x32xf32>, vector<2x32xf32> -> vector<2x32xf32>
    %175 = arith.addf %169, %174 : vector<2x32xf32>
    %176 = arith.addf %175, %15 : vector<2x32xf32>
    %177 = math.tanh %176 : vector<2x32xf32>
    %c1_176 = arith.constant 1 : index
    %c0_177 = arith.constant 0 : index
    %c0_178 = arith.constant 0 : index
    %178 = vector.load %arg11[%c1_176, %c0_177, %c0_178] : memref<2x2x32xf32, #tpu.memory_space<vmem>>, vector<1x2x32xf32>
    %179 = vector.shape_cast %178 : vector<1x2x32xf32> to vector<2x32xf32>
    %180 = vector.shape_cast %177 : vector<2x32xf32> to vector<1x2x32xf32>
    tpu.vector_store %arg11[%c1_176, %c0_177, %c0_178], %180 {strides = array<i32>} : memref<2x2x32xf32, #tpu.memory_space<vmem>>, vector<1x2x32xf32>,
    %c0_179 = arith.constant 0 : index
    %c5_180 = arith.constant 5 : index
    %c0_181 = arith.constant 0 : index
    %181 = vector.load %arg9[%c0_179, %c5_180, %c0_181] : memref<2x8x32xf32, #tpu.memory_space<vmem>>, vector<2x1x32xf32>
    %182 = vector.shape_cast %181 : vector<2x1x32xf32> to vector<2x32xf32>
    %183 = vector.shape_cast %177 : vector<2x32xf32> to vector<2x1x32xf32>
    tpu.vector_store %arg9[%c0_179, %c5_180, %c0_181], %183 {strides = array<i32>} : memref<2x8x32xf32, #tpu.memory_space<vmem>>, vector<2x1x32xf32>,
    %c0_182 = arith.constant 0 : index
    %c6 = arith.constant 6 : index
    %c0_183 = arith.constant 0 : index
    %184 = vector.load %arg10[%c0_182, %c6, %c0_183] : memref<2x8x32xf32, #tpu.memory_space<vmem>>, vector<2x1x32xf32>
    %185 = vector.shape_cast %184 : vector<2x1x32xf32> to vector<2x32xf32>
    %c0_184 = arith.constant 0 : index
    %c0_185 = arith.constant 0 : index
    %c0_186 = arith.constant 0 : index
    %186 = vector.load %arg11[%c0_184, %c0_185, %c0_186] : memref<2x2x32xf32, #tpu.memory_space<vmem>>, vector<1x2x32xf32>
    %187 = vector.shape_cast %186 : vector<1x2x32xf32> to vector<2x32xf32>
    %c0_187 = arith.constant 0 : index
    %c0_188 = arith.constant 0 : index
    %188 = vector.load %arg5[%c0_187, %c0_188] : memref<32x32xf32, #tpu.memory_space<vmem>>, vector<32x32xf32>
    %cst_189 = arith.constant dense<0.000000e+00> : vector<2x32xf32>
    %189 = tpu.matmul %187, %188, %cst_189 {dimension_numbers = #tpu.dot_dimension_numbers<[1], [0], [0], [1], [0, 0, 1, 1], [], []>} : vector<2x32xf32>, vector<32x32xf32>, vector<2x32xf32> -> vector<2x32xf32>
    %190 = arith.addf %185, %189 : vector<2x32xf32>
    %191 = math.tanh %190 : vector<2x32xf32>
    %c0_190 = arith.constant 0 : index
    %c0_191 = arith.constant 0 : index
    %c0_192 = arith.constant 0 : index
    %192 = vector.load %arg11[%c0_190, %c0_191, %c0_192] : memref<2x2x32xf32, #tpu.memory_space<vmem>>, vector<1x2x32xf32>
    %193 = vector.shape_cast %192 : vector<1x2x32xf32> to vector<2x32xf32>
    %194 = vector.shape_cast %191 : vector<2x32xf32> to vector<1x2x32xf32>
    tpu.vector_store %arg11[%c0_190, %c0_191, %c0_192], %194 {strides = array<i32>} : memref<2x2x32xf32, #tpu.memory_space<vmem>>, vector<1x2x32xf32>,
    %c0_193 = arith.constant 0 : index
    %c0_194 = arith.constant 0 : index
    %c0_195 = arith.constant 0 : index
    %195 = vector.load %arg6[%c0_193, %c0_194, %c0_195] : memref<1x32x32xf32, #tpu.memory_space<vmem>>, vector<1x32x32xf32>
    %196 = vector.shape_cast %195 : vector<1x32x32xf32> to vector<32x32xf32>
    %cst_196 = arith.constant dense<0.000000e+00> : vector<2x32xf32>
    %197 = tpu.matmul %191, %196, %cst_196 {dimension_numbers = #tpu.dot_dimension_numbers<[1], [0], [0], [1], [0, 0, 1, 1], [], []>} : vector<2x32xf32>, vector<32x32xf32>, vector<2x32xf32> -> vector<2x32xf32>
    %c1_197 = arith.constant 1 : index
    %c0_198 = arith.constant 0 : index
    %c0_199 = arith.constant 0 : index
    %198 = vector.load %arg11[%c1_197, %c0_198, %c0_199] : memref<2x2x32xf32, #tpu.memory_space<vmem>>, vector<1x2x32xf32>
    %199 = vector.shape_cast %198 : vector<1x2x32xf32> to vector<2x32xf32>
    %c0_200 = arith.constant 0 : index
    %c0_201 = arith.constant 0 : index
    %c0_202 = arith.constant 0 : index
    %200 = vector.load %arg7[%c0_200, %c0_201, %c0_202] : memref<1x32x32xf32, #tpu.memory_space<vmem>>, vector<1x32x32xf32>
    %201 = vector.shape_cast %200 : vector<1x32x32xf32> to vector<32x32xf32>
    %cst_203 = arith.constant dense<0.000000e+00> : vector<2x32xf32>
    %202 = tpu.matmul %199, %201, %cst_203 {dimension_numbers = #tpu.dot_dimension_numbers<[1], [0], [0], [1], [0, 0, 1, 1], [], []>} : vector<2x32xf32>, vector<32x32xf32>, vector<2x32xf32> -> vector<2x32xf32>
    %203 = arith.addf %197, %202 : vector<2x32xf32>
    %204 = arith.addf %203, %15 : vector<2x32xf32>
    %205 = math.tanh %204 : vector<2x32xf32>
    %c1_204 = arith.constant 1 : index
    %c0_205 = arith.constant 0 : index
    %c0_206 = arith.constant 0 : index
    %206 = vector.load %arg11[%c1_204, %c0_205, %c0_206] : memref<2x2x32xf32, #tpu.memory_space<vmem>>, vector<1x2x32xf32>
    %207 = vector.shape_cast %206 : vector<1x2x32xf32> to vector<2x32xf32>
    %208 = vector.shape_cast %205 : vector<2x32xf32> to vector<1x2x32xf32>
    tpu.vector_store %arg11[%c1_204, %c0_205, %c0_206], %208 {strides = array<i32>} : memref<2x2x32xf32, #tpu.memory_space<vmem>>, vector<1x2x32xf32>,
    %c0_207 = arith.constant 0 : index
    %c6_208 = arith.constant 6 : index
    %c0_209 = arith.constant 0 : index
    %209 = vector.load %arg9[%c0_207, %c6_208, %c0_209] : memref<2x8x32xf32, #tpu.memory_space<vmem>>, vector<2x1x32xf32>
    %210 = vector.shape_cast %209 : vector<2x1x32xf32> to vector<2x32xf32>
    %211 = vector.shape_cast %205 : vector<2x32xf32> to vector<2x1x32xf32>
    tpu.vector_store %arg9[%c0_207, %c6_208, %c0_209], %211 {strides = array<i32>} : memref<2x8x32xf32, #tpu.memory_space<vmem>>, vector<2x1x32xf32>,
    %c0_210 = arith.constant 0 : index
    %c7 = arith.constant 7 : index
    %c0_211 = arith.constant 0 : index
    %212 = vector.load %arg10[%c0_210, %c7, %c0_211] : memref<2x8x32xf32, #tpu.memory_space<vmem>>, vector<2x1x32xf32>
    %213 = vector.shape_cast %212 : vector<2x1x32xf32> to vector<2x32xf32>
    %c0_212 = arith.constant 0 : index
    %c0_213 = arith.constant 0 : index
    %c0_214 = arith.constant 0 : index
    %214 = vector.load %arg11[%c0_212, %c0_213, %c0_214] : memref<2x2x32xf32, #tpu.memory_space<vmem>>, vector<1x2x32xf32>
    %215 = vector.shape_cast %214 : vector<1x2x32xf32> to vector<2x32xf32>
    %c0_215 = arith.constant 0 : index
    %c0_216 = arith.constant 0 : index
    %216 = vector.load %arg5[%c0_215, %c0_216] : memref<32x32xf32, #tpu.memory_space<vmem>>, vector<32x32xf32>
    %cst_217 = arith.constant dense<0.000000e+00> : vector<2x32xf32>
    %217 = tpu.matmul %215, %216, %cst_217 {dimension_numbers = #tpu.dot_dimension_numbers<[1], [0], [0], [1], [0, 0, 1, 1], [], []>} : vector<2x32xf32>, vector<32x32xf32>, vector<2x32xf32> -> vector<2x32xf32>
    %218 = arith.addf %213, %217 : vector<2x32xf32>
    %219 = math.tanh %218 : vector<2x32xf32>
    %c0_218 = arith.constant 0 : index
    %c0_219 = arith.constant 0 : index
    %c0_220 = arith.constant 0 : index
    %220 = vector.load %arg11[%c0_218, %c0_219, %c0_220] : memref<2x2x32xf32, #tpu.memory_space<vmem>>, vector<1x2x32xf32>
    %221 = vector.shape_cast %220 : vector<1x2x32xf32> to vector<2x32xf32>
    %222 = vector.shape_cast %219 : vector<2x32xf32> to vector<1x2x32xf32>
    tpu.vector_store %arg11[%c0_218, %c0_219, %c0_220], %222 {strides = array<i32>} : memref<2x2x32xf32, #tpu.memory_space<vmem>>, vector<1x2x32xf32>,
    %c0_221 = arith.constant 0 : index
    %c0_222 = arith.constant 0 : index
    %c0_223 = arith.constant 0 : index
    %223 = vector.load %arg6[%c0_221, %c0_222, %c0_223] : memref<1x32x32xf32, #tpu.memory_space<vmem>>, vector<1x32x32xf32>
    %224 = vector.shape_cast %223 : vector<1x32x32xf32> to vector<32x32xf32>
    %cst_224 = arith.constant dense<0.000000e+00> : vector<2x32xf32>
    %225 = tpu.matmul %219, %224, %cst_224 {dimension_numbers = #tpu.dot_dimension_numbers<[1], [0], [0], [1], [0, 0, 1, 1], [], []>} : vector<2x32xf32>, vector<32x32xf32>, vector<2x32xf32> -> vector<2x32xf32>
    %c1_225 = arith.constant 1 : index
    %c0_226 = arith.constant 0 : index
    %c0_227 = arith.constant 0 : index
    %226 = vector.load %arg11[%c1_225, %c0_226, %c0_227] : memref<2x2x32xf32, #tpu.memory_space<vmem>>, vector<1x2x32xf32>
    %227 = vector.shape_cast %226 : vector<1x2x32xf32> to vector<2x32xf32>
    %c0_228 = arith.constant 0 : index
    %c0_229 = arith.constant 0 : index
    %c0_230 = arith.constant 0 : index
    %228 = vector.load %arg7[%c0_228, %c0_229, %c0_230] : memref<1x32x32xf32, #tpu.memory_space<vmem>>, vector<1x32x32xf32>
    %229 = vector.shape_cast %228 : vector<1x32x32xf32> to vector<32x32xf32>
    %cst_231 = arith.constant dense<0.000000e+00> : vector<2x32xf32>
    %230 = tpu.matmul %227, %229, %cst_231 {dimension_numbers = #tpu.dot_dimension_numbers<[1], [0], [0], [1], [0, 0, 1, 1], [], []>} : vector<2x32xf32>, vector<32x32xf32>, vector<2x32xf32> -> vector<2x32xf32>
    %231 = arith.addf %225, %230 : vector<2x32xf32>
    %232 = arith.addf %231, %15 : vector<2x32xf32>
    %233 = math.tanh %232 : vector<2x32xf32>
    %c1_232 = arith.constant 1 : index
    %c0_233 = arith.constant 0 : index
    %c0_234 = arith.constant 0 : index
    %234 = vector.load %arg11[%c1_232, %c0_233, %c0_234] : memref<2x2x32xf32, #tpu.memory_space<vmem>>, vector<1x2x32xf32>
    %235 = vector.shape_cast %234 : vector<1x2x32xf32> to vector<2x32xf32>
    %236 = vector.shape_cast %233 : vector<2x32xf32> to vector<1x2x32xf32>
    tpu.vector_store %arg11[%c1_232, %c0_233, %c0_234], %236 {strides = array<i32>} : memref<2x2x32xf32, #tpu.memory_space<vmem>>, vector<1x2x32xf32>,
    %c0_235 = arith.constant 0 : index
    %c7_236 = arith.constant 7 : index
    %c0_237 = arith.constant 0 : index
    %237 = vector.load %arg9[%c0_235, %c7_236, %c0_237] : memref<2x8x32xf32, #tpu.memory_space<vmem>>, vector<2x1x32xf32>
    %238 = vector.shape_cast %237 : vector<2x1x32xf32> to vector<2x32xf32>
    %239 = vector.shape_cast %233 : vector<2x32xf32> to vector<2x1x32xf32>
    tpu.vector_store %arg9[%c0_235, %c7_236, %c0_237], %239 {strides = array<i32>} : memref<2x8x32xf32, #tpu.memory_space<vmem>>, vector<2x1x32xf32>,
    return
  }
  func.func @transform_0(%arg0: i32, %arg1: i32) -> (i32, i32, i32) {
    %c0_i32 = arith.constant 0 : i32
    %c0_i32_0 = arith.constant 0 : i32
    return %arg0, %arg1, %c0_i32 : i32, i32, i32
  }
  func.func @transform_1(%arg0: i32, %arg1: i32) -> (i32, i32) {
    %c0_i32 = arith.constant 0 : i32
    %c0_i32_0 = arith.constant 0 : i32
    %c0_i32_1 = arith.constant 0 : i32
    return %c0_i32, %c0_i32_0 : i32, i32
  }
  func.func @transform_2(%arg0: i32, %arg1: i32) -> (i32, i32) {
    %c0_i32 = arith.constant 0 : i32
    %c0_i32_0 = arith.constant 0 : i32
    %c0_i32_1 = arith.constant 0 : i32
    return %c0_i32, %c0_i32_0 : i32, i32
  }
  func.func @transform_3(%arg0: i32, %arg1: i32) -> (i32, i32) {
    %c0_i32 = arith.constant 0 : i32
    %c0_i32_0 = arith.constant 0 : i32
    %c0_i32_1 = arith.constant 0 : i32
    return %c0_i32, %c0_i32_0 : i32, i32
  }
  func.func @transform_4(%arg0: i32, %arg1: i32) -> (i32, i32, i32) {
    %c0_i32 = arith.constant 0 : i32
    %c0_i32_0 = arith.constant 0 : i32
    %c0_i32_1 = arith.constant 0 : i32
    %c0_i32_2 = arith.constant 0 : i32
    return %c0_i32, %c0_i32_0, %c0_i32_1 : i32, i32, i32
  }
  func.func @transform_5(%arg0: i32, %arg1: i32) -> (i32, i32, i32) {
    %c0_i32 = arith.constant 0 : i32
    %c0_i32_0 = arith.constant 0 : i32
    %c0_i32_1 = arith.constant 0 : i32
    %c0_i32_2 = arith.constant 0 : i32
    return %c0_i32, %c0_i32_0, %c0_i32_1 : i32, i32, i32
  }
  func.func @transform_6(%arg0: i32, %arg1: i32) -> (i32, i32, i32) {
    %c0_i32 = arith.constant 0 : i32
    %c0_i32_0 = arith.constant 0 : i32
    %c0_i32_1 = arith.constant 0 : i32
    %c0_i32_2 = arith.constant 0 : i32
    return %c0_i32, %c0_i32_0, %c0_i32_1 : i32, i32, i32
  }
  func.func @transform_7(%arg0: i32, %arg1: i32) -> (i32, i32, i32) {
    %c0_i32 = arith.constant 0 : i32
    %c0_i32_0 = arith.constant 0 : i32
    return %arg0, %arg1, %c0_i32 : i32, i32, i32
  }
}

</mosaic_0001>

<llo_original>
// kernel: tpu_custom_call.1
$region0: #{tpu_custom_call.1}
  #allocation0 [shape = 'u32[]', space=smem, size = 0x4, offset = 0x4, fixed_abs, tag = 'smem constant byte address 0x4 - core index']
  #allocation1 [shape = 'u32[144,128]{1,0:T(1,128)}', space=vmem, size = 0x12000, scoped, tag = 'internal scratch']
  #allocation2 [shape = 'f32[2,8,32]{2,1,0:T(8,128)}', space=vmem, size = 0x2000, scoped, tag = 'scratch operand']
  #allocation3 [shape = 'f32[2,2,32]{2,1,0:T(2,128)}', space=vmem, size = 0x800, scoped, tag = 'scratch operand']
  %s0 = inlined_call_operand.hbm [shape: f32[2,8,32], index: 0, kind: input, shape index: {}]
  %s1 = inlined_call_operand.hbm [shape: f32[32,32], index: 1, kind: input, shape index: {}]
  %s2 = inlined_call_operand.vmem [shape: f32[1,32], index: 2, kind: input, shape index: {}]
  %s3 = inlined_call_operand.hbm [shape: f32[32,32], index: 3, kind: input, shape index: {}]
  %s4 = inlined_call_operand.hbm [shape: f32[1,32,32], index: 4, kind: input, shape index: {}]
  %s5 = inlined_call_operand.hbm [shape: f32[1,32,32], index: 5, kind: input, shape index: {}]
  %s6 = inlined_call_operand.vmem [shape: f32[1,1,32], index: 6, kind: input, shape index: {}]
  %s7 = inlined_call_operand.hbm [shape: f32[2,8,32], index: 7, kind: output, shape index: {}]
  %s8 = sld [smem:[#allocation0]]
  $region62: #{tpu_custom_call.1} parent=0
    _
  %s10 = ssub.s32 1, %s8
  %s11 = scalar_select 0, %s10, %s8
  $region1: #{tpu_custom_call.1} parent=0
    #allocation4 [shape = 'u8[8192]{0}', space=vmem, size = 0x2000, scoped, tag = 'input window, operand 0, single buffered']
    #allocation5 [shape = 's32[1]{0}', space=sflag, size = 0x4, scoped, tag = 'scoped memory for tpu_custom_call.1']
    #allocation6 [shape = 's32[1]{0}', space=sflag, size = 0x4, scoped, tag = 'scoped memory for tpu_custom_call.1']
    #allocation7 [shape = 'u8[16384]{0}', space=vmem, size = 0x4000, scoped, tag = 'input window, operand 1, single buffered']
    #allocation8 [shape = 's32[1]{0}', space=sflag, size = 0x4, scoped, tag = 'scoped memory for tpu_custom_call.1']
    #allocation9 [shape = 'u8[16384]{0}', space=vmem, size = 0x4000, scoped, tag = 'input window, operand 3, single buffered']
    #allocation10 [shape = 'u8[16384]{0}', space=vmem, size = 0x4000, scoped, tag = 'input window, operand 4, single buffered']
    #allocation11 [shape = 's32[1]{0}', space=sflag, size = 0x4, scoped, tag = 'scoped memory for tpu_custom_call.1']
    #allocation12 [shape = 'u8[16384]{0}', space=vmem, size = 0x4000, scoped, tag = 'input window, operand 5, single buffered']
    #allocation13 [shape = 'u8[8192]{0}', space=vmem, size = 0x2000, scoped, tag = 'output window, operand 0, single buffered']
    %12 = vsyncpa [#allocation5], 0
    %13 = vsyncpa [#allocation8], 0
    %14 = vsyncpa [#allocation11], 0
    %15 = vsyncpa [#allocation6], 0
    // Predicated region
    $region2: #{tpu_custom_call.1} parent=1 // pred_check
      _
    $region3: #{tpu_custom_call.1} parent=1 // pred_check_branch
      %17 = sbr.rel (0) target = $region5
    $region4: #{tpu_custom_call.1} parent=1 // pred_region
      %s19 = ssub.s32 256, 256
      %20 = vsyncadd [#allocation5], %s19
      %s21 = sshll.u32 [#allocation4], 4
      %s22 = int_to_ptr.vmem [resolvable:$true] %s21
      %27 = dma.hbm_to_vmem [thread:$0]  %s0, 256, %s22, [#allocation5], 128, 128, 8
    $region5: #{tpu_custom_call.1} parent=1 // pred_fallthru
      _
    // Predicated region
    $region6: #{tpu_custom_call.1} parent=1 // pred_check
      _
    $region7: #{tpu_custom_call.1} parent=1 // pred_check_branch
      %29 = sbr.rel (0) target = $region9
    $region8: #{tpu_custom_call.1} parent=1 // pred_region
      %s31 = ssub.s32 512, 512
      %32 = vsyncadd [#allocation8], %s31
      %s33 = sshll.u32 [#allocation7], 4
      %s34 = int_to_ptr.vmem [resolvable:$true] %s33
      %39 = dma.hbm_to_vmem [thread:$0]  %s1, 512, %s34, [#allocation8], 128, 128, 8
    $region9: #{tpu_custom_call.1} parent=1 // pred_fallthru
      _
    // Predicated region
    $region10: #{tpu_custom_call.1} parent=1 // pred_check
      _
    $region11: #{tpu_custom_call.1} parent=1 // pred_check_branch
      %41 = sbr.rel (0) target = $region13
    $region12: #{tpu_custom_call.1} parent=1 // pred_region
      _
    $region13: #{tpu_custom_call.1} parent=1 // pred_fallthru
      _
    // Predicated region
    $region14: #{tpu_custom_call.1} parent=1 // pred_check
      _
    $region15: #{tpu_custom_call.1} parent=1 // pred_check_branch
      %43 = sbr.rel (0) target = $region17
    $region16: #{tpu_custom_call.1} parent=1 // pred_region
      %s45 = ssub.s32 512, 512
      %46 = vsyncadd [#allocation8], %s45
      %s47 = sshll.u32 [#allocation9], 4
      %s48 = int_to_ptr.vmem [resolvable:$true] %s47
      %53 = dma.hbm_to_vmem [thread:$0]  %s3, 512, %s48, [#allocation8], 128, 128, 8
    $region17: #{tpu_custom_call.1} parent=1 // pred_fallthru
      _
    // Predicated region
    $region18: #{tpu_custom_call.1} parent=1 // pred_check
      _
    $region19: #{tpu_custom_call.1} parent=1 // pred_check_branch
      %55 = sbr.rel (0) target = $region21
    $region20: #{tpu_custom_call.1} parent=1 // pred_region
      %s57 = ssub.s32 512, 512
      %58 = vsyncadd [#allocation11], %s57
      %s59 = sshll.u32 [#allocation10], 4
      %s60 = int_to_ptr.vmem [resolvable:$true] %s59
      %65 = dma.hbm_to_vmem [thread:$0]  %s4, 512, %s60, [#allocation11], 128, 128, 8
    $region21: #{tpu_custom_call.1} parent=1 // pred_fallthru
      _
    // Predicated region
    $region22: #{tpu_custom_call.1} parent=1 // pred_check
      _
    $region23: #{tpu_custom_call.1} parent=1 // pred_check_branch
      %67 = sbr.rel (0) target = $region25
    $region24: #{tpu_custom_call.1} parent=1 // pred_region
      %s69 = ssub.s32 512, 512
      %70 = vsyncadd [#allocation11], %s69
      %s71 = sshll.u32 [#allocation12], 4
      %s72 = int_to_ptr.vmem [resolvable:$true] %s71
      %77 = dma.hbm_to_vmem [thread:$0]  %s5, 512, %s72, [#allocation11], 128, 128, 8
    $region25: #{tpu_custom_call.1} parent=1 // pred_fallthru
      _
    // Predicated region
    $region26: #{tpu_custom_call.1} parent=1 // pred_check
      _
    $region27: #{tpu_custom_call.1} parent=1 // pred_check_branch
      %79 = sbr.rel (0) target = $region29
    $region28: #{tpu_custom_call.1} parent=1 // pred_region
      _
    $region29: #{tpu_custom_call.1} parent=1 // pred_fallthru
      _
    // Predicated region
    $region30: #{tpu_custom_call.1} parent=1 // pred_check
      _
    $region31: #{tpu_custom_call.1} parent=1 // pred_check_branch
      %81 = sbr.rel (0) target = $region33
    $region32: #{tpu_custom_call.1} parent=1 // pred_region
      %82 = dma.done [#allocation5], 256
    $region33: #{tpu_custom_call.1} parent=1 // pred_fallthru
      _
    // Predicated region
    $region34: #{tpu_custom_call.1} parent=1 // pred_check
      _
    $region35: #{tpu_custom_call.1} parent=1 // pred_check_branch
      %84 = sbr.rel (0) target = $region37
    $region36: #{tpu_custom_call.1} parent=1 // pred_region
      %85 = dma.done [#allocation8], 512
    $region37: #{tpu_custom_call.1} parent=1 // pred_fallthru
      _
    // Predicated region
    $region38: #{tpu_custom_call.1} parent=1 // pred_check
      _
    $region39: #{tpu_custom_call.1} parent=1 // pred_check_branch
      %87 = sbr.rel (0) target = $region41
    $region40: #{tpu_custom_call.1} parent=1 // pred_region
      %88 = dma.done [#allocation8], 512
    $region41: #{tpu_custom_call.1} parent=1 // pred_fallthru
      _
    // Predicated region
    $region42: #{tpu_custom_call.1} parent=1 // pred_check
      _
    $region43: #{tpu_custom_call.1} parent=1 // pred_check_branch
      %90 = sbr.rel (0) target = $region45
    $region44: #{tpu_custom_call.1} parent=1 // pred_region
      %91 = dma.done [#allocation11], 512
    $region45: #{tpu_custom_call.1} parent=1 // pred_fallthru
      _
    // Predicated region
    $region46: #{tpu_custom_call.1} parent=1 // pred_check
      _
    $region47: #{tpu_custom_call.1} parent=1 // pred_check_branch
      %93 = sbr.rel (0) target = $region49
    $region48: #{tpu_custom_call.1} parent=1 // pred_region
      %94 = dma.done [#allocation11], 512
    $region49: #{tpu_custom_call.1} parent=1 // pred_fallthru
      _
    %p95 = scmp.eq.s32.totalorder 0, 0
    // Predicated region
    $region50: #{tpu_custom_call.1} parent=1 // pred_check
      %p96 = pneg %p95
    $region51: #{tpu_custom_call.1} parent=1 // pred_check_branch
      %98 = sbr.rel (%p96) target = $region53
    $region52: #{tpu_custom_call.1} parent=1 // pred_region
      %vm99 = vcmask 254976
      %100 = vst.msk [vmem:[#allocation3] sm:$0x3] %vm99, 0.0
      %101 = vst.msk [vmem:[#allocation3 + $0x2] sm:$0x3] %vm99, 0.0
    $region53: #{tpu_custom_call.1} parent=1 // pred_fallthru
      _
    %v102 = vld [vmem:[#allocation4] sm:$0xff]
    %v103 = vld [vmem:[#allocation4 + $0x8] sm:$0xff]
    %v104 = vld [vmem:[#allocation7] sm:$0xff]
    %v105 = vld [vmem:[#allocation7 + $0x8] sm:$0xff]
    %v106 = vld [vmem:[#allocation7 + $0x10] sm:$0xff]
    %v107 = vld [vmem:[#allocation7 + $0x18] sm:$0xff]
    %v108 = vld [vmem:[%s2] sm:$0x1]
    %v110 = vlaneseq
    %v111 = vshrl.u32 %v110, 7
    %v112 = vsub.s32 0, %v111
    %v113 = vrot.slane %v108, %v112
    %vm115 = vcmask 261120
    %v117 = vsel %vm115, %v102, 0
    %v120 = vsel %vm115, %v103, 0
    %122 = vmatprep.subr.mxu0 0.0
    %123 = vmatpush1.msra.mxu0 %v104
    %124 = vmatprep.subr.mxu0 0.0
    %125 = vmatpush1.msra.mxu0 %v105
    %126 = vmatprep.subr.mxu0 0.0
    %127 = vmatpush1.msra.mxu0 %v106
    %128 = vmatprep.subr.mxu0 0.0
    %129 = vmatpush1.msra.mxu0 %v107
    %130 = vmatprep.subr.mxu0 0.0
    %131 = vmatpush1.msra.mxu0 0.0
    %132 = vmatprep.subr.mxu0 0.0
    %133 = vmatpush1.msra.mxu0 0.0
    %134 = vmatprep.subr.mxu0 0.0
    %135 = vmatpush1.msra.mxu0 0.0
    %136 = vmatprep.subr.mxu0 0.0
    %137 = vmatpush1.msra.mxu0 0.0
    %138 = vmatprep.subr.mxu0 0.0
    %139 = vmatpush1.msra.mxu0 0.0
    %140 = vmatprep.subr.mxu0 0.0
    %141 = vmatpush1.msra.mxu0 0.0
    %142 = vmatprep.subr.mxu0 0.0
    %143 = vmatpush1.msra.mxu0 0.0
    %144 = vmatprep.subr.mxu0 0.0
    %145 = vmatpush1.msra.mxu0 0.0
    %146 = vmatprep.subr.mxu0 0.0
    %147 = vmatpush1.msra.mxu0 0.0
    %148 = vmatprep.subr.mxu0 0.0
    %149 = vmatpush1.msra.mxu0 0.0
    %150 = vmatprep.subr.mxu0 0.0
    %151 = vmatpush1.msra.mxu0 0.0
    %152 = vmatprep.subr.mxu0 0.0
    %153 = vmatpush1.msra.mxu0 0.0
    %154 = vmatprep.subr.mxu0 0.0
    %155 = vmatpush1.msra.mxu0 0.0
    %156 = vmatprep.subr.mxu0 0.0
    %157 = vmatpush1.msra.mxu0 0.0
    %158 = vmatprep.subr.mxu0 0.0
    %159 = vmatpush1.msra.mxu0 0.0
    %160 = vmatprep.subr.mxu0 0.0
    %161 = vmatpush1.msra.mxu0 0.0
    %162 = vmatprep.subr.mxu0 0.0
    %163 = vmatpush1.msra.mxu0 0.0
    %164 = vmatprep.subr.mxu0 0.0
    %165 = vmatpush1.msra.mxu0 0.0
    %166 = vmatprep.subr.mxu0 0.0
    %167 = vmatpush1.msra.mxu0 0.0
    %168 = vmatprep.subr.mxu0 0.0
    %169 = vmatpush1.msra.mxu0 0.0
    %170 = vmatprep.subr.mxu0 0.0
    %171 = vmatpush1.msra.mxu0 0.0
    %172 = vmatprep.subr.mxu0 0.0
    %173 = vmatpush1.msra.mxu0 0.0
    %174 = vmatprep.subr.mxu0 0.0
    %175 = vmatpush1.msra.mxu0 0.0
    %176 = vmatprep.subr.mxu0 0.0
    %177 = vmatpush1.msra.mxu0 0.0
    %178 = vmatprep.subr.mxu0 0.0
    %179 = vmatpush1.msra.mxu0 0.0
    %180 = vmatprep.subr.mxu0 0.0
    %181 = vmatpush1.msra.mxu0 0.0
    %182 = vmatprep.subr.mxu0 0.0
    %183 = vmatpush1.msra.mxu0 0.0
    %184 = vmatprep.subr.mxu0 0.0
    %185 = vmatpush1.msra.mxu0 0.0
    %186 = vmatprep.mubr.f32.mxu0 0.0
    %187 = vmatmul.mubr.f32.gmra.mrb[0].mxu0 %v117
    %v188 = vpop.f32.mrb[0].mxu0
    %v189 = vadd.f32 %v113, %v188
    %v190 = vpop.f32.mrb[0].mxu0
    %191 = vmatprep.mubr.f32.mxu0 0.0
    %192 = vmatmul.mubr.f32.gmra.mrb[0].mxu0 %v120
    %v193 = vpop.f32.mrb[0].mxu0
    %v194 = vadd.f32 %v113, %v193
    %v195 = vpop.f32.mrb[0].mxu0
    %196 = vdwg.mxu0
    %197 = vst.msk [vmem:[#allocation2] sm:$0xff] %vm115, %v189
    %198 = vst.msk [vmem:[#allocation2 + $0x8] sm:$0xff] %vm115, %v194
    %v199 = vld [vmem:[%s6] sm:$0x1]
    %v201 = vlaneseq
    %v202 = vshrl.u32 %v201, 7
    %v203 = vsub.s32 0, %v202
    %v204 = vrot.slane %v199, %v203
    %v206 = vld [vmem:[#allocation2] sm:$0x1]
    %v207 = vld [vmem:[#allocation2 + $0x8] sm:$0x1]
    %v208 = vld [vmem:[#allocation3] sm:$0x3]
    %v209 = vld [vmem:[#allocation9] sm:$0xff]
    %v210 = vld [vmem:[#allocation9 + $0x8] sm:$0xff]
    %v211 = vld [vmem:[#allocation9 + $0x10] sm:$0xff]
    %v212 = vld [vmem:[#allocation9 + $0x18] sm:$0xff]
    %v214 = vsel %vm115, %v208, 0
    %216 = vmatprep.subr.mxu0 0.0
    %217 = vmatpush1.msra.mxu0 %v209
    %218 = vmatprep.subr.mxu0 0.0
    %219 = vmatpush1.msra.mxu0 %v210
    %220 = vmatprep.subr.mxu0 0.0
    %221 = vmatpush1.msra.mxu0 %v211
    %222 = vmatprep.subr.mxu0 0.0
    %223 = vmatpush1.msra.mxu0 %v212
    %224 = vmatprep.subr.mxu0 0.0
    %225 = vmatpush1.msra.mxu0 0.0
    %226 = vmatprep.subr.mxu0 0.0
    %227 = vmatpush1.msra.mxu0 0.0
    %228 = vmatprep.subr.mxu0 0.0
    %229 = vmatpush1.msra.mxu0 0.0
    %230 = vmatprep.subr.mxu0 0.0
    %231 = vmatpush1.msra.mxu0 0.0
    %232 = vmatprep.subr.mxu0 0.0
    %233 = vmatpush1.msra.mxu0 0.0
    %234 = vmatprep.subr.mxu0 0.0
    %235 = vmatpush1.msra.mxu0 0.0
    %236 = vmatprep.subr.mxu0 0.0
    %237 = vmatpush1.msra.mxu0 0.0
    %238 = vmatprep.subr.mxu0 0.0
    %239 = vmatpush1.msra.mxu0 0.0
    %240 = vmatprep.subr.mxu0 0.0
    %241 = vmatpush1.msra.mxu0 0.0
    %242 = vmatprep.subr.mxu0 0.0
    %243 = vmatpush1.msra.mxu0 0.0
    %244 = vmatprep.subr.mxu0 0.0
    %245 = vmatpush1.msra.mxu0 0.0
    %246 = vmatprep.subr.mxu0 0.0
    %247 = vmatpush1.msra.mxu0 0.0
    %248 = vmatprep.subr.mxu0 0.0
    %249 = vmatpush1.msra.mxu0 0.0
    %250 = vmatprep.subr.mxu0 0.0
    %251 = vmatpush1.msra.mxu0 0.0
    %252 = vmatprep.subr.mxu0 0.0
    %253 = vmatpush1.msra.mxu0 0.0
    %254 = vmatprep.subr.mxu0 0.0
    %255 = vmatpush1.msra.mxu0 0.0
    %256 = vmatprep.subr.mxu0 0.0
    %257 = vmatpush1.msra.mxu0 0.0
    %258 = vmatprep.subr.mxu0 0.0
    %259 = vmatpush1.msra.mxu0 0.0
    %260 = vmatprep.subr.mxu0 0.0
    %261 = vmatpush1.msra.mxu0 0.0
    %262 = vmatprep.subr.mxu0 0.0
    %263 = vmatpush1.msra.mxu0 0.0
    %264 = vmatprep.subr.mxu0 0.0
    %265 = vmatpush1.msra.mxu0 0.0
    %266 = vmatprep.subr.mxu0 0.0
    %267 = vmatpush1.msra.mxu0 0.0
    %268 = vmatprep.subr.mxu0 0.0
    %269 = vmatpush1.msra.mxu0 0.0
    %270 = vmatprep.subr.mxu0 0.0
    %271 = vmatpush1.msra.mxu0 0.0
    %272 = vmatprep.subr.mxu0 0.0
    %273 = vmatpush1.msra.mxu0 0.0
    %274 = vmatprep.subr.mxu0 0.0
    %275 = vmatpush1.msra.mxu0 0.0
    %276 = vmatprep.subr.mxu0 0.0
    %277 = vmatpush1.msra.mxu0 0.0
    %278 = vmatprep.subr.mxu0 0.0
    %279 = vmatpush1.msra.mxu0 0.0
    %280 = vmatprep.mubr.f32.mxu0 0.0
    %281 = vmatmul.mubr.f32.gmra.mrb[0].mxu0 %v214
    %v282 = vpop.f32.mrb[0].mxu0
    %v283 = vadd.f32 0.0, %v282
    %v284 = vpop.f32.mrb[0].mxu0
    %285 = vdwg.mxu0
    %v287 = vrot.slane %v283, 1
    %v290 = vadd.f32 %v206, %v283
    %v291 = vadd.f32 %v207, %v287
    %v292 = vtanh.pop %v290
    %v293 = vtanh.pop %v291
    %v296 = vrot.slane %v293, 7
    %vm297 = vcmask 1041409
    %v298 = vsel %vm297, %v296, %v292
    %vm300 = vcmask 254976
    %301 = vst.msk [vmem:[#allocation3] sm:$0x3] %vm300, %v298
    %v302 = vld [vmem:[#allocation10] sm:$0xff]
    %v303 = vld [vmem:[#allocation10 + $0x8] sm:$0xff]
    %v304 = vld [vmem:[#allocation10 + $0x10] sm:$0xff]
    %v305 = vld [vmem:[#allocation10 + $0x18] sm:$0xff]
    %s306 = scalar_lea.vmem [#allocation3], 2
    %v307 = vld [vmem:[%s306] sm:$0x3]
    %v308 = vld [vmem:[#allocation12] sm:$0xff]
    %v309 = vld [vmem:[#allocation12 + $0x8] sm:$0xff]
    %v310 = vld [vmem:[#allocation12 + $0x10] sm:$0xff]
    %v311 = vld [vmem:[#allocation12 + $0x18] sm:$0xff]
    %v313 = vsel %vm115, %v307, 0
    %315 = vmatprep.subr.mxu0 0.0
    %316 = vmatpush1.msra.mxu0 %v308
    %317 = vmatprep.subr.mxu0 0.0
    %318 = vmatpush1.msra.mxu0 %v309
    %319 = vmatprep.subr.mxu0 0.0
    %320 = vmatpush1.msra.mxu0 %v310
    %321 = vmatprep.subr.mxu0 0.0
    %322 = vmatpush1.msra.mxu0 %v311
    %323 = vmatprep.subr.mxu0 0.0
    %324 = vmatpush1.msra.mxu0 0.0
    %325 = vmatprep.subr.mxu0 0.0
    %326 = vmatpush1.msra.mxu0 0.0
    %327 = vmatprep.subr.mxu0 0.0
    %328 = vmatpush1.msra.mxu0 0.0
    %329 = vmatprep.subr.mxu0 0.0
    %330 = vmatpush1.msra.mxu0 0.0
    %331 = vmatprep.subr.mxu0 0.0
    %332 = vmatpush1.msra.mxu0 0.0
    %333 = vmatprep.subr.mxu0 0.0
    %334 = vmatpush1.msra.mxu0 0.0
    %335 = vmatprep.subr.mxu0 0.0
    %336 = vmatpush1.msra.mxu0 0.0
    %337 = vmatprep.subr.mxu0 0.0
    %338 = vmatpush1.msra.mxu0 0.0
    %339 = vmatprep.subr.mxu0 0.0
    %340 = vmatpush1.msra.mxu0 0.0
    %341 = vmatprep.subr.mxu0 0.0
    %342 = vmatpush1.msra.mxu0 0.0
    %343 = vmatprep.subr.mxu0 0.0
    %344 = vmatpush1.msra.mxu0 0.0
    %345 = vmatprep.subr.mxu0 0.0
    %346 = vmatpush1.msra.mxu0 0.0
    %347 = vmatprep.subr.mxu0 0.0
    %348 = vmatpush1.msra.mxu0 0.0
    %349 = vmatprep.subr.mxu0 0.0
    %350 = vmatpush1.msra.mxu0 0.0
    %351 = vmatprep.subr.mxu0 0.0
    %352 = vmatpush1.msra.mxu0 0.0
    %353 = vmatprep.subr.mxu0 0.0
    %354 = vmatpush1.msra.mxu0 0.0
    %355 = vmatprep.subr.mxu0 0.0
    %356 = vmatpush1.msra.mxu0 0.0
    %357 = vmatprep.subr.mxu0 0.0
    %358 = vmatpush1.msra.mxu0 0.0
    %359 = vmatprep.subr.mxu0 0.0
    %360 = vmatpush1.msra.mxu0 0.0
    %361 = vmatprep.subr.mxu0 0.0
    %362 = vmatpush1.msra.mxu0 0.0
    %363 = vmatprep.subr.mxu0 0.0
    %364 = vmatpush1.msra.mxu0 0.0
    %365 = vmatprep.subr.mxu0 0.0
    %366 = vmatpush1.msra.mxu0 0.0
    %367 = vmatprep.subr.mxu0 0.0
    %368 = vmatpush1.msra.mxu0 0.0
    %369 = vmatprep.subr.mxu0 0.0
    %370 = vmatpush1.msra.mxu0 0.0
    %371 = vmatprep.subr.mxu0 0.0
    %372 = vmatpush1.msra.mxu0 0.0
    %373 = vmatprep.subr.mxu0 0.0
    %374 = vmatpush1.msra.mxu0 0.0
    %375 = vmatprep.subr.mxu0 0.0
    %376 = vmatpush1.msra.mxu0 0.0
    %377 = vmatprep.subr.mxu0 0.0
    %378 = vmatpush1.msra.mxu0 0.0
    %379 = vmatprep.mubr.f32.mxu0 0.0
    %380 = vmatmul.mubr.f32.gmra.mrb[0].mxu0 %v313
    %v381 = vpop.f32.mrb[0].mxu0
    %v382 = vadd.f32 0.0, %v381
    %v383 = vpop.f32.mrb[0].mxu0
    %384 = vdwg.mxu0
    %v385 = vsel %vm115, %v298, 0
    %387 = vmatprep.subr.mxu0 0.0
    %388 = vmatpush1.msra.mxu0 %v302
    %389 = vmatprep.subr.mxu0 0.0
    %390 = vmatpush1.msra.mxu0 %v303
    %391 = vmatprep.subr.mxu0 0.0
    %392 = vmatpush1.msra.mxu0 %v304
    %393 = vmatprep.subr.mxu0 0.0
    %394 = vmatpush1.msra.mxu0 %v305
    %395 = vmatprep.subr.mxu0 0.0
    %396 = vmatpush1.msra.mxu0 0.0
    %397 = vmatprep.subr.mxu0 0.0
    %398 = vmatpush1.msra.mxu0 0.0
    %399 = vmatprep.subr.mxu0 0.0
    %400 = vmatpush1.msra.mxu0 0.0
    %401 = vmatprep.subr.mxu0 0.0
    %402 = vmatpush1.msra.mxu0 0.0
    %403 = vmatprep.subr.mxu0 0.0
    %404 = vmatpush1.msra.mxu0 0.0
    %405 = vmatprep.subr.mxu0 0.0
    %406 = vmatpush1.msra.mxu0 0.0
    %407 = vmatprep.subr.mxu0 0.0
    %408 = vmatpush1.msra.mxu0 0.0
    %409 = vmatprep.subr.mxu0 0.0
    %410 = vmatpush1.msra.mxu0 0.0
    %411 = vmatprep.subr.mxu0 0.0
    %412 = vmatpush1.msra.mxu0 0.0
    %413 = vmatprep.subr.mxu0 0.0
    %414 = vmatpush1.msra.mxu0 0.0
    %415 = vmatprep.subr.mxu0 0.0
    %416 = vmatpush1.msra.mxu0 0.0
    %417 = vmatprep.subr.mxu0 0.0
    %418 = vmatpush1.msra.mxu0 0.0
    %419 = vmatprep.subr.mxu0 0.0
    %420 = vmatpush1.msra.mxu0 0.0
    %421 = vmatprep.subr.mxu0 0.0
    %422 = vmatpush1.msra.mxu0 0.0
    %423 = vmatprep.subr.mxu0 0.0
    %424 = vmatpush1.msra.mxu0 0.0
    %425 = vmatprep.subr.mxu0 0.0
    %426 = vmatpush1.msra.mxu0 0.0
    %427 = vmatprep.subr.mxu0 0.0
    %428 = vmatpush1.msra.mxu0 0.0
    %429 = vmatprep.subr.mxu0 0.0
    %430 = vmatpush1.msra.mxu0 0.0
    %431 = vmatprep.subr.mxu0 0.0
    %432 = vmatpush1.msra.mxu0 0.0
    %433 = vmatprep.subr.mxu0 0.0
    %434 = vmatpush1.msra.mxu0 0.0
    %435 = vmatprep.subr.mxu0 0.0
    %436 = vmatpush1.msra.mxu0 0.0
    %437 = vmatprep.subr.mxu0 0.0
    %438 = vmatpush1.msra.mxu0 0.0
    %439 = vmatprep.subr.mxu0 0.0
    %440 = vmatpush1.msra.mxu0 0.0
    %441 = vmatprep.subr.mxu0 0.0
    %442 = vmatpush1.msra.mxu0 0.0
    %443 = vmatprep.subr.mxu0 0.0
    %444 = vmatpush1.msra.mxu0 0.0
    %445 = vmatprep.subr.mxu0 0.0
    %446 = vmatpush1.msra.mxu0 0.0
    %447 = vmatprep.subr.mxu0 0.0
    %448 = vmatpush1.msra.mxu0 0.0
    %449 = vmatprep.subr.mxu0 0.0
    %450 = vmatpush1.msra.mxu0 0.0
    %451 = vmatprep.mubr.f32.mxu0 0.0
    %452 = vmatmul.mubr.f32.gmra.mrb[0].mxu0 %v385
    %v453 = vpop.f32.mrb[0].mxu0
    %v454 = vadd.f32 %v382, %v453
    %v455 = vpop.f32.mrb[0].mxu0
    %456 = vdwg.mxu0
    %v457 = vadd.f32 %v454, %v204
    %v458 = vtanh.pop %v457
    %459 = vst.msk [vmem:[%s306] sm:$0x3] %vm300, %v458
    %v462 = vunpack.c.l.s4 1966171168
    %v463 = vunpack.c.0.s8 %v462
    %v464 = vlaneseq
    %v465 = vshrl.u32 %v464, 7
    %v466 = vsub.s32 %v463, %v465
    %v467 = vrot.slane %v458, %v466
    %v468 = vcombine.high %v467, %v467
    %v470 = vunpack.c.l.s4 1966171168
    %v471 = vunpack.c.0.s8 %v470
    %v472 = vlaneseq
    %v473 = vshrl.u32 %v472, 7
    %v474 = vsub.s32 %v471, %v473
    %v475 = vrot.slane %v467, %v474
    %v477 = vunpack.c.l.s4 1966171168
    %v478 = vunpack.c.0.s8 %v477
    %v479 = vlaneseq
    %v480 = vshrl.u32 %v479, 7
    %v481 = vsub.s32 %v478, %v480
    %v482 = vrot.slane %v468, %v481
    %vm485 = vcmask 253952
    %486 = vst.msk [vmem:[#allocation13] sm:$0x1] %vm485, %v475
    %487 = vst.msk [vmem:[#allocation13 + $0x8] sm:$0x1] %vm485, %v482
    %v488 = vld [vmem:[#allocation2 + $0x1] sm:$0x1]
    %v489 = vld [vmem:[#allocation2 + $0x9] sm:$0x1]
    %v490 = vld [vmem:[#allocation3] sm:$0x3]
    %v491 = vld [vmem:[#allocation9] sm:$0xff]
    %v492 = vld [vmem:[#allocation9 + $0x8] sm:$0xff]
    %v493 = vld [vmem:[#allocation9 + $0x10] sm:$0xff]
    %v494 = vld [vmem:[#allocation9 + $0x18] sm:$0xff]
    %v496 = vsel %vm115, %v490, 0
    %498 = vmatprep.subr.mxu0 0.0
    %499 = vmatpush1.msra.mxu0 %v491
    %500 = vmatprep.subr.mxu0 0.0
    %501 = vmatpush1.msra.mxu0 %v492
    %502 = vmatprep.subr.mxu0 0.0
    %503 = vmatpush1.msra.mxu0 %v493
    %504 = vmatprep.subr.mxu0 0.0
    %505 = vmatpush1.msra.mxu0 %v494
    %506 = vmatprep.subr.mxu0 0.0
    %507 = vmatpush1.msra.mxu0 0.0
    %508 = vmatprep.subr.mxu0 0.0
    %509 = vmatpush1.msra.mxu0 0.0
    %510 = vmatprep.subr.mxu0 0.0
    %511 = vmatpush1.msra.mxu0 0.0
    %512 = vmatprep.subr.mxu0 0.0
    %513 = vmatpush1.msra.mxu0 0.0
    %514 = vmatprep.subr.mxu0 0.0
    %515 = vmatpush1.msra.mxu0 0.0
    %516 = vmatprep.subr.mxu0 0.0
    %517 = vmatpush1.msra.mxu0 0.0
    %518 = vmatprep.subr.mxu0 0.0
    %519 = vmatpush1.msra.mxu0 0.0
    %520 = vmatprep.subr.mxu0 0.0
    %521 = vmatpush1.msra.mxu0 0.0
    %522 = vmatprep.subr.mxu0 0.0
    %523 = vmatpush1.msra.mxu0 0.0
    %524 = vmatprep.subr.mxu0 0.0
    %525 = vmatpush1.msra.mxu0 0.0
    %526 = vmatprep.subr.mxu0 0.0
    %527 = vmatpush1.msra.mxu0 0.0
    %528 = vmatprep.subr.mxu0 0.0
    %529 = vmatpush1.msra.mxu0 0.0
    %530 = vmatprep.subr.mxu0 0.0
    %531 = vmatpush1.msra.mxu0 0.0
    %532 = vmatprep.subr.mxu0 0.0
    %533 = vmatpush1.msra.mxu0 0.0
    %534 = vmatprep.subr.mxu0 0.0
    %535 = vmatpush1.msra.mxu0 0.0
    %536 = vmatprep.subr.mxu0 0.0
    %537 = vmatpush1.msra.mxu0 0.0
    %538 = vmatprep.subr.mxu0 0.0
    %539 = vmatpush1.msra.mxu0 0.0
    %540 = vmatprep.subr.mxu0 0.0
    %541 = vmatpush1.msra.mxu0 0.0
    %542 = vmatprep.subr.mxu0 0.0
    %543 = vmatpush1.msra.mxu0 0.0
    %544 = vmatprep.subr.mxu0 0.0
    %545 = vmatpush1.msra.mxu0 0.0
    %546 = vmatprep.subr.mxu0 0.0
    %547 = vmatpush1.msra.mxu0 0.0
    %548 = vmatprep.subr.mxu0 0.0
    %549 = vmatpush1.msra.mxu0 0.0
    %550 = vmatprep.subr.mxu0 0.0
    %551 = vmatpush1.msra.mxu0 0.0
    %552 = vmatprep.subr.mxu0 0.0
    %553 = vmatpush1.msra.mxu0 0.0
    %554 = vmatprep.subr.mxu0 0.0
    %555 = vmatpush1.msra.mxu0 0.0
    %556 = vmatprep.subr.mxu0 0.0
    %557 = vmatpush1.msra.mxu0 0.0
    %558 = vmatprep.subr.mxu0 0.0
    %559 = vmatpush1.msra.mxu0 0.0
    %560 = vmatprep.subr.mxu0 0.0
    %561 = vmatpush1.msra.mxu0 0.0
    %562 = vmatprep.mubr.f32.mxu0 0.0
    %563 = vmatmul.mubr.f32.gmra.mrb[0].mxu0 %v496
    %v564 = vpop.f32.mrb[0].mxu0
    %v565 = vadd.f32 0.0, %v564
    %v566 = vpop.f32.mrb[0].mxu0
    %567 = vdwg.mxu0
    %v569 = vrot.slane %v565, 1
    %v572 = vadd.f32 %v488, %v565
    %v573 = vadd.f32 %v489, %v569
    %v574 = vtanh.pop %v572
    %v575 = vtanh.pop %v573
    %v578 = vrot.slane %v575, 7
    %v579 = vsel %vm297, %v578, %v574
    %581 = vst.msk [vmem:[#allocation3] sm:$0x3] %vm300, %v579
    %v582 = vld [vmem:[#allocation10] sm:$0xff]
    %v583 = vld [vmem:[#allocation10 + $0x8] sm:$0xff]
    %v584 = vld [vmem:[#allocation10 + $0x10] sm:$0xff]
    %v585 = vld [vmem:[#allocation10 + $0x18] sm:$0xff]
    %v586 = vld [vmem:[%s306] sm:$0x3]
    %v587 = vld [vmem:[#allocation12] sm:$0xff]
    %v588 = vld [vmem:[#allocation12 + $0x8] sm:$0xff]
    %v589 = vld [vmem:[#allocation12 + $0x10] sm:$0xff]
    %v590 = vld [vmem:[#allocation12 + $0x18] sm:$0xff]
    %v592 = vsel %vm115, %v586, 0
    %594 = vmatprep.subr.mxu0 0.0
    %595 = vmatpush1.msra.mxu0 %v587
    %596 = vmatprep.subr.mxu0 0.0
    %597 = vmatpush1.msra.mxu0 %v588
    %598 = vmatprep.subr.mxu0 0.0
    %599 = vmatpush1.msra.mxu0 %v589
    %600 = vmatprep.subr.mxu0 0.0
    %601 = vmatpush1.msra.mxu0 %v590
    %602 = vmatprep.subr.mxu0 0.0
    %603 = vmatpush1.msra.mxu0 0.0
    %604 = vmatprep.subr.mxu0 0.0
    %605 = vmatpush1.msra.mxu0 0.0
    %606 = vmatprep.subr.mxu0 0.0
    %607 = vmatpush1.msra.mxu0 0.0
    %608 = vmatprep.subr.mxu0 0.0
    %609 = vmatpush1.msra.mxu0 0.0
    %610 = vmatprep.subr.mxu0 0.0
    %611 = vmatpush1.msra.mxu0 0.0
    %612 = vmatprep.subr.mxu0 0.0
    %613 = vmatpush1.msra.mxu0 0.0
    %614 = vmatprep.subr.mxu0 0.0
    %615 = vmatpush1.msra.mxu0 0.0
    %616 = vmatprep.subr.mxu0 0.0
    %617 = vmatpush1.msra.mxu0 0.0
    %618 = vmatprep.subr.mxu0 0.0
    %619 = vmatpush1.msra.mxu0 0.0
    %620 = vmatprep.subr.mxu0 0.0
    %621 = vmatpush1.msra.mxu0 0.0
    %622 = vmatprep.subr.mxu0 0.0
    %623 = vmatpush1.msra.mxu0 0.0
    %624 = vmatprep.subr.mxu0 0.0
    %625 = vmatpush1.msra.mxu0 0.0
    %626 = vmatprep.subr.mxu0 0.0
    %627 = vmatpush1.msra.mxu0 0.0
    %628 = vmatprep.subr.mxu0 0.0
    %629 = vmatpush1.msra.mxu0 0.0
    %630 = vmatprep.subr.mxu0 0.0
    %631 = vmatpush1.msra.mxu0 0.0
    %632 = vmatprep.subr.mxu0 0.0
    %633 = vmatpush1.msra.mxu0 0.0
    %634 = vmatprep.subr.mxu0 0.0
    %635 = vmatpush1.msra.mxu0 0.0
    %636 = vmatprep.subr.mxu0 0.0
    %637 = vmatpush1.msra.mxu0 0.0
    %638 = vmatprep.subr.mxu0 0.0
    %639 = vmatpush1.msra.mxu0 0.0
    %640 = vmatprep.subr.mxu0 0.0
    %641 = vmatpush1.msra.mxu0 0.0
    %642 = vmatprep.subr.mxu0 0.0
    %643 = vmatpush1.msra.mxu0 0.0
    %644 = vmatprep.subr.mxu0 0.0
    %645 = vmatpush1.msra.mxu0 0.0
    %646 = vmatprep.subr.mxu0 0.0
    %647 = vmatpush1.msra.mxu0 0.0
    %648 = vmatprep.subr.mxu0 0.0
    %649 = vmatpush1.msra.mxu0 0.0
    %650 = vmatprep.subr.mxu0 0.0
    %651 = vmatpush1.msra.mxu0 0.0
    %652 = vmatprep.subr.mxu0 0.0
    %653 = vmatpush1.msra.mxu0 0.0
    %654 = vmatprep.subr.mxu0 0.0
    %655 = vmatpush1.msra.mxu0 0.0
    %656 = vmatprep.subr.mxu0 0.0
    %657 = vmatpush1.msra.mxu0 0.0
    %658 = vmatprep.mubr.f32.mxu0 0.0
    %659 = vmatmul.mubr.f32.gmra.mrb[0].mxu0 %v592
    %v660 = vpop.f32.mrb[0].mxu0
    %v661 = vadd.f32 0.0, %v660
    %v662 = vpop.f32.mrb[0].mxu0
    %663 = vdwg.mxu0
    %v664 = vsel %vm115, %v579, 0
    %666 = vmatprep.subr.mxu0 0.0
    %667 = vmatpush1.msra.mxu0 %v582
    %668 = vmatprep.subr.mxu0 0.0
    %669 = vmatpush1.msra.mxu0 %v583
    %670 = vmatprep.subr.mxu0 0.0
    %671 = vmatpush1.msra.mxu0 %v584
    %672 = vmatprep.subr.mxu0 0.0
    %673 = vmatpush1.msra.mxu0 %v585
    %674 = vmatprep.subr.mxu0 0.0
    %675 = vmatpush1.msra.mxu0 0.0
    %676 = vmatprep.subr.mxu0 0.0
    %677 = vmatpush1.msra.mxu0 0.0
    %678 = vmatprep.subr.mxu0 0.0
    %679 = vmatpush1.msra.mxu0 0.0
    %680 = vmatprep.subr.mxu0 0.0
    %681 = vmatpush1.msra.mxu0 0.0
    %682 = vmatprep.subr.mxu0 0.0
    %683 = vmatpush1.msra.mxu0 0.0
    %684 = vmatprep.subr.mxu0 0.0
    %685 = vmatpush1.msra.mxu0 0.0
    %686 = vmatprep.subr.mxu0 0.0
    %687 = vmatpush1.msra.mxu0 0.0
    %688 = vmatprep.subr.mxu0 0.0
    %689 = vmatpush1.msra.mxu0 0.0
    %690 = vmatprep.subr.mxu0 0.0
    %691 = vmatpush1.msra.mxu0 0.0
    %692 = vmatprep.subr.mxu0 0.0
    %693 = vmatpush1.msra.mxu0 0.0
    %694 = vmatprep.subr.mxu0 0.0
    %695 = vmatpush1.msra.mxu0 0.0
    %696 = vmatprep.subr.mxu0 0.0
    %697 = vmatpush1.msra.mxu0 0.0
    %698 = vmatprep.subr.mxu0 0.0
    %699 = vmatpush1.msra.mxu0 0.0
    %700 = vmatprep.subr.mxu0 0.0
    %701 = vmatpush1.msra.mxu0 0.0
    %702 = vmatprep.subr.mxu0 0.0
    %703 = vmatpush1.msra.mxu0 0.0
    %704 = vmatprep.subr.mxu0 0.0
    %705 = vmatpush1.msra.mxu0 0.0
    %706 = vmatprep.subr.mxu0 0.0
    %707 = vmatpush1.msra.mxu0 0.0
    %708 = vmatprep.subr.mxu0 0.0
    %709 = vmatpush1.msra.mxu0 0.0
    %710 = vmatprep.subr.mxu0 0.0
    %711 = vmatpush1.msra.mxu0 0.0
    %712 = vmatprep.subr.mxu0 0.0
    %713 = vmatpush1.msra.mxu0 0.0
    %714 = vmatprep.subr.mxu0 0.0
    %715 = vmatpush1.msra.mxu0 0.0
    %716 = vmatprep.subr.mxu0 0.0
    %717 = vmatpush1.msra.mxu0 0.0
    %718 = vmatprep.subr.mxu0 0.0
    %719 = vmatpush1.msra.mxu0 0.0
    %720 = vmatprep.subr.mxu0 0.0
    %721 = vmatpush1.msra.mxu0 0.0
    %722 = vmatprep.subr.mxu0 0.0
    %723 = vmatpush1.msra.mxu0 0.0
    %724 = vmatprep.subr.mxu0 0.0
    %725 = vmatpush1.msra.mxu0 0.0
    %726 = vmatprep.subr.mxu0 0.0
    %727 = vmatpush1.msra.mxu0 0.0
    %728 = vmatprep.subr.mxu0 0.0
    %729 = vmatpush1.msra.mxu0 0.0
    %730 = vmatprep.mubr.f32.mxu0 0.0
    %731 = vmatmul.mubr.f32.gmra.mrb[0].mxu0 %v664
    %v732 = vpop.f32.mrb[0].mxu0
    %v733 = vadd.f32 %v661, %v732
    %v734 = vpop.f32.mrb[0].mxu0
    %735 = vdwg.mxu0
    %v736 = vadd.f32 %v733, %v204
    %v737 = vtanh.pop %v736
    %738 = vst.msk [vmem:[%s306] sm:$0x3] %vm300, %v737
    %v741 = vunpack.c.l.s4 1966171168
    %v742 = vunpack.c.0.s8 %v741
    %v743 = vlaneseq
    %v744 = vshrl.u32 %v743, 7
    %v745 = vsub.s32 %v742, %v744
    %v746 = vrot.slane %v737, %v745
    %v747 = vcombine.high %v746, %v746
    %v749 = vunpack.c.l.s4 1966171168
    %v750 = vunpack.c.0.s8 %v749
    %v751 = vlaneseq
    %v752 = vshrl.u32 %v751, 7
    %v753 = vsub.s32 %v750, %v752
    %v754 = vrot.slane %v746, %v753
    %v756 = vunpack.c.l.s4 1966171168
    %v757 = vunpack.c.0.s8 %v756
    %v758 = vlaneseq
    %v759 = vshrl.u32 %v758, 7
    %v760 = vsub.s32 %v757, %v759
    %v761 = vrot.slane %v747, %v760
    %764 = vst.msk [vmem:[#allocation13 + $0x1] sm:$0x1] %vm485, %v754
    %765 = vst.msk [vmem:[#allocation13 + $0x9] sm:$0x1] %vm485, %v761
    %v766 = vld [vmem:[#allocation2 + $0x2] sm:$0x1]
    %v767 = vld [vmem:[#allocation2 + $0xa] sm:$0x1]
    %v768 = vld [vmem:[#allocation3] sm:$0x3]
    %v769 = vld [vmem:[#allocation9] sm:$0xff]
    %v770 = vld [vmem:[#allocation9 + $0x8] sm:$0xff]
    %v771 = vld [vmem:[#allocation9 + $0x10] sm:$0xff]
    %v772 = vld [vmem:[#allocation9 + $0x18] sm:$0xff]
    %v774 = vsel %vm115, %v768, 0
    %776 = vmatprep.subr.mxu0 0.0
    %777 = vmatpush1.msra.mxu0 %v769
    %778 = vmatprep.subr.mxu0 0.0
    %779 = vmatpush1.msra.mxu0 %v770
    %780 = vmatprep.subr.mxu0 0.0
    %781 = vmatpush1.msra.mxu0 %v771
    %782 = vmatprep.subr.mxu0 0.0
    %783 = vmatpush1.msra.mxu0 %v772
    %784 = vmatprep.subr.mxu0 0.0
    %785 = vmatpush1.msra.mxu0 0.0
    %786 = vmatprep.subr.mxu0 0.0
    %787 = vmatpush1.msra.mxu0 0.0
    %788 = vmatprep.subr.mxu0 0.0
    %789 = vmatpush1.msra.mxu0 0.0
    %790 = vmatprep.subr.mxu0 0.0
    %791 = vmatpush1.msra.mxu0 0.0
    %792 = vmatprep.subr.mxu0 0.0
    %793 = vmatpush1.msra.mxu0 0.0
    %794 = vmatprep.subr.mxu0 0.0
    %795 = vmatpush1.msra.mxu0 0.0
    %796 = vmatprep.subr.mxu0 0.0
    %797 = vmatpush1.msra.mxu0 0.0
    %798 = vmatprep.subr.mxu0 0.0
    %799 = vmatpush1.msra.mxu0 0.0
    %800 = vmatprep.subr.mxu0 0.0
    %801 = vmatpush1.msra.mxu0 0.0
    %802 = vmatprep.subr.mxu0 0.0
    %803 = vmatpush1.msra.mxu0 0.0
    %804 = vmatprep.subr.mxu0 0.0
    %805 = vmatpush1.msra.mxu0 0.0
    %806 = vmatprep.subr.mxu0 0.0
    %807 = vmatpush1.msra.mxu0 0.0
    %808 = vmatprep.subr.mxu0 0.0
    %809 = vmatpush1.msra.mxu0 0.0
    %810 = vmatprep.subr.mxu0 0.0
    %811 = vmatpush1.msra.mxu0 0.0
    %812 = vmatprep.subr.mxu0 0.0
    %813 = vmatpush1.msra.mxu0 0.0
    %814 = vmatprep.subr.mxu0 0.0
    %815 = vmatpush1.msra.mxu0 0.0
    %816 = vmatprep.subr.mxu0 0.0
    %817 = vmatpush1.msra.mxu0 0.0
    %818 = vmatprep.subr.mxu0 0.0
    %819 = vmatpush1.msra.mxu0 0.0
    %820 = vmatprep.subr.mxu0 0.0
    %821 = vmatpush1.msra.mxu0 0.0
    %822 = vmatprep.subr.mxu0 0.0
    %823 = vmatpush1.msra.mxu0 0.0
    %824 = vmatprep.subr.mxu0 0.0
    %825 = vmatpush1.msra.mxu0 0.0
    %826 = vmatprep.subr.mxu0 0.0
    %827 = vmatpush1.msra.mxu0 0.0
    %828 = vmatprep.subr.mxu0 0.0
    %829 = vmatpush1.msra.mxu0 0.0
    %830 = vmatprep.subr.mxu0 0.0
    %831 = vmatpush1.msra.mxu0 0.0
    %832 = vmatprep.subr.mxu0 0.0
    %833 = vmatpush1.msra.mxu0 0.0
    %834 = vmatprep.subr.mxu0 0.0
    %835 = vmatpush1.msra.mxu0 0.0
    %836 = vmatprep.subr.mxu0 0.0
    %837 = vmatpush1.msra.mxu0 0.0
    %838 = vmatprep.subr.mxu0 0.0
    %839 = vmatpush1.msra.mxu0 0.0
    %840 = vmatprep.mubr.f32.mxu0 0.0
    %841 = vmatmul.mubr.f32.gmra.mrb[0].mxu0 %v774
    %v842 = vpop.f32.mrb[0].mxu0
    %v843 = vadd.f32 0.0, %v842
    %v844 = vpop.f32.mrb[0].mxu0
    %845 = vdwg.mxu0
    %v847 = vrot.slane %v843, 1
    %v850 = vadd.f32 %v766, %v843
    %v851 = vadd.f32 %v767, %v847
    %v852 = vtanh.pop %v850
    %v853 = vtanh.pop %v851
    %v856 = vrot.slane %v853, 7
    %v857 = vsel %vm297, %v856, %v852
    %859 = vst.msk [vmem:[#allocation3] sm:$0x3] %vm300, %v857
    %v860 = vld [vmem:[#allocation10] sm:$0xff]
    %v861 = vld [vmem:[#allocation10 + $0x8] sm:$0xff]
    %v862 = vld [vmem:[#allocation10 + $0x10] sm:$0xff]
    %v863 = vld [vmem:[#allocation10 + $0x18] sm:$0xff]
    %v864 = vld [vmem:[%s306] sm:$0x3]
    %v865 = vld [vmem:[#allocation12] sm:$0xff]
    %v866 = vld [vmem:[#allocation12 + $0x8] sm:$0xff]
    %v867 = vld [vmem:[#allocation12 + $0x10] sm:$0xff]
    %v868 = vld [vmem:[#allocation12 + $0x18] sm:$0xff]
    %v870 = vsel %vm115, %v864, 0
    %872 = vmatprep.subr.mxu0 0.0
    %873 = vmatpush1.msra.mxu0 %v865
    %874 = vmatprep.subr.mxu0 0.0
    %875 = vmatpush1.msra.mxu0 %v866
    %876 = vmatprep.subr.mxu0 0.0
    %877 = vmatpush1.msra.mxu0 %v867
    %878 = vmatprep.subr.mxu0 0.0
    %879 = vmatpush1.msra.mxu0 %v868
    %880 = vmatprep.subr.mxu0 0.0
    %881 = vmatpush1.msra.mxu0 0.0
    %882 = vmatprep.subr.mxu0 0.0
    %883 = vmatpush1.msra.mxu0 0.0
    %884 = vmatprep.subr.mxu0 0.0
    %885 = vmatpush1.msra.mxu0 0.0
    %886 = vmatprep.subr.mxu0 0.0
    %887 = vmatpush1.msra.mxu0 0.0
    %888 = vmatprep.subr.mxu0 0.0
    %889 = vmatpush1.msra.mxu0 0.0
    %890 = vmatprep.subr.mxu0 0.0
    %891 = vmatpush1.msra.mxu0 0.0
    %892 = vmatprep.subr.mxu0 0.0
    %893 = vmatpush1.msra.mxu0 0.0
    %894 = vmatprep.subr.mxu0 0.0
    %895 = vmatpush1.msra.mxu0 0.0
    %896 = vmatprep.subr.mxu0 0.0
    %897 = vmatpush1.msra.mxu0 0.0
    %898 = vmatprep.subr.mxu0 0.0
    %899 = vmatpush1.msra.mxu0 0.0
    %900 = vmatprep.subr.mxu0 0.0
    %901 = vmatpush1.msra.mxu0 0.0
    %902 = vmatprep.subr.mxu0 0.0
    %903 = vmatpush1.msra.mxu0 0.0
    %904 = vmatprep.subr.mxu0 0.0
    %905 = vmatpush1.msra.mxu0 0.0
    %906 = vmatprep.subr.mxu0 0.0
    %907 = vmatpush1.msra.mxu0 0.0
    %908 = vmatprep.subr.mxu0 0.0
    %909 = vmatpush1.msra.mxu0 0.0
    %910 = vmatprep.subr.mxu0 0.0
    %911 = vmatpush1.msra.mxu0 0.0
    %912 = vmatprep.subr.mxu0 0.0
    %913 = vmatpush1.msra.mxu0 0.0
    %914 = vmatprep.subr.mxu0 0.0
    %915 = vmatpush1.msra.mxu0 0.0
    %916 = vmatprep.subr.mxu0 0.0
    %917 = vmatpush1.msra.mxu0 0.0
    %918 = vmatprep.subr.mxu0 0.0
    %919 = vmatpush1.msra.mxu0 0.0
    %920 = vmatprep.subr.mxu0 0.0
    %921 = vmatpush1.msra.mxu0 0.0
    %922 = vmatprep.subr.mxu0 0.0
    %923 = vmatpush1.msra.mxu0 0.0
    %924 = vmatprep.subr.mxu0 0.0
    %925 = vmatpush1.msra.mxu0 0.0
    %926 = vmatprep.subr.mxu0 0.0
    %927 = vmatpush1.msra.mxu0 0.0
    %928 = vmatprep.subr.mxu0 0.0
    %929 = vmatpush1.msra.mxu0 0.0
    %930 = vmatprep.subr.mxu0 0.0
    %931 = vmatpush1.msra.mxu0 0.0
    %932 = vmatprep.subr.mxu0 0.0
    %933 = vmatpush1.msra.mxu0 0.0
    %934 = vmatprep.subr.mxu0 0.0
    %935 = vmatpush1.msra.mxu0 0.0
    %936 = vmatprep.mubr.f32.mxu0 0.0
    %937 = vmatmul.mubr.f32.gmra.mrb[0].mxu0 %v870
    %v938 = vpop.f32.mrb[0].mxu0
    %v939 = vadd.f32 0.0, %v938
    %v940 = vpop.f32.mrb[0].mxu0
    %941 = vdwg.mxu0
    %v942 = vsel %vm115, %v857, 0
    %944 = vmatprep.subr.mxu0 0.0
    %945 = vmatpush1.msra.mxu0 %v860
    %946 = vmatprep.subr.mxu0 0.0
    %947 = vmatpush1.msra.mxu0 %v861
    %948 = vmatprep.subr.mxu0 0.0
    %949 = vmatpush1.msra.mxu0 %v862
    %950 = vmatprep.subr.mxu0 0.0
    %951 = vmatpush1.msra.mxu0 %v863
    %952 = vmatprep.subr.mxu0 0.0
    %953 = vmatpush1.msra.mxu0 0.0
    %954 = vmatprep.subr.mxu0 0.0
    %955 = vmatpush1.msra.mxu0 0.0
    %956 = vmatprep.subr.mxu0 0.0
    %957 = vmatpush1.msra.mxu0 0.0
    %958 = vmatprep.subr.mxu0 0.0
    %959 = vmatpush1.msra.mxu0 0.0
    %960 = vmatprep.subr.mxu0 0.0
    %961 = vmatpush1.msra.mxu0 0.0
    %962 = vmatprep.subr.mxu0 0.0
    %963 = vmatpush1.msra.mxu0 0.0
    %964 = vmatprep.subr.mxu0 0.0
    %965 = vmatpush1.msra.mxu0 0.0
    %966 = vmatprep.subr.mxu0 0.0
    %967 = vmatpush1.msra.mxu0 0.0
    %968 = vmatprep.subr.mxu0 0.0
    %969 = vmatpush1.msra.mxu0 0.0
    %970 = vmatprep.subr.mxu0 0.0
    %971 = vmatpush1.msra.mxu0 0.0
    %972 = vmatprep.subr.mxu0 0.0
    %973 = vmatpush1.msra.mxu0 0.0
    %974 = vmatprep.subr.mxu0 0.0
    %975 = vmatpush1.msra.mxu0 0.0
    %976 = vmatprep.subr.mxu0 0.0
    %977 = vmatpush1.msra.mxu0 0.0
    %978 = vmatprep.subr.mxu0 0.0
    %979 = vmatpush1.msra.mxu0 0.0
    %980 = vmatprep.subr.mxu0 0.0
    %981 = vmatpush1.msra.mxu0 0.0
    %982 = vmatprep.subr.mxu0 0.0
    %983 = vmatpush1.msra.mxu0 0.0
    %984 = vmatprep.subr.mxu0 0.0
    %985 = vmatpush1.msra.mxu0 0.0
    %986 = vmatprep.subr.mxu0 0.0
    %987 = vmatpush1.msra.mxu0 0.0
    %988 = vmatprep.subr.mxu0 0.0
    %989 = vmatpush1.msra.mxu0 0.0
    %990 = vmatprep.subr.mxu0 0.0
    %991 = vmatpush1.msra.mxu0 0.0
    %992 = vmatprep.subr.mxu0 0.0
    %993 = vmatpush1.msra.mxu0 0.0
    %994 = vmatprep.subr.mxu0 0.0
    %995 = vmatpush1.msra.mxu0 0.0
    %996 = vmatprep.subr.mxu0 0.0
    %997 = vmatpush1.msra.mxu0 0.0
    %998 = vmatprep.subr.mxu0 0.0
    %999 = vmatpush1.msra.mxu0 0.0
    %1000 = vmatprep.subr.mxu0 0.0
    %1001 = vmatpush1.msra.mxu0 0.0
    %1002 = vmatprep.subr.mxu0 0.0
    %1003 = vmatpush1.msra.mxu0 0.0
    %1004 = vmatprep.subr.mxu0 0.0
    %1005 = vmatpush1.msra.mxu0 0.0
    %1006 = vmatprep.subr.mxu0 0.0
    %1007 = vmatpush1.msra.mxu0 0.0
    %1008 = vmatprep.mubr.f32.mxu0 0.0
    %1009 = vmatmul.mubr.f32.gmra.mrb[0].mxu0 %v942
    %v1010 = vpop.f32.mrb[0].mxu0
    %v1011 = vadd.f32 %v939, %v1010
    %v1012 = vpop.f32.mrb[0].mxu0
    %1013 = vdwg.mxu0
    %v1014 = vadd.f32 %v1011, %v204
    %v1015 = vtanh.pop %v1014
    %1016 = vst.msk [vmem:[%s306] sm:$0x3] %vm300, %v1015
    %v1019 = vunpack.c.l.s4 1966171168
    %v1020 = vunpack.c.0.s8 %v1019
    %v1021 = vlaneseq
    %v1022 = vshrl.u32 %v1021, 7
    %v1023 = vsub.s32 %v1020, %v1022
    %v1024 = vrot.slane %v1015, %v1023
    %v1025 = vcombine.high %v1024, %v1024
    %v1027 = vunpack.c.l.s4 1966171168
    %v1028 = vunpack.c.0.s8 %v1027
    %v1029 = vlaneseq
    %v1030 = vshrl.u32 %v1029, 7
    %v1031 = vsub.s32 %v1028, %v1030
    %v1032 = vrot.slane %v1024, %v1031
    %v1034 = vunpack.c.l.s4 1966171168
    %v1035 = vunpack.c.0.s8 %v1034
    %v1036 = vlaneseq
    %v1037 = vshrl.u32 %v1036, 7
    %v1038 = vsub.s32 %v1035, %v1037
    %v1039 = vrot.slane %v1025, %v1038
    %1042 = vst.msk [vmem:[#allocation13 + $0x2] sm:$0x1] %vm485, %v1032
    %1043 = vst.msk [vmem:[#allocation13 + $0xa] sm:$0x1] %vm485, %v1039
    %v1044 = vld [vmem:[#allocation2 + $0x3] sm:$0x1]
    %v1045 = vld [vmem:[#allocation2 + $0xb] sm:$0x1]
    %v1046 = vld [vmem:[#allocation3] sm:$0x3]
    %v1047 = vld [vmem:[#allocation9] sm:$0xff]
    %v1048 = vld [vmem:[#allocation9 + $0x8] sm:$0xff]
    %v1049 = vld [vmem:[#allocation9 + $0x10] sm:$0xff]
    %v1050 = vld [vmem:[#allocation9 + $0x18] sm:$0xff]
    %v1052 = vsel %vm115, %v1046, 0
    %1054 = vmatprep.subr.mxu0 0.0
    %1055 = vmatpush1.msra.mxu0 %v1047
    %1056 = vmatprep.subr.mxu0 0.0
    %1057 = vmatpush1.msra.mxu0 %v1048
    %1058 = vmatprep.subr.mxu0 0.0
    %1059 = vmatpush1.msra.mxu0 %v1049
    %1060 = vmatprep.subr.mxu0 0.0
    %1061 = vmatpush1.msra.mxu0 %v1050
    %1062 = vmatprep.subr.mxu0 0.0
    %1063 = vmatpush1.msra.mxu0 0.0
    %1064 = vmatprep.subr.mxu0 0.0
    %1065 = vmatpush1.msra.mxu0 0.0
    %1066 = vmatprep.subr.mxu0 0.0
    %1067 = vmatpush1.msra.mxu0 0.0
    %1068 = vmatprep.subr.mxu0 0.0
    %1069 = vmatpush1.msra.mxu0 0.0
    %1070 = vmatprep.subr.mxu0 0.0
    %1071 = vmatpush1.msra.mxu0 0.0
    %1072 = vmatprep.subr.mxu0 0.0
    %1073 = vmatpush1.msra.mxu0 0.0
    %1074 = vmatprep.subr.mxu0 0.0
    %1075 = vmatpush1.msra.mxu0 0.0
    %1076 = vmatprep.subr.mxu0 0.0
    %1077 = vmatpush1.msra.mxu0 0.0
    %1078 = vmatprep.subr.mxu0 0.0
    %1079 = vmatpush1.msra.mxu0 0.0
    %1080 = vmatprep.subr.mxu0 0.0
    %1081 = vmatpush1.msra.mxu0 0.0
    %1082 = vmatprep.subr.mxu0 0.0
    %1083 = vmatpush1.msra.mxu0 0.0
    %1084 = vmatprep.subr.mxu0 0.0
    %1085 = vmatpush1.msra.mxu0 0.0
    %1086 = vmatprep.subr.mxu0 0.0
    %1087 = vmatpush1.msra.mxu0 0.0
    %1088 = vmatprep.subr.mxu0 0.0
    %1089 = vmatpush1.msra.mxu0 0.0
    %1090 = vmatprep.subr.mxu0 0.0
    %1091 = vmatpush1.msra.mxu0 0.0
    %1092 = vmatprep.subr.mxu0 0.0
    %1093 = vmatpush1.msra.mxu0 0.0
    %1094 = vmatprep.subr.mxu0 0.0
    %1095 = vmatpush1.msra.mxu0 0.0
    %1096 = vmatprep.subr.mxu0 0.0
    %1097 = vmatpush1.msra.mxu0 0.0
    %1098 = vmatprep.subr.mxu0 0.0
    %1099 = vmatpush1.msra.mxu0 0.0
    %1100 = vmatprep.subr.mxu0 0.0
    %1101 = vmatpush1.msra.mxu0 0.0
    %1102 = vmatprep.subr.mxu0 0.0
    %1103 = vmatpush1.msra.mxu0 0.0
    %1104 = vmatprep.subr.mxu0 0.0
    %1105 = vmatpush1.msra.mxu0 0.0
    %1106 = vmatprep.subr.mxu0 0.0
    %1107 = vmatpush1.msra.mxu0 0.0
    %1108 = vmatprep.subr.mxu0 0.0
    %1109 = vmatpush1.msra.mxu0 0.0
    %1110 = vmatprep.subr.mxu0 0.0
    %1111 = vmatpush1.msra.mxu0 0.0
    %1112 = vmatprep.subr.mxu0 0.0
    %1113 = vmatpush1.msra.mxu0 0.0
    %1114 = vmatprep.subr.mxu0 0.0
    %1115 = vmatpush1.msra.mxu0 0.0
    %1116 = vmatprep.subr.mxu0 0.0
    %1117 = vmatpush1.msra.mxu0 0.0
    %1118 = vmatprep.mubr.f32.mxu0 0.0
    %1119 = vmatmul.mubr.f32.gmra.mrb[0].mxu0 %v1052
    %v1120 = vpop.f32.mrb[0].mxu0
    %v1121 = vadd.f32 0.0, %v1120
    %v1122 = vpop.f32.mrb[0].mxu0
    %1123 = vdwg.mxu0
    %v1125 = vrot.slane %v1121, 1
    %v1128 = vadd.f32 %v1044, %v1121
    %v1129 = vadd.f32 %v1045, %v1125
    %v1130 = vtanh.pop %v1128
    %v1131 = vtanh.pop %v1129
    %v1134 = vrot.slane %v1131, 7
    %v1135 = vsel %vm297, %v1134, %v1130
    %1137 = vst.msk [vmem:[#allocation3] sm:$0x3] %vm300, %v1135
    %v1138 = vld [vmem:[#allocation10] sm:$0xff]
    %v1139 = vld [vmem:[#allocation10 + $0x8] sm:$0xff]
    %v1140 = vld [vmem:[#allocation10 + $0x10] sm:$0xff]
    %v1141 = vld [vmem:[#allocation10 + $0x18] sm:$0xff]
    %v1142 = vld [vmem:[%s306] sm:$0x3]
    %v1143 = vld [vmem:[#allocation12] sm:$0xff]
    %v1144 = vld [vmem:[#allocation12 + $0x8] sm:$0xff]
    %v1145 = vld [vmem:[#allocation12 + $0x10] sm:$0xff]
    %v1146 = vld [vmem:[#allocation12 + $0x18] sm:$0xff]
    %v1148 = vsel %vm115, %v1142, 0
    %1150 = vmatprep.subr.mxu0 0.0
    %1151 = vmatpush1.msra.mxu0 %v1143
    %1152 = vmatprep.subr.mxu0 0.0
    %1153 = vmatpush1.msra.mxu0 %v1144
    %1154 = vmatprep.subr.mxu0 0.0
    %1155 = vmatpush1.msra.mxu0 %v1145
    %1156 = vmatprep.subr.mxu0 0.0
    %1157 = vmatpush1.msra.mxu0 %v1146
    %1158 = vmatprep.subr.mxu0 0.0
    %1159 = vmatpush1.msra.mxu0 0.0
    %1160 = vmatprep.subr.mxu0 0.0
    %1161 = vmatpush1.msra.mxu0 0.0
    %1162 = vmatprep.subr.mxu0 0.0
    %1163 = vmatpush1.msra.mxu0 0.0
    %1164 = vmatprep.subr.mxu0 0.0
    %1165 = vmatpush1.msra.mxu0 0.0
    %1166 = vmatprep.subr.mxu0 0.0
    %1167 = vmatpush1.msra.mxu0 0.0
    %1168 = vmatprep.subr.mxu0 0.0
    %1169 = vmatpush1.msra.mxu0 0.0
    %1170 = vmatprep.subr.mxu0 0.0
    %1171 = vmatpush1.msra.mxu0 0.0
    %1172 = vmatprep.subr.mxu0 0.0
    %1173 = vmatpush1.msra.mxu0 0.0
    %1174 = vmatprep.subr.mxu0 0.0
    %1175 = vmatpush1.msra.mxu0 0.0
    %1176 = vmatprep.subr.mxu0 0.0
    %1177 = vmatpush1.msra.mxu0 0.0
    %1178 = vmatprep.subr.mxu0 0.0
    %1179 = vmatpush1.msra.mxu0 0.0
    %1180 = vmatprep.subr.mxu0 0.0
    %1181 = vmatpush1.msra.mxu0 0.0
    %1182 = vmatprep.subr.mxu0 0.0
    %1183 = vmatpush1.msra.mxu0 0.0
    %1184 = vmatprep.subr.mxu0 0.0
    %1185 = vmatpush1.msra.mxu0 0.0
    %1186 = vmatprep.subr.mxu0 0.0
    %1187 = vmatpush1.msra.mxu0 0.0
    %1188 = vmatprep.subr.mxu0 0.0
    %1189 = vmatpush1.msra.mxu0 0.0
    %1190 = vmatprep.subr.mxu0 0.0
    %1191 = vmatpush1.msra.mxu0 0.0
    %1192 = vmatprep.subr.mxu0 0.0
    %1193 = vmatpush1.msra.mxu0 0.0
    %1194 = vmatprep.subr.mxu0 0.0
    %1195 = vmatpush1.msra.mxu0 0.0
    %1196 = vmatprep.subr.mxu0 0.0
    %1197 = vmatpush1.msra.mxu0 0.0
    %1198 = vmatprep.subr.mxu0 0.0
    %1199 = vmatpush1.msra.mxu0 0.0
    %1200 = vmatprep.subr.mxu0 0.0
    %1201 = vmatpush1.msra.mxu0 0.0
    %1202 = vmatprep.subr.mxu0 0.0
    %1203 = vmatpush1.msra.mxu0 0.0
    %1204 = vmatprep.subr.mxu0 0.0
    %1205 = vmatpush1.msra.mxu0 0.0
    %1206 = vmatprep.subr.mxu0 0.0
    %1207 = vmatpush1.msra.mxu0 0.0
    %1208 = vmatprep.subr.mxu0 0.0
    %1209 = vmatpush1.msra.mxu0 0.0
    %1210 = vmatprep.subr.mxu0 0.0
    %1211 = vmatpush1.msra.mxu0 0.0
    %1212 = vmatprep.subr.mxu0 0.0
    %1213 = vmatpush1.msra.mxu0 0.0
    %1214 = vmatprep.mubr.f32.mxu0 0.0
    %1215 = vmatmul.mubr.f32.gmra.mrb[0].mxu0 %v1148
    %v1216 = vpop.f32.mrb[0].mxu0
    %v1217 = vadd.f32 0.0, %v1216
    %v1218 = vpop.f32.mrb[0].mxu0
    %1219 = vdwg.mxu0
    %v1220 = vsel %vm115, %v1135, 0
    %1222 = vmatprep.subr.mxu0 0.0
    %1223 = vmatpush1.msra.mxu0 %v1138
    %1224 = vmatprep.subr.mxu0 0.0
    %1225 = vmatpush1.msra.mxu0 %v1139
    %1226 = vmatprep.subr.mxu0 0.0
    %1227 = vmatpush1.msra.mxu0 %v1140
    %1228 = vmatprep.subr.mxu0 0.0
    %1229 = vmatpush1.msra.mxu0 %v1141
    %1230 = vmatprep.subr.mxu0 0.0
    %1231 = vmatpush1.msra.mxu0 0.0
    %1232 = vmatprep.subr.mxu0 0.0
    %1233 = vmatpush1.msra.mxu0 0.0
    %1234 = vmatprep.subr.mxu0 0.0
    %1235 = vmatpush1.msra.mxu0 0.0
    %1236 = vmatprep.subr.mxu0 0.0
    %1237 = vmatpush1.msra.mxu0 0.0
    %1238 = vmatprep.subr.mxu0 0.0
    %1239 = vmatpush1.msra.mxu0 0.0
    %1240 = vmatprep.subr.mxu0 0.0
    %1241 = vmatpush1.msra.mxu0 0.0
    %1242 = vmatprep.subr.mxu0 0.0
    %1243 = vmatpush1.msra.mxu0 0.0
    %1244 = vmatprep.subr.mxu0 0.0
    %1245 = vmatpush1.msra.mxu0 0.0
    %1246 = vmatprep.subr.mxu0 0.0
    %1247 = vmatpush1.msra.mxu0 0.0
    %1248 = vmatprep.subr.mxu0 0.0
    %1249 = vmatpush1.msra.mxu0 0.0
    %1250 = vmatprep.subr.mxu0 0.0
    %1251 = vmatpush1.msra.mxu0 0.0
    %1252 = vmatprep.subr.mxu0 0.0
    %1253 = vmatpush1.msra.mxu0 0.0
    %1254 = vmatprep.subr.mxu0 0.0
    %1255 = vmatpush1.msra.mxu0 0.0
    %1256 = vmatprep.subr.mxu0 0.0
    %1257 = vmatpush1.msra.mxu0 0.0
    %1258 = vmatprep.subr.mxu0 0.0
    %1259 = vmatpush1.msra.mxu0 0.0
    %1260 = vmatprep.subr.mxu0 0.0
    %1261 = vmatpush1.msra.mxu0 0.0
    %1262 = vmatprep.subr.mxu0 0.0
    %1263 = vmatpush1.msra.mxu0 0.0
    %1264 = vmatprep.subr.mxu0 0.0
    %1265 = vmatpush1.msra.mxu0 0.0
    %1266 = vmatprep.subr.mxu0 0.0
    %1267 = vmatpush1.msra.mxu0 0.0
    %1268 = vmatprep.subr.mxu0 0.0
    %1269 = vmatpush1.msra.mxu0 0.0
    %1270 = vmatprep.subr.mxu0 0.0
    %1271 = vmatpush1.msra.mxu0 0.0
    %1272 = vmatprep.subr.mxu0 0.0
    %1273 = vmatpush1.msra.mxu0 0.0
    %1274 = vmatprep.subr.mxu0 0.0
    %1275 = vmatpush1.msra.mxu0 0.0
    %1276 = vmatprep.subr.mxu0 0.0
    %1277 = vmatpush1.msra.mxu0 0.0
    %1278 = vmatprep.subr.mxu0 0.0
    %1279 = vmatpush1.msra.mxu0 0.0
    %1280 = vmatprep.subr.mxu0 0.0
    %1281 = vmatpush1.msra.mxu0 0.0
    %1282 = vmatprep.subr.mxu0 0.0
    %1283 = vmatpush1.msra.mxu0 0.0
    %1284 = vmatprep.subr.mxu0 0.0
    %1285 = vmatpush1.msra.mxu0 0.0
    %1286 = vmatprep.mubr.f32.mxu0 0.0
    %1287 = vmatmul.mubr.f32.gmra.mrb[0].mxu0 %v1220
    %v1288 = vpop.f32.mrb[0].mxu0
    %v1289 = vadd.f32 %v1217, %v1288
    %v1290 = vpop.f32.mrb[0].mxu0
    %1291 = vdwg.mxu0
    %v1292 = vadd.f32 %v1289, %v204
    %v1293 = vtanh.pop %v1292
    %1294 = vst.msk [vmem:[%s306] sm:$0x3] %vm300, %v1293
    %v1297 = vunpack.c.l.s4 1966171168
    %v1298 = vunpack.c.0.s8 %v1297
    %v1299 = vlaneseq
    %v1300 = vshrl.u32 %v1299, 7
    %v1301 = vsub.s32 %v1298, %v1300
    %v1302 = vrot.slane %v1293, %v1301
    %v1303 = vcombine.high %v1302, %v1302
    %v1305 = vunpack.c.l.s4 1966171168
    %v1306 = vunpack.c.0.s8 %v1305
    %v1307 = vlaneseq
    %v1308 = vshrl.u32 %v1307, 7
    %v1309 = vsub.s32 %v1306, %v1308
    %v1310 = vrot.slane %v1302, %v1309
    %v1312 = vunpack.c.l.s4 1966171168
    %v1313 = vunpack.c.0.s8 %v1312
    %v1314 = vlaneseq
    %v1315 = vshrl.u32 %v1314, 7
    %v1316 = vsub.s32 %v1313, %v1315
    %v1317 = vrot.slane %v1303, %v1316
    %1320 = vst.msk [vmem:[#allocation13 + $0x3] sm:$0x1] %vm485, %v1310
    %1321 = vst.msk [vmem:[#allocation13 + $0xb] sm:$0x1] %vm485, %v1317
    %v1322 = vld [vmem:[#allocation2 + $0x4] sm:$0x1]
    %v1323 = vld [vmem:[#allocation2 + $0xc] sm:$0x1]
    %v1324 = vld [vmem:[#allocation3] sm:$0x3]
    %v1325 = vld [vmem:[#allocation9] sm:$0xff]
    %v1326 = vld [vmem:[#allocation9 + $0x8] sm:$0xff]
    %v1327 = vld [vmem:[#allocation9 + $0x10] sm:$0xff]
    %v1328 = vld [vmem:[#allocation9 + $0x18] sm:$0xff]
    %v1330 = vsel %vm115, %v1324, 0
    %1332 = vmatprep.subr.mxu0 0.0
    %1333 = vmatpush1.msra.mxu0 %v1325
    %1334 = vmatprep.subr.mxu0 0.0
    %1335 = vmatpush1.msra.mxu0 %v1326
    %1336 = vmatprep.subr.mxu0 0.0
    %1337 = vmatpush1.msra.mxu0 %v1327
    %1338 = vmatprep.subr.mxu0 0.0
    %1339 = vmatpush1.msra.mxu0 %v1328
    %1340 = vmatprep.subr.mxu0 0.0
    %1341 = vmatpush1.msra.mxu0 0.0
    %1342 = vmatprep.subr.mxu0 0.0
    %1343 = vmatpush1.msra.mxu0 0.0
    %1344 = vmatprep.subr.mxu0 0.0
    %1345 = vmatpush1.msra.mxu0 0.0
    %1346 = vmatprep.subr.mxu0 0.0
    %1347 = vmatpush1.msra.mxu0 0.0
    %1348 = vmatprep.subr.mxu0 0.0
    %1349 = vmatpush1.msra.mxu0 0.0
    %1350 = vmatprep.subr.mxu0 0.0
    %1351 = vmatpush1.msra.mxu0 0.0
    %1352 = vmatprep.subr.mxu0 0.0
    %1353 = vmatpush1.msra.mxu0 0.0
    %1354 = vmatprep.subr.mxu0 0.0
    %1355 = vmatpush1.msra.mxu0 0.0
    %1356 = vmatprep.subr.mxu0 0.0
    %1357 = vmatpush1.msra.mxu0 0.0
    %1358 = vmatprep.subr.mxu0 0.0
    %1359 = vmatpush1.msra.mxu0 0.0
    %1360 = vmatprep.subr.mxu0 0.0
    %1361 = vmatpush1.msra.mxu0 0.0
    %1362 = vmatprep.subr.mxu0 0.0
    %1363 = vmatpush1.msra.mxu0 0.0
    %1364 = vmatprep.subr.mxu0 0.0
    %1365 = vmatpush1.msra.mxu0 0.0
    %1366 = vmatprep.subr.mxu0 0.0
    %1367 = vmatpush1.msra.mxu0 0.0
    %1368 = vmatprep.subr.mxu0 0.0
    %1369 = vmatpush1.msra.mxu0 0.0
    %1370 = vmatprep.subr.mxu0 0.0
    %1371 = vmatpush1.msra.mxu0 0.0
    %1372 = vmatprep.subr.mxu0 0.0
    %1373 = vmatpush1.msra.mxu0 0.0
    %1374 = vmatprep.subr.mxu0 0.0
    %1375 = vmatpush1.msra.mxu0 0.0
    %1376 = vmatprep.subr.mxu0 0.0
    %1377 = vmatpush1.msra.mxu0 0.0
    %1378 = vmatprep.subr.mxu0 0.0
    %1379 = vmatpush1.msra.mxu0 0.0
    %1380 = vmatprep.subr.mxu0 0.0
    %1381 = vmatpush1.msra.mxu0 0.0
    %1382 = vmatprep.subr.mxu0 0.0
    %1383 = vmatpush1.msra.mxu0 0.0
    %1384 = vmatprep.subr.mxu0 0.0
    %1385 = vmatpush1.msra.mxu0 0.0
    %1386 = vmatprep.subr.mxu0 0.0
    %1387 = vmatpush1.msra.mxu0 0.0
    %1388 = vmatprep.subr.mxu0 0.0
    %1389 = vmatpush1.msra.mxu0 0.0
    %1390 = vmatprep.subr.mxu0 0.0
    %1391 = vmatpush1.msra.mxu0 0.0
    %1392 = vmatprep.subr.mxu0 0.0
    %1393 = vmatpush1.msra.mxu0 0.0
    %1394 = vmatprep.subr.mxu0 0.0
    %1395 = vmatpush1.msra.mxu0 0.0
    %1396 = vmatprep.mubr.f32.mxu0 0.0
    %1397 = vmatmul.mubr.f32.gmra.mrb[0].mxu0 %v1330
    %v1398 = vpop.f32.mrb[0].mxu0
    %v1399 = vadd.f32 0.0, %v1398
    %v1400 = vpop.f32.mrb[0].mxu0
    %1401 = vdwg.mxu0
    %v1403 = vrot.slane %v1399, 1
    %v1406 = vadd.f32 %v1322, %v1399
    %v1407 = vadd.f32 %v1323, %v1403
    %v1408 = vtanh.pop %v1406
    %v1409 = vtanh.pop %v1407
    %v1412 = vrot.slane %v1409, 7
    %v1413 = vsel %vm297, %v1412, %v1408
    %1415 = vst.msk [vmem:[#allocation3] sm:$0x3] %vm300, %v1413
    %v1416 = vld [vmem:[#allocation10] sm:$0xff]
    %v1417 = vld [vmem:[#allocation10 + $0x8] sm:$0xff]
    %v1418 = vld [vmem:[#allocation10 + $0x10] sm:$0xff]
    %v1419 = vld [vmem:[#allocation10 + $0x18] sm:$0xff]
    %v1420 = vld [vmem:[%s306] sm:$0x3]
    %v1421 = vld [vmem:[#allocation12] sm:$0xff]
    %v1422 = vld [vmem:[#allocation12 + $0x8] sm:$0xff]
    %v1423 = vld [vmem:[#allocation12 + $0x10] sm:$0xff]
    %v1424 = vld [vmem:[#allocation12 + $0x18] sm:$0xff]
    %v1426 = vsel %vm115, %v1420, 0
    %1428 = vmatprep.subr.mxu0 0.0
    %1429 = vmatpush1.msra.mxu0 %v1421
    %1430 = vmatprep.subr.mxu0 0.0
    %1431 = vmatpush1.msra.mxu0 %v1422
    %1432 = vmatprep.subr.mxu0 0.0
    %1433 = vmatpush1.msra.mxu0 %v1423
    %1434 = vmatprep.subr.mxu0 0.0
    %1435 = vmatpush1.msra.mxu0 %v1424
    %1436 = vmatprep.subr.mxu0 0.0
    %1437 = vmatpush1.msra.mxu0 0.0
    %1438 = vmatprep.subr.mxu0 0.0
    %1439 = vmatpush1.msra.mxu0 0.0
    %1440 = vmatprep.subr.mxu0 0.0
    %1441 = vmatpush1.msra.mxu0 0.0
    %1442 = vmatprep.subr.mxu0 0.0
    %1443 = vmatpush1.msra.mxu0 0.0
    %1444 = vmatprep.subr.mxu0 0.0
    %1445 = vmatpush1.msra.mxu0 0.0
    %1446 = vmatprep.subr.mxu0 0.0
    %1447 = vmatpush1.msra.mxu0 0.0
    %1448 = vmatprep.subr.mxu0 0.0
    %1449 = vmatpush1.msra.mxu0 0.0
    %1450 = vmatprep.subr.mxu0 0.0
    %1451 = vmatpush1.msra.mxu0 0.0
    %1452 = vmatprep.subr.mxu0 0.0
    %1453 = vmatpush1.msra.mxu0 0.0
    %1454 = vmatprep.subr.mxu0 0.0
    %1455 = vmatpush1.msra.mxu0 0.0
    %1456 = vmatprep.subr.mxu0 0.0
    %1457 = vmatpush1.msra.mxu0 0.0
    %1458 = vmatprep.subr.mxu0 0.0
    %1459 = vmatpush1.msra.mxu0 0.0
    %1460 = vmatprep.subr.mxu0 0.0
    %1461 = vmatpush1.msra.mxu0 0.0
    %1462 = vmatprep.subr.mxu0 0.0
    %1463 = vmatpush1.msra.mxu0 0.0
    %1464 = vmatprep.subr.mxu0 0.0
    %1465 = vmatpush1.msra.mxu0 0.0
    %1466 = vmatprep.subr.mxu0 0.0
    %1467 = vmatpush1.msra.mxu0 0.0
    %1468 = vmatprep.subr.mxu0 0.0
    %1469 = vmatpush1.msra.mxu0 0.0
    %1470 = vmatprep.subr.mxu0 0.0
    %1471 = vmatpush1.msra.mxu0 0.0
    %1472 = vmatprep.subr.mxu0 0.0
    %1473 = vmatpush1.msra.mxu0 0.0
    %1474 = vmatprep.subr.mxu0 0.0
    %1475 = vmatpush1.msra.mxu0 0.0
    %1476 = vmatprep.subr.mxu0 0.0
    %1477 = vmatpush1.msra.mxu0 0.0
    %1478 = vmatprep.subr.mxu0 0.0
    %1479 = vmatpush1.msra.mxu0 0.0
    %1480 = vmatprep.subr.mxu0 0.0
    %1481 = vmatpush1.msra.mxu0 0.0
    %1482 = vmatprep.subr.mxu0 0.0
    %1483 = vmatpush1.msra.mxu0 0.0
    %1484 = vmatprep.subr.mxu0 0.0
    %1485 = vmatpush1.msra.mxu0 0.0
    %1486 = vmatprep.subr.mxu0 0.0
    %1487 = vmatpush1.msra.mxu0 0.0
    %1488 = vmatprep.subr.mxu0 0.0
    %1489 = vmatpush1.msra.mxu0 0.0
    %1490 = vmatprep.subr.mxu0 0.0
    %1491 = vmatpush1.msra.mxu0 0.0
    %1492 = vmatprep.mubr.f32.mxu0 0.0
    %1493 = vmatmul.mubr.f32.gmra.mrb[0].mxu0 %v1426
    %v1494 = vpop.f32.mrb[0].mxu0
    %v1495 = vadd.f32 0.0, %v1494
    %v1496 = vpop.f32.mrb[0].mxu0
    %1497 = vdwg.mxu0
    %v1498 = vsel %vm115, %v1413, 0
    %1500 = vmatprep.subr.mxu0 0.0
    %1501 = vmatpush1.msra.mxu0 %v1416
    %1502 = vmatprep.subr.mxu0 0.0
    %1503 = vmatpush1.msra.mxu0 %v1417
    %1504 = vmatprep.subr.mxu0 0.0
    %1505 = vmatpush1.msra.mxu0 %v1418
    %1506 = vmatprep.subr.mxu0 0.0
    %1507 = vmatpush1.msra.mxu0 %v1419
    %1508 = vmatprep.subr.mxu0 0.0
    %1509 = vmatpush1.msra.mxu0 0.0
    %1510 = vmatprep.subr.mxu0 0.0
    %1511 = vmatpush1.msra.mxu0 0.0
    %1512 = vmatprep.subr.mxu0 0.0
    %1513 = vmatpush1.msra.mxu0 0.0
    %1514 = vmatprep.subr.mxu0 0.0
    %1515 = vmatpush1.msra.mxu0 0.0
    %1516 = vmatprep.subr.mxu0 0.0
    %1517 = vmatpush1.msra.mxu0 0.0
    %1518 = vmatprep.subr.mxu0 0.0
    %1519 = vmatpush1.msra.mxu0 0.0
    %1520 = vmatprep.subr.mxu0 0.0
    %1521 = vmatpush1.msra.mxu0 0.0
    %1522 = vmatprep.subr.mxu0 0.0
    %1523 = vmatpush1.msra.mxu0 0.0
    %1524 = vmatprep.subr.mxu0 0.0
    %1525 = vmatpush1.msra.mxu0 0.0
    %1526 = vmatprep.subr.mxu0 0.0
    %1527 = vmatpush1.msra.mxu0 0.0
    %1528 = vmatprep.subr.mxu0 0.0
    %1529 = vmatpush1.msra.mxu0 0.0
    %1530 = vmatprep.subr.mxu0 0.0
    %1531 = vmatpush1.msra.mxu0 0.0
    %1532 = vmatprep.subr.mxu0 0.0
    %1533 = vmatpush1.msra.mxu0 0.0
    %1534 = vmatprep.subr.mxu0 0.0
    %1535 = vmatpush1.msra.mxu0 0.0
    %1536 = vmatprep.subr.mxu0 0.0
    %1537 = vmatpush1.msra.mxu0 0.0
    %1538 = vmatprep.subr.mxu0 0.0
    %1539 = vmatpush1.msra.mxu0 0.0
    %1540 = vmatprep.subr.mxu0 0.0
    %1541 = vmatpush1.msra.mxu0 0.0
    %1542 = vmatprep.subr.mxu0 0.0
    %1543 = vmatpush1.msra.mxu0 0.0
    %1544 = vmatprep.subr.mxu0 0.0
    %1545 = vmatpush1.msra.mxu0 0.0
    %1546 = vmatprep.subr.mxu0 0.0
    %1547 = vmatpush1.msra.mxu0 0.0
    %1548 = vmatprep.subr.mxu0 0.0
    %1549 = vmatpush1.msra.mxu0 0.0
    %1550 = vmatprep.subr.mxu0 0.0
    %1551 = vmatpush1.msra.mxu0 0.0
    %1552 = vmatprep.subr.mxu0 0.0
    %1553 = vmatpush1.msra.mxu0 0.0
    %1554 = vmatprep.subr.mxu0 0.0
    %1555 = vmatpush1.msra.mxu0 0.0
    %1556 = vmatprep.subr.mxu0 0.0
    %1557 = vmatpush1.msra.mxu0 0.0
    %1558 = vmatprep.subr.mxu0 0.0
    %1559 = vmatpush1.msra.mxu0 0.0
    %1560 = vmatprep.subr.mxu0 0.0
    %1561 = vmatpush1.msra.mxu0 0.0
    %1562 = vmatprep.subr.mxu0 0.0
    %1563 = vmatpush1.msra.mxu0 0.0
    %1564 = vmatprep.mubr.f32.mxu0 0.0
    %1565 = vmatmul.mubr.f32.gmra.mrb[0].mxu0 %v1498
    %v1566 = vpop.f32.mrb[0].mxu0
    %v1567 = vadd.f32 %v1495, %v1566
    %v1568 = vpop.f32.mrb[0].mxu0
    %1569 = vdwg.mxu0
    %v1570 = vadd.f32 %v1567, %v204
    %v1571 = vtanh.pop %v1570
    %1572 = vst.msk [vmem:[%s306] sm:$0x3] %vm300, %v1571
    %v1575 = vunpack.c.l.s4 1966171168
    %v1576 = vunpack.c.0.s8 %v1575
    %v1577 = vlaneseq
    %v1578 = vshrl.u32 %v1577, 7
    %v1579 = vsub.s32 %v1576, %v1578
    %v1580 = vrot.slane %v1571, %v1579
    %v1581 = vcombine.high %v1580, %v1580
    %v1583 = vunpack.c.l.s4 1966171168
    %v1584 = vunpack.c.0.s8 %v1583
    %v1585 = vlaneseq
    %v1586 = vshrl.u32 %v1585, 7
    %v1587 = vsub.s32 %v1584, %v1586
    %v1588 = vrot.slane %v1580, %v1587
    %v1590 = vunpack.c.l.s4 1966171168
    %v1591 = vunpack.c.0.s8 %v1590
    %v1592 = vlaneseq
    %v1593 = vshrl.u32 %v1592, 7
    %v1594 = vsub.s32 %v1591, %v1593
    %v1595 = vrot.slane %v1581, %v1594
    %1598 = vst.msk [vmem:[#allocation13 + $0x4] sm:$0x1] %vm485, %v1588
    %1599 = vst.msk [vmem:[#allocation13 + $0xc] sm:$0x1] %vm485, %v1595
    %v1600 = vld [vmem:[#allocation2 + $0x5] sm:$0x1]
    %v1601 = vld [vmem:[#allocation2 + $0xd] sm:$0x1]
    %v1602 = vld [vmem:[#allocation3] sm:$0x3]
    %v1603 = vld [vmem:[#allocation9] sm:$0xff]
    %v1604 = vld [vmem:[#allocation9 + $0x8] sm:$0xff]
    %v1605 = vld [vmem:[#allocation9 + $0x10] sm:$0xff]
    %v1606 = vld [vmem:[#allocation9 + $0x18] sm:$0xff]
    %v1608 = vsel %vm115, %v1602, 0
    %1610 = vmatprep.subr.mxu0 0.0
    %1611 = vmatpush1.msra.mxu0 %v1603
    %1612 = vmatprep.subr.mxu0 0.0
    %1613 = vmatpush1.msra.mxu0 %v1604
    %1614 = vmatprep.subr.mxu0 0.0
    %1615 = vmatpush1.msra.mxu0 %v1605
    %1616 = vmatprep.subr.mxu0 0.0
    %1617 = vmatpush1.msra.mxu0 %v1606
    %1618 = vmatprep.subr.mxu0 0.0
    %1619 = vmatpush1.msra.mxu0 0.0
    %1620 = vmatprep.subr.mxu0 0.0
    %1621 = vmatpush1.msra.mxu0 0.0
    %1622 = vmatprep.subr.mxu0 0.0
    %1623 = vmatpush1.msra.mxu0 0.0
    %1624 = vmatprep.subr.mxu0 0.0
    %1625 = vmatpush1.msra.mxu0 0.0
    %1626 = vmatprep.subr.mxu0 0.0
    %1627 = vmatpush1.msra.mxu0 0.0
    %1628 = vmatprep.subr.mxu0 0.0
    %1629 = vmatpush1.msra.mxu0 0.0
    %1630 = vmatprep.subr.mxu0 0.0
    %1631 = vmatpush1.msra.mxu0 0.0
    %1632 = vmatprep.subr.mxu0 0.0
    %1633 = vmatpush1.msra.mxu0 0.0
    %1634 = vmatprep.subr.mxu0 0.0
    %1635 = vmatpush1.msra.mxu0 0.0
    %1636 = vmatprep.subr.mxu0 0.0
    %1637 = vmatpush1.msra.mxu0 0.0
    %1638 = vmatprep.subr.mxu0 0.0
    %1639 = vmatpush1.msra.mxu0 0.0
    %1640 = vmatprep.subr.mxu0 0.0
    %1641 = vmatpush1.msra.mxu0 0.0
    %1642 = vmatprep.subr.mxu0 0.0
    %1643 = vmatpush1.msra.mxu0 0.0
    %1644 = vmatprep.subr.mxu0 0.0
    %1645 = vmatpush1.msra.mxu0 0.0
    %1646 = vmatprep.subr.mxu0 0.0
    %1647 = vmatpush1.msra.mxu0 0.0
    %1648 = vmatprep.subr.mxu0 0.0
    %1649 = vmatpush1.msra.mxu0 0.0
    %1650 = vmatprep.subr.mxu0 0.0
    %1651 = vmatpush1.msra.mxu0 0.0
    %1652 = vmatprep.subr.mxu0 0.0
    %1653 = vmatpush1.msra.mxu0 0.0
    %1654 = vmatprep.subr.mxu0 0.0
    %1655 = vmatpush1.msra.mxu0 0.0
    %1656 = vmatprep.subr.mxu0 0.0
    %1657 = vmatpush1.msra.mxu0 0.0
    %1658 = vmatprep.subr.mxu0 0.0
    %1659 = vmatpush1.msra.mxu0 0.0
    %1660 = vmatprep.subr.mxu0 0.0
    %1661 = vmatpush1.msra.mxu0 0.0
    %1662 = vmatprep.subr.mxu0 0.0
    %1663 = vmatpush1.msra.mxu0 0.0
    %1664 = vmatprep.subr.mxu0 0.0
    %1665 = vmatpush1.msra.mxu0 0.0
    %1666 = vmatprep.subr.mxu0 0.0
    %1667 = vmatpush1.msra.mxu0 0.0
    %1668 = vmatprep.subr.mxu0 0.0
    %1669 = vmatpush1.msra.mxu0 0.0
    %1670 = vmatprep.subr.mxu0 0.0
    %1671 = vmatpush1.msra.mxu0 0.0
    %1672 = vmatprep.subr.mxu0 0.0
    %1673 = vmatpush1.msra.mxu0 0.0
    %1674 = vmatprep.mubr.f32.mxu0 0.0
    %1675 = vmatmul.mubr.f32.gmra.mrb[0].mxu0 %v1608
    %v1676 = vpop.f32.mrb[0].mxu0
    %v1677 = vadd.f32 0.0, %v1676
    %v1678 = vpop.f32.mrb[0].mxu0
    %1679 = vdwg.mxu0
    %v1681 = vrot.slane %v1677, 1
    %v1684 = vadd.f32 %v1600, %v1677
    %v1685 = vadd.f32 %v1601, %v1681
    %v1686 = vtanh.pop %v1684
    %v1687 = vtanh.pop %v1685
    %v1690 = vrot.slane %v1687, 7
    %v1691 = vsel %vm297, %v1690, %v1686
    %1693 = vst.msk [vmem:[#allocation3] sm:$0x3] %vm300, %v1691
    %v1694 = vld [vmem:[#allocation10] sm:$0xff]
    %v1695 = vld [vmem:[#allocation10 + $0x8] sm:$0xff]
    %v1696 = vld [vmem:[#allocation10 + $0x10] sm:$0xff]
    %v1697 = vld [vmem:[#allocation10 + $0x18] sm:$0xff]
    %v1698 = vld [vmem:[%s306] sm:$0x3]
    %v1699 = vld [vmem:[#allocation12] sm:$0xff]
    %v1700 = vld [vmem:[#allocation12 + $0x8] sm:$0xff]
    %v1701 = vld [vmem:[#allocation12 + $0x10] sm:$0xff]
    %v1702 = vld [vmem:[#allocation12 + $0x18] sm:$0xff]
    %v1704 = vsel %vm115, %v1698, 0
    %1706 = vmatprep.subr.mxu0 0.0
    %1707 = vmatpush1.msra.mxu0 %v1699
    %1708 = vmatprep.subr.mxu0 0.0
    %1709 = vmatpush1.msra.mxu0 %v1700
    %1710 = vmatprep.subr.mxu0 0.0
    %1711 = vmatpush1.msra.mxu0 %v1701
    %1712 = vmatprep.subr.mxu0 0.0
    %1713 = vmatpush1.msra.mxu0 %v1702
    %1714 = vmatprep.subr.mxu0 0.0
    %1715 = vmatpush1.msra.mxu0 0.0
    %1716 = vmatprep.subr.mxu0 0.0
    %1717 = vmatpush1.msra.mxu0 0.0
    %1718 = vmatprep.subr.mxu0 0.0
    %1719 = vmatpush1.msra.mxu0 0.0
    %1720 = vmatprep.subr.mxu0 0.0
    %1721 = vmatpush1.msra.mxu0 0.0
    %1722 = vmatprep.subr.mxu0 0.0
    %1723 = vmatpush1.msra.mxu0 0.0
    %1724 = vmatprep.subr.mxu0 0.0
    %1725 = vmatpush1.msra.mxu0 0.0
    %1726 = vmatprep.subr.mxu0 0.0
    %1727 = vmatpush1.msra.mxu0 0.0
    %1728 = vmatprep.subr.mxu0 0.0
    %1729 = vmatpush1.msra.mxu0 0.0
    %1730 = vmatprep.subr.mxu0 0.0
    %1731 = vmatpush1.msra.mxu0 0.0
    %1732 = vmatprep.subr.mxu0 0.0
    %1733 = vmatpush1.msra.mxu0 0.0
    %1734 = vmatprep.subr.mxu0 0.0
    %1735 = vmatpush1.msra.mxu0 0.0
    %1736 = vmatprep.subr.mxu0 0.0
    %1737 = vmatpush1.msra.mxu0 0.0
    %1738 = vmatprep.subr.mxu0 0.0
    %1739 = vmatpush1.msra.mxu0 0.0
    %1740 = vmatprep.subr.mxu0 0.0
    %1741 = vmatpush1.msra.mxu0 0.0
    %1742 = vmatprep.subr.mxu0 0.0
    %1743 = vmatpush1.msra.mxu0 0.0
    %1744 = vmatprep.subr.mxu0 0.0
    %1745 = vmatpush1.msra.mxu0 0.0
    %1746 = vmatprep.subr.mxu0 0.0
    %1747 = vmatpush1.msra.mxu0 0.0
    %1748 = vmatprep.subr.mxu0 0.0
    %1749 = vmatpush1.msra.mxu0 0.0
    %1750 = vmatprep.subr.mxu0 0.0
    %1751 = vmatpush1.msra.mxu0 0.0
    %1752 = vmatprep.subr.mxu0 0.0
    %1753 = vmatpush1.msra.mxu0 0.0
    %1754 = vmatprep.subr.mxu0 0.0
    %1755 = vmatpush1.msra.mxu0 0.0
    %1756 = vmatprep.subr.mxu0 0.0
    %1757 = vmatpush1.msra.mxu0 0.0
    %1758 = vmatprep.subr.mxu0 0.0
    %1759 = vmatpush1.msra.mxu0 0.0
    %1760 = vmatprep.subr.mxu0 0.0
    %1761 = vmatpush1.msra.mxu0 0.0
    %1762 = vmatprep.subr.mxu0 0.0
    %1763 = vmatpush1.msra.mxu0 0.0
    %1764 = vmatprep.subr.mxu0 0.0
    %1765 = vmatpush1.msra.mxu0 0.0
    %1766 = vmatprep.subr.mxu0 0.0
    %1767 = vmatpush1.msra.mxu0 0.0
    %1768 = vmatprep.subr.mxu0 0.0
    %1769 = vmatpush1.msra.mxu0 0.0
    %1770 = vmatprep.mubr.f32.mxu0 0.0
    %1771 = vmatmul.mubr.f32.gmra.mrb[0].mxu0 %v1704
    %v1772 = vpop.f32.mrb[0].mxu0
    %v1773 = vadd.f32 0.0, %v1772
    %v1774 = vpop.f32.mrb[0].mxu0
    %1775 = vdwg.mxu0
    %v1776 = vsel %vm115, %v1691, 0
    %1778 = vmatprep.subr.mxu0 0.0
    %1779 = vmatpush1.msra.mxu0 %v1694
    %1780 = vmatprep.subr.mxu0 0.0
    %1781 = vmatpush1.msra.mxu0 %v1695
    %1782 = vmatprep.subr.mxu0 0.0
    %1783 = vmatpush1.msra.mxu0 %v1696
    %1784 = vmatprep.subr.mxu0 0.0
    %1785 = vmatpush1.msra.mxu0 %v1697
    %1786 = vmatprep.subr.mxu0 0.0
    %1787 = vmatpush1.msra.mxu0 0.0
    %1788 = vmatprep.subr.mxu0 0.0
    %1789 = vmatpush1.msra.mxu0 0.0
    %1790 = vmatprep.subr.mxu0 0.0
    %1791 = vmatpush1.msra.mxu0 0.0
    %1792 = vmatprep.subr.mxu0 0.0
    %1793 = vmatpush1.msra.mxu0 0.0
    %1794 = vmatprep.subr.mxu0 0.0
    %1795 = vmatpush1.msra.mxu0 0.0
    %1796 = vmatprep.subr.mxu0 0.0
    %1797 = vmatpush1.msra.mxu0 0.0
    %1798 = vmatprep.subr.mxu0 0.0
    %1799 = vmatpush1.msra.mxu0 0.0
    %1800 = vmatprep.subr.mxu0 0.0
    %1801 = vmatpush1.msra.mxu0 0.0
    %1802 = vmatprep.subr.mxu0 0.0
    %1803 = vmatpush1.msra.mxu0 0.0
    %1804 = vmatprep.subr.mxu0 0.0
    %1805 = vmatpush1.msra.mxu0 0.0
    %1806 = vmatprep.subr.mxu0 0.0
    %1807 = vmatpush1.msra.mxu0 0.0
    %1808 = vmatprep.subr.mxu0 0.0
    %1809 = vmatpush1.msra.mxu0 0.0
    %1810 = vmatprep.subr.mxu0 0.0
    %1811 = vmatpush1.msra.mxu0 0.0
    %1812 = vmatprep.subr.mxu0 0.0
    %1813 = vmatpush1.msra.mxu0 0.0
    %1814 = vmatprep.subr.mxu0 0.0
    %1815 = vmatpush1.msra.mxu0 0.0
    %1816 = vmatprep.subr.mxu0 0.0
    %1817 = vmatpush1.msra.mxu0 0.0
    %1818 = vmatprep.subr.mxu0 0.0
    %1819 = vmatpush1.msra.mxu0 0.0
    %1820 = vmatprep.subr.mxu0 0.0
    %1821 = vmatpush1.msra.mxu0 0.0
    %1822 = vmatprep.subr.mxu0 0.0
    %1823 = vmatpush1.msra.mxu0 0.0
    %1824 = vmatprep.subr.mxu0 0.0
    %1825 = vmatpush1.msra.mxu0 0.0
    %1826 = vmatprep.subr.mxu0 0.0
    %1827 = vmatpush1.msra.mxu0 0.0
    %1828 = vmatprep.subr.mxu0 0.0
    %1829 = vmatpush1.msra.mxu0 0.0
    %1830 = vmatprep.subr.mxu0 0.0
    %1831 = vmatpush1.msra.mxu0 0.0
    %1832 = vmatprep.subr.mxu0 0.0
    %1833 = vmatpush1.msra.mxu0 0.0
    %1834 = vmatprep.subr.mxu0 0.0
    %1835 = vmatpush1.msra.mxu0 0.0
    %1836 = vmatprep.subr.mxu0 0.0
    %1837 = vmatpush1.msra.mxu0 0.0
    %1838 = vmatprep.subr.mxu0 0.0
    %1839 = vmatpush1.msra.mxu0 0.0
    %1840 = vmatprep.subr.mxu0 0.0
    %1841 = vmatpush1.msra.mxu0 0.0
    %1842 = vmatprep.mubr.f32.mxu0 0.0
    %1843 = vmatmul.mubr.f32.gmra.mrb[0].mxu0 %v1776
    %v1844 = vpop.f32.mrb[0].mxu0
    %v1845 = vadd.f32 %v1773, %v1844
    %v1846 = vpop.f32.mrb[0].mxu0
    %1847 = vdwg.mxu0
    %v1848 = vadd.f32 %v1845, %v204
    %v1849 = vtanh.pop %v1848
    %1850 = vst.msk [vmem:[%s306] sm:$0x3] %vm300, %v1849
    %v1853 = vunpack.c.l.s4 1966171168
    %v1854 = vunpack.c.0.s8 %v1853
    %v1855 = vlaneseq
    %v1856 = vshrl.u32 %v1855, 7
    %v1857 = vsub.s32 %v1854, %v1856
    %v1858 = vrot.slane %v1849, %v1857
    %v1859 = vcombine.high %v1858, %v1858
    %v1861 = vunpack.c.l.s4 1966171168
    %v1862 = vunpack.c.0.s8 %v1861
    %v1863 = vlaneseq
    %v1864 = vshrl.u32 %v1863, 7
    %v1865 = vsub.s32 %v1862, %v1864
    %v1866 = vrot.slane %v1858, %v1865
    %v1868 = vunpack.c.l.s4 1966171168
    %v1869 = vunpack.c.0.s8 %v1868
    %v1870 = vlaneseq
    %v1871 = vshrl.u32 %v1870, 7
    %v1872 = vsub.s32 %v1869, %v1871
    %v1873 = vrot.slane %v1859, %v1872
    %1876 = vst.msk [vmem:[#allocation13 + $0x5] sm:$0x1] %vm485, %v1866
    %1877 = vst.msk [vmem:[#allocation13 + $0xd] sm:$0x1] %vm485, %v1873
    %v1878 = vld [vmem:[#allocation2 + $0x6] sm:$0x1]
    %v1879 = vld [vmem:[#allocation2 + $0xe] sm:$0x1]
    %v1880 = vld [vmem:[#allocation3] sm:$0x3]
    %v1881 = vld [vmem:[#allocation9] sm:$0xff]
    %v1882 = vld [vmem:[#allocation9 + $0x8] sm:$0xff]
    %v1883 = vld [vmem:[#allocation9 + $0x10] sm:$0xff]
    %v1884 = vld [vmem:[#allocation9 + $0x18] sm:$0xff]
    %v1886 = vsel %vm115, %v1880, 0
    %1888 = vmatprep.subr.mxu0 0.0
    %1889 = vmatpush1.msra.mxu0 %v1881
    %1890 = vmatprep.subr.mxu0 0.0
    %1891 = vmatpush1.msra.mxu0 %v1882
    %1892 = vmatprep.subr.mxu0 0.0
    %1893 = vmatpush1.msra.mxu0 %v1883
    %1894 = vmatprep.subr.mxu0 0.0
    %1895 = vmatpush1.msra.mxu0 %v1884
    %1896 = vmatprep.subr.mxu0 0.0
    %1897 = vmatpush1.msra.mxu0 0.0
    %1898 = vmatprep.subr.mxu0 0.0
    %1899 = vmatpush1.msra.mxu0 0.0
    %1900 = vmatprep.subr.mxu0 0.0
    %1901 = vmatpush1.msra.mxu0 0.0
    %1902 = vmatprep.subr.mxu0 0.0
    %1903 = vmatpush1.msra.mxu0 0.0
    %1904 = vmatprep.subr.mxu0 0.0
    %1905 = vmatpush1.msra.mxu0 0.0
    %1906 = vmatprep.subr.mxu0 0.0
    %1907 = vmatpush1.msra.mxu0 0.0
    %1908 = vmatprep.subr.mxu0 0.0
    %1909 = vmatpush1.msra.mxu0 0.0
    %1910 = vmatprep.subr.mxu0 0.0
    %1911 = vmatpush1.msra.mxu0 0.0
    %1912 = vmatprep.subr.mxu0 0.0
    %1913 = vmatpush1.msra.mxu0 0.0
    %1914 = vmatprep.subr.mxu0 0.0
    %1915 = vmatpush1.msra.mxu0 0.0
    %1916 = vmatprep.subr.mxu0 0.0
    %1917 = vmatpush1.msra.mxu0 0.0
    %1918 = vmatprep.subr.mxu0 0.0
    %1919 = vmatpush1.msra.mxu0 0.0
    %1920 = vmatprep.subr.mxu0 0.0
    %1921 = vmatpush1.msra.mxu0 0.0
    %1922 = vmatprep.subr.mxu0 0.0
    %1923 = vmatpush1.msra.mxu0 0.0
    %1924 = vmatprep.subr.mxu0 0.0
    %1925 = vmatpush1.msra.mxu0 0.0
    %1926 = vmatprep.subr.mxu0 0.0
    %1927 = vmatpush1.msra.mxu0 0.0
    %1928 = vmatprep.subr.mxu0 0.0
    %1929 = vmatpush1.msra.mxu0 0.0
    %1930 = vmatprep.subr.mxu0 0.0
    %1931 = vmatpush1.msra.mxu0 0.0
    %1932 = vmatprep.subr.mxu0 0.0
    %1933 = vmatpush1.msra.mxu0 0.0
    %1934 = vmatprep.subr.mxu0 0.0
    %1935 = vmatpush1.msra.mxu0 0.0
    %1936 = vmatprep.subr.mxu0 0.0
    %1937 = vmatpush1.msra.mxu0 0.0
    %1938 = vmatprep.subr.mxu0 0.0
    %1939 = vmatpush1.msra.mxu0 0.0
    %1940 = vmatprep.subr.mxu0 0.0
    %1941 = vmatpush1.msra.mxu0 0.0
    %1942 = vmatprep.subr.mxu0 0.0
    %1943 = vmatpush1.msra.mxu0 0.0
    %1944 = vmatprep.subr.mxu0 0.0
    %1945 = vmatpush1.msra.mxu0 0.0
    %1946 = vmatprep.subr.mxu0 0.0
    %1947 = vmatpush1.msra.mxu0 0.0
    %1948 = vmatprep.subr.mxu0 0.0
    %1949 = vmatpush1.msra.mxu0 0.0
    %1950 = vmatprep.subr.mxu0 0.0
    %1951 = vmatpush1.msra.mxu0 0.0
    %1952 = vmatprep.mubr.f32.mxu0 0.0
    %1953 = vmatmul.mubr.f32.gmra.mrb[0].mxu0 %v1886
    %v1954 = vpop.f32.mrb[0].mxu0
    %v1955 = vadd.f32 0.0, %v1954
    %v1956 = vpop.f32.mrb[0].mxu0
    %1957 = vdwg.mxu0
    %v1959 = vrot.slane %v1955, 1
    %v1962 = vadd.f32 %v1878, %v1955
    %v1963 = vadd.f32 %v1879, %v1959
    %v1964 = vtanh.pop %v1962
    %v1965 = vtanh.pop %v1963
    %v1968 = vrot.slane %v1965, 7
    %v1969 = vsel %vm297, %v1968, %v1964
    %1971 = vst.msk [vmem:[#allocation3] sm:$0x3] %vm300, %v1969
    %v1972 = vld [vmem:[#allocation10] sm:$0xff]
    %v1973 = vld [vmem:[#allocation10 + $0x8] sm:$0xff]
    %v1974 = vld [vmem:[#allocation10 + $0x10] sm:$0xff]
    %v1975 = vld [vmem:[#allocation10 + $0x18] sm:$0xff]
    %v1976 = vld [vmem:[%s306] sm:$0x3]
    %v1977 = vld [vmem:[#allocation12] sm:$0xff]
    %v1978 = vld [vmem:[#allocation12 + $0x8] sm:$0xff]
    %v1979 = vld [vmem:[#allocation12 + $0x10] sm:$0xff]
    %v1980 = vld [vmem:[#allocation12 + $0x18] sm:$0xff]
    %v1982 = vsel %vm115, %v1976, 0
    %1984 = vmatprep.subr.mxu0 0.0
    %1985 = vmatpush1.msra.mxu0 %v1977
    %1986 = vmatprep.subr.mxu0 0.0
    %1987 = vmatpush1.msra.mxu0 %v1978
    %1988 = vmatprep.subr.mxu0 0.0
    %1989 = vmatpush1.msra.mxu0 %v1979
    %1990 = vmatprep.subr.mxu0 0.0
    %1991 = vmatpush1.msra.mxu0 %v1980
    %1992 = vmatprep.subr.mxu0 0.0
    %1993 = vmatpush1.msra.mxu0 0.0
    %1994 = vmatprep.subr.mxu0 0.0
    %1995 = vmatpush1.msra.mxu0 0.0
    %1996 = vmatprep.subr.mxu0 0.0
    %1997 = vmatpush1.msra.mxu0 0.0
    %1998 = vmatprep.subr.mxu0 0.0
    %1999 = vmatpush1.msra.mxu0 0.0
    %2000 = vmatprep.subr.mxu0 0.0
    %2001 = vmatpush1.msra.mxu0 0.0
    %2002 = vmatprep.subr.mxu0 0.0
    %2003 = vmatpush1.msra.mxu0 0.0
    %2004 = vmatprep.subr.mxu0 0.0
    %2005 = vmatpush1.msra.mxu0 0.0
    %2006 = vmatprep.subr.mxu0 0.0
    %2007 = vmatpush1.msra.mxu0 0.0
    %2008 = vmatprep.subr.mxu0 0.0
    %2009 = vmatpush1.msra.mxu0 0.0
    %2010 = vmatprep.subr.mxu0 0.0
    %2011 = vmatpush1.msra.mxu0 0.0
    %2012 = vmatprep.subr.mxu0 0.0
    %2013 = vmatpush1.msra.mxu0 0.0
    %2014 = vmatprep.subr.mxu0 0.0
    %2015 = vmatpush1.msra.mxu0 0.0
    %2016 = vmatprep.subr.mxu0 0.0
    %2017 = vmatpush1.msra.mxu0 0.0
    %2018 = vmatprep.subr.mxu0 0.0
    %2019 = vmatpush1.msra.mxu0 0.0
    %2020 = vmatprep.subr.mxu0 0.0
    %2021 = vmatpush1.msra.mxu0 0.0
    %2022 = vmatprep.subr.mxu0 0.0
    %2023 = vmatpush1.msra.mxu0 0.0
    %2024 = vmatprep.subr.mxu0 0.0
    %2025 = vmatpush1.msra.mxu0 0.0
    %2026 = vmatprep.subr.mxu0 0.0
    %2027 = vmatpush1.msra.mxu0 0.0
    %2028 = vmatprep.subr.mxu0 0.0
    %2029 = vmatpush1.msra.mxu0 0.0
    %2030 = vmatprep.subr.mxu0 0.0
    %2031 = vmatpush1.msra.mxu0 0.0
    %2032 = vmatprep.subr.mxu0 0.0
    %2033 = vmatpush1.msra.mxu0 0.0
    %2034 = vmatprep.subr.mxu0 0.0
    %2035 = vmatpush1.msra.mxu0 0.0
    %2036 = vmatprep.subr.mxu0 0.0
    %2037 = vmatpush1.msra.mxu0 0.0
    %2038 = vmatprep.subr.mxu0 0.0
    %2039 = vmatpush1.msra.mxu0 0.0
    %2040 = vmatprep.subr.mxu0 0.0
    %2041 = vmatpush1.msra.mxu0 0.0
    %2042 = vmatprep.subr.mxu0 0.0
    %2043 = vmatpush1.msra.mxu0 0.0
    %2044 = vmatprep.subr.mxu0 0.0
    %2045 = vmatpush1.msra.mxu0 0.0
    %2046 = vmatprep.subr.mxu0 0.0
    %2047 = vmatpush1.msra.mxu0 0.0
    %2048 = vmatprep.mubr.f32.mxu0 0.0
    %2049 = vmatmul.mubr.f32.gmra.mrb[0].mxu0 %v1982
    %v2050 = vpop.f32.mrb[0].mxu0
    %v2051 = vadd.f32 0.0, %v2050
    %v2052 = vpop.f32.mrb[0].mxu0
    %2053 = vdwg.mxu0
    %v2054 = vsel %vm115, %v1969, 0
    %2056 = vmatprep.subr.mxu0 0.0
    %2057 = vmatpush1.msra.mxu0 %v1972
    %2058 = vmatprep.subr.mxu0 0.0
    %2059 = vmatpush1.msra.mxu0 %v1973
    %2060 = vmatprep.subr.mxu0 0.0
    %2061 = vmatpush1.msra.mxu0 %v1974
    %2062 = vmatprep.subr.mxu0 0.0
    %2063 = vmatpush1.msra.mxu0 %v1975
    %2064 = vmatprep.subr.mxu0 0.0
    %2065 = vmatpush1.msra.mxu0 0.0
    %2066 = vmatprep.subr.mxu0 0.0
    %2067 = vmatpush1.msra.mxu0 0.0
    %2068 = vmatprep.subr.mxu0 0.0
    %2069 = vmatpush1.msra.mxu0 0.0
    %2070 = vmatprep.subr.mxu0 0.0
    %2071 = vmatpush1.msra.mxu0 0.0
    %2072 = vmatprep.subr.mxu0 0.0
    %2073 = vmatpush1.msra.mxu0 0.0
    %2074 = vmatprep.subr.mxu0 0.0
    %2075 = vmatpush1.msra.mxu0 0.0
    %2076 = vmatprep.subr.mxu0 0.0
    %2077 = vmatpush1.msra.mxu0 0.0
    %2078 = vmatprep.subr.mxu0 0.0
    %2079 = vmatpush1.msra.mxu0 0.0
    %2080 = vmatprep.subr.mxu0 0.0
    %2081 = vmatpush1.msra.mxu0 0.0
    %2082 = vmatprep.subr.mxu0 0.0
    %2083 = vmatpush1.msra.mxu0 0.0
    %2084 = vmatprep.subr.mxu0 0.0
    %2085 = vmatpush1.msra.mxu0 0.0
    %2086 = vmatprep.subr.mxu0 0.0
    %2087 = vmatpush1.msra.mxu0 0.0
    %2088 = vmatprep.subr.mxu0 0.0
    %2089 = vmatpush1.msra.mxu0 0.0
    %2090 = vmatprep.subr.mxu0 0.0
    %2091 = vmatpush1.msra.mxu0 0.0
    %2092 = vmatprep.subr.mxu0 0.0
    %2093 = vmatpush1.msra.mxu0 0.0
    %2094 = vmatprep.subr.mxu0 0.0
    %2095 = vmatpush1.msra.mxu0 0.0
    %2096 = vmatprep.subr.mxu0 0.0
    %2097 = vmatpush1.msra.mxu0 0.0
    %2098 = vmatprep.subr.mxu0 0.0
    %2099 = vmatpush1.msra.mxu0 0.0
    %2100 = vmatprep.subr.mxu0 0.0
    %2101 = vmatpush1.msra.mxu0 0.0
    %2102 = vmatprep.subr.mxu0 0.0
    %2103 = vmatpush1.msra.mxu0 0.0
    %2104 = vmatprep.subr.mxu0 0.0
    %2105 = vmatpush1.msra.mxu0 0.0
    %2106 = vmatprep.subr.mxu0 0.0
    %2107 = vmatpush1.msra.mxu0 0.0
    %2108 = vmatprep.subr.mxu0 0.0
    %2109 = vmatpush1.msra.mxu0 0.0
    %2110 = vmatprep.subr.mxu0 0.0
    %2111 = vmatpush1.msra.mxu0 0.0
    %2112 = vmatprep.subr.mxu0 0.0
    %2113 = vmatpush1.msra.mxu0 0.0
    %2114 = vmatprep.subr.mxu0 0.0
    %2115 = vmatpush1.msra.mxu0 0.0
    %2116 = vmatprep.subr.mxu0 0.0
    %2117 = vmatpush1.msra.mxu0 0.0
    %2118 = vmatprep.subr.mxu0 0.0
    %2119 = vmatpush1.msra.mxu0 0.0
    %2120 = vmatprep.mubr.f32.mxu0 0.0
    %2121 = vmatmul.mubr.f32.gmra.mrb[0].mxu0 %v2054
    %v2122 = vpop.f32.mrb[0].mxu0
    %v2123 = vadd.f32 %v2051, %v2122
    %v2124 = vpop.f32.mrb[0].mxu0
    %2125 = vdwg.mxu0
    %v2126 = vadd.f32 %v2123, %v204
    %v2127 = vtanh.pop %v2126
    %2128 = vst.msk [vmem:[%s306] sm:$0x3] %vm300, %v2127
    %v2131 = vunpack.c.l.s4 1966171168
    %v2132 = vunpack.c.0.s8 %v2131
    %v2133 = vlaneseq
    %v2134 = vshrl.u32 %v2133, 7
    %v2135 = vsub.s32 %v2132, %v2134
    %v2136 = vrot.slane %v2127, %v2135
    %v2137 = vcombine.high %v2136, %v2136
    %v2139 = vunpack.c.l.s4 1966171168
    %v2140 = vunpack.c.0.s8 %v2139
    %v2141 = vlaneseq
    %v2142 = vshrl.u32 %v2141, 7
    %v2143 = vsub.s32 %v2140, %v2142
    %v2144 = vrot.slane %v2136, %v2143
    %v2146 = vunpack.c.l.s4 1966171168
    %v2147 = vunpack.c.0.s8 %v2146
    %v2148 = vlaneseq
    %v2149 = vshrl.u32 %v2148, 7
    %v2150 = vsub.s32 %v2147, %v2149
    %v2151 = vrot.slane %v2137, %v2150
    %2154 = vst.msk [vmem:[#allocation13 + $0x6] sm:$0x1] %vm485, %v2144
    %2155 = vst.msk [vmem:[#allocation13 + $0xe] sm:$0x1] %vm485, %v2151
    %v2156 = vld [vmem:[#allocation2 + $0x7] sm:$0x1]
    %v2157 = vld [vmem:[#allocation2 + $0xf] sm:$0x1]
    %v2158 = vld [vmem:[#allocation3] sm:$0x3]
    %v2159 = vld [vmem:[#allocation9] sm:$0xff]
    %v2160 = vld [vmem:[#allocation9 + $0x8] sm:$0xff]
    %v2161 = vld [vmem:[#allocation9 + $0x10] sm:$0xff]
    %v2162 = vld [vmem:[#allocation9 + $0x18] sm:$0xff]
    %v2164 = vsel %vm115, %v2158, 0
    %2166 = vmatprep.subr.mxu0 0.0
    %2167 = vmatpush1.msra.mxu0 %v2159
    %2168 = vmatprep.subr.mxu0 0.0
    %2169 = vmatpush1.msra.mxu0 %v2160
    %2170 = vmatprep.subr.mxu0 0.0
    %2171 = vmatpush1.msra.mxu0 %v2161
    %2172 = vmatprep.subr.mxu0 0.0
    %2173 = vmatpush1.msra.mxu0 %v2162
    %2174 = vmatprep.subr.mxu0 0.0
    %2175 = vmatpush1.msra.mxu0 0.0
    %2176 = vmatprep.subr.mxu0 0.0
    %2177 = vmatpush1.msra.mxu0 0.0
    %2178 = vmatprep.subr.mxu0 0.0
    %2179 = vmatpush1.msra.mxu0 0.0
    %2180 = vmatprep.subr.mxu0 0.0
    %2181 = vmatpush1.msra.mxu0 0.0
    %2182 = vmatprep.subr.mxu0 0.0
    %2183 = vmatpush1.msra.mxu0 0.0
    %2184 = vmatprep.subr.mxu0 0.0
    %2185 = vmatpush1.msra.mxu0 0.0
    %2186 = vmatprep.subr.mxu0 0.0
    %2187 = vmatpush1.msra.mxu0 0.0
    %2188 = vmatprep.subr.mxu0 0.0
    %2189 = vmatpush1.msra.mxu0 0.0
    %2190 = vmatprep.subr.mxu0 0.0
    %2191 = vmatpush1.msra.mxu0 0.0
    %2192 = vmatprep.subr.mxu0 0.0
    %2193 = vmatpush1.msra.mxu0 0.0
    %2194 = vmatprep.subr.mxu0 0.0
    %2195 = vmatpush1.msra.mxu0 0.0
    %2196 = vmatprep.subr.mxu0 0.0
    %2197 = vmatpush1.msra.mxu0 0.0
    %2198 = vmatprep.subr.mxu0 0.0
    %2199 = vmatpush1.msra.mxu0 0.0
    %2200 = vmatprep.subr.mxu0 0.0
    %2201 = vmatpush1.msra.mxu0 0.0
    %2202 = vmatprep.subr.mxu0 0.0
    %2203 = vmatpush1.msra.mxu0 0.0
    %2204 = vmatprep.subr.mxu0 0.0
    %2205 = vmatpush1.msra.mxu0 0.0
    %2206 = vmatprep.subr.mxu0 0.0
    %2207 = vmatpush1.msra.mxu0 0.0
    %2208 = vmatprep.subr.mxu0 0.0
    %2209 = vmatpush1.msra.mxu0 0.0
    %2210 = vmatprep.subr.mxu0 0.0
    %2211 = vmatpush1.msra.mxu0 0.0
    %2212 = vmatprep.subr.mxu0 0.0
    %2213 = vmatpush1.msra.mxu0 0.0
    %2214 = vmatprep.subr.mxu0 0.0
    %2215 = vmatpush1.msra.mxu0 0.0
    %2216 = vmatprep.subr.mxu0 0.0
    %2217 = vmatpush1.msra.mxu0 0.0
    %2218 = vmatprep.subr.mxu0 0.0
    %2219 = vmatpush1.msra.mxu0 0.0
    %2220 = vmatprep.subr.mxu0 0.0
    %2221 = vmatpush1.msra.mxu0 0.0
    %2222 = vmatprep.subr.mxu0 0.0
    %2223 = vmatpush1.msra.mxu0 0.0
    %2224 = vmatprep.subr.mxu0 0.0
    %2225 = vmatpush1.msra.mxu0 0.0
    %2226 = vmatprep.subr.mxu0 0.0
    %2227 = vmatpush1.msra.mxu0 0.0
    %2228 = vmatprep.subr.mxu0 0.0
    %2229 = vmatpush1.msra.mxu0 0.0
    %2230 = vmatprep.mubr.f32.mxu0 0.0
    %2231 = vmatmul.mubr.f32.gmra.mrb[0].mxu0 %v2164
    %v2232 = vpop.f32.mrb[0].mxu0
    %v2233 = vadd.f32 0.0, %v2232
    %v2234 = vpop.f32.mrb[0].mxu0
    %2235 = vdwg.mxu0
    %v2237 = vrot.slane %v2233, 1
    %v2240 = vadd.f32 %v2156, %v2233
    %v2241 = vadd.f32 %v2157, %v2237
    %v2242 = vtanh.pop %v2240
    %v2243 = vtanh.pop %v2241
    %v2246 = vrot.slane %v2243, 7
    %v2247 = vsel %vm297, %v2246, %v2242
    %2249 = vst.msk [vmem:[#allocation3] sm:$0x3] %vm300, %v2247
    %v2250 = vld [vmem:[#allocation10] sm:$0xff]
    %v2251 = vld [vmem:[#allocation10 + $0x8] sm:$0xff]
    %v2252 = vld [vmem:[#allocation10 + $0x10] sm:$0xff]
    %v2253 = vld [vmem:[#allocation10 + $0x18] sm:$0xff]
    %v2254 = vld [vmem:[%s306] sm:$0x3]
    %v2255 = vld [vmem:[#allocation12] sm:$0xff]
    %v2256 = vld [vmem:[#allocation12 + $0x8] sm:$0xff]
    %v2257 = vld [vmem:[#allocation12 + $0x10] sm:$0xff]
    %v2258 = vld [vmem:[#allocation12 + $0x18] sm:$0xff]
    %v2260 = vsel %vm115, %v2254, 0
    %2262 = vmatprep.subr.mxu0 0.0
    %2263 = vmatpush1.msra.mxu0 %v2255
    %2264 = vmatprep.subr.mxu0 0.0
    %2265 = vmatpush1.msra.mxu0 %v2256
    %2266 = vmatprep.subr.mxu0 0.0
    %2267 = vmatpush1.msra.mxu0 %v2257
    %2268 = vmatprep.subr.mxu0 0.0
    %2269 = vmatpush1.msra.mxu0 %v2258
    %2270 = vmatprep.subr.mxu0 0.0
    %2271 = vmatpush1.msra.mxu0 0.0
    %2272 = vmatprep.subr.mxu0 0.0
    %2273 = vmatpush1.msra.mxu0 0.0
    %2274 = vmatprep.subr.mxu0 0.0
    %2275 = vmatpush1.msra.mxu0 0.0
    %2276 = vmatprep.subr.mxu0 0.0
    %2277 = vmatpush1.msra.mxu0 0.0
    %2278 = vmatprep.subr.mxu0 0.0
    %2279 = vmatpush1.msra.mxu0 0.0
    %2280 = vmatprep.subr.mxu0 0.0
    %2281 = vmatpush1.msra.mxu0 0.0
    %2282 = vmatprep.subr.mxu0 0.0
    %2283 = vmatpush1.msra.mxu0 0.0
    %2284 = vmatprep.subr.mxu0 0.0
    %2285 = vmatpush1.msra.mxu0 0.0
    %2286 = vmatprep.subr.mxu0 0.0
    %2287 = vmatpush1.msra.mxu0 0.0
    %2288 = vmatprep.subr.mxu0 0.0
    %2289 = vmatpush1.msra.mxu0 0.0
    %2290 = vmatprep.subr.mxu0 0.0
    %2291 = vmatpush1.msra.mxu0 0.0
    %2292 = vmatprep.subr.mxu0 0.0
    %2293 = vmatpush1.msra.mxu0 0.0
    %2294 = vmatprep.subr.mxu0 0.0
    %2295 = vmatpush1.msra.mxu0 0.0
    %2296 = vmatprep.subr.mxu0 0.0
    %2297 = vmatpush1.msra.mxu0 0.0
    %2298 = vmatprep.subr.mxu0 0.0
    %2299 = vmatpush1.msra.mxu0 0.0
    %2300 = vmatprep.subr.mxu0 0.0
    %2301 = vmatpush1.msra.mxu0 0.0
    %2302 = vmatprep.subr.mxu0 0.0
    %2303 = vmatpush1.msra.mxu0 0.0
    %2304 = vmatprep.subr.mxu0 0.0
    %2305 = vmatpush1.msra.mxu0 0.0
    %2306 = vmatprep.subr.mxu0 0.0
    %2307 = vmatpush1.msra.mxu0 0.0
    %2308 = vmatprep.subr.mxu0 0.0
    %2309 = vmatpush1.msra.mxu0 0.0
    %2310 = vmatprep.subr.mxu0 0.0
    %2311 = vmatpush1.msra.mxu0 0.0
    %2312 = vmatprep.subr.mxu0 0.0
    %2313 = vmatpush1.msra.mxu0 0.0
    %2314 = vmatprep.subr.mxu0 0.0
    %2315 = vmatpush1.msra.mxu0 0.0
    %2316 = vmatprep.subr.mxu0 0.0
    %2317 = vmatpush1.msra.mxu0 0.0
    %2318 = vmatprep.subr.mxu0 0.0
    %2319 = vmatpush1.msra.mxu0 0.0
    %2320 = vmatprep.subr.mxu0 0.0
    %2321 = vmatpush1.msra.mxu0 0.0
    %2322 = vmatprep.subr.mxu0 0.0
    %2323 = vmatpush1.msra.mxu0 0.0
    %2324 = vmatprep.subr.mxu0 0.0
    %2325 = vmatpush1.msra.mxu0 0.0
    %2326 = vmatprep.mubr.f32.mxu0 0.0
    %2327 = vmatmul.mubr.f32.gmra.mrb[0].mxu0 %v2260
    %v2328 = vpop.f32.mrb[0].mxu0
    %v2329 = vadd.f32 0.0, %v2328
    %v2330 = vpop.f32.mrb[0].mxu0
    %2331 = vdwg.mxu0
    %v2332 = vsel %vm115, %v2247, 0
    %2334 = vmatprep.subr.mxu0 0.0
    %2335 = vmatpush1.msra.mxu0 %v2250
    %2336 = vmatprep.subr.mxu0 0.0
    %2337 = vmatpush1.msra.mxu0 %v2251
    %2338 = vmatprep.subr.mxu0 0.0
    %2339 = vmatpush1.msra.mxu0 %v2252
    %2340 = vmatprep.subr.mxu0 0.0
    %2341 = vmatpush1.msra.mxu0 %v2253
    %2342 = vmatprep.subr.mxu0 0.0
    %2343 = vmatpush1.msra.mxu0 0.0
    %2344 = vmatprep.subr.mxu0 0.0
    %2345 = vmatpush1.msra.mxu0 0.0
    %2346 = vmatprep.subr.mxu0 0.0
    %2347 = vmatpush1.msra.mxu0 0.0
    %2348 = vmatprep.subr.mxu0 0.0
    %2349 = vmatpush1.msra.mxu0 0.0
    %2350 = vmatprep.subr.mxu0 0.0
    %2351 = vmatpush1.msra.mxu0 0.0
    %2352 = vmatprep.subr.mxu0 0.0
    %2353 = vmatpush1.msra.mxu0 0.0
    %2354 = vmatprep.subr.mxu0 0.0
    %2355 = vmatpush1.msra.mxu0 0.0
    %2356 = vmatprep.subr.mxu0 0.0
    %2357 = vmatpush1.msra.mxu0 0.0
    %2358 = vmatprep.subr.mxu0 0.0
    %2359 = vmatpush1.msra.mxu0 0.0
    %2360 = vmatprep.subr.mxu0 0.0
    %2361 = vmatpush1.msra.mxu0 0.0
    %2362 = vmatprep.subr.mxu0 0.0
    %2363 = vmatpush1.msra.mxu0 0.0
    %2364 = vmatprep.subr.mxu0 0.0
    %2365 = vmatpush1.msra.mxu0 0.0
    %2366 = vmatprep.subr.mxu0 0.0
    %2367 = vmatpush1.msra.mxu0 0.0
    %2368 = vmatprep.subr.mxu0 0.0
    %2369 = vmatpush1.msra.mxu0 0.0
    %2370 = vmatprep.subr.mxu0 0.0
    %2371 = vmatpush1.msra.mxu0 0.0
    %2372 = vmatprep.subr.mxu0 0.0
    %2373 = vmatpush1.msra.mxu0 0.0
    %2374 = vmatprep.subr.mxu0 0.0
    %2375 = vmatpush1.msra.mxu0 0.0
    %2376 = vmatprep.subr.mxu0 0.0
    %2377 = vmatpush1.msra.mxu0 0.0
    %2378 = vmatprep.subr.mxu0 0.0
    %2379 = vmatpush1.msra.mxu0 0.0
    %2380 = vmatprep.subr.mxu0 0.0
    %2381 = vmatpush1.msra.mxu0 0.0
    %2382 = vmatprep.subr.mxu0 0.0
    %2383 = vmatpush1.msra.mxu0 0.0
    %2384 = vmatprep.subr.mxu0 0.0
    %2385 = vmatpush1.msra.mxu0 0.0
    %2386 = vmatprep.subr.mxu0 0.0
    %2387 = vmatpush1.msra.mxu0 0.0
    %2388 = vmatprep.subr.mxu0 0.0
    %2389 = vmatpush1.msra.mxu0 0.0
    %2390 = vmatprep.subr.mxu0 0.0
    %2391 = vmatpush1.msra.mxu0 0.0
    %2392 = vmatprep.subr.mxu0 0.0
    %2393 = vmatpush1.msra.mxu0 0.0
    %2394 = vmatprep.subr.mxu0 0.0
    %2395 = vmatpush1.msra.mxu0 0.0
    %2396 = vmatprep.subr.mxu0 0.0
    %2397 = vmatpush1.msra.mxu0 0.0
    %2398 = vmatprep.mubr.f32.mxu0 0.0
    %2399 = vmatmul.mubr.f32.gmra.mrb[0].mxu0 %v2332
    %v2400 = vpop.f32.mrb[0].mxu0
    %v2401 = vadd.f32 %v2329, %v2400
    %v2402 = vpop.f32.mrb[0].mxu0
    %2403 = vdwg.mxu0
    %v2404 = vadd.f32 %v2401, %v204
    %v2405 = vtanh.pop %v2404
    %2406 = vst.msk [vmem:[%s306] sm:$0x3] %vm300, %v2405
    %v2409 = vunpack.c.l.s4 1966171168
    %v2410 = vunpack.c.0.s8 %v2409
    %v2411 = vlaneseq
    %v2412 = vshrl.u32 %v2411, 7
    %v2413 = vsub.s32 %v2410, %v2412
    %v2414 = vrot.slane %v2405, %v2413
    %v2415 = vcombine.high %v2414, %v2414
    %v2417 = vunpack.c.l.s4 1966171168
    %v2418 = vunpack.c.0.s8 %v2417
    %v2419 = vlaneseq
    %v2420 = vshrl.u32 %v2419, 7
    %v2421 = vsub.s32 %v2418, %v2420
    %v2422 = vrot.slane %v2414, %v2421
    %v2424 = vunpack.c.l.s4 1966171168
    %v2425 = vunpack.c.0.s8 %v2424
    %v2426 = vlaneseq
    %v2427 = vshrl.u32 %v2426, 7
    %v2428 = vsub.s32 %v2425, %v2427
    %v2429 = vrot.slane %v2415, %v2428
    %2432 = vst.msk [vmem:[#allocation13 + $0x7] sm:$0x1] %vm485, %v2422
    %2433 = vst.msk [vmem:[#allocation13 + $0xf] sm:$0x1] %vm485, %v2429
    // Predicated region
    $region54: #{tpu_custom_call.1} parent=1 // pred_check
      _
    $region55: #{tpu_custom_call.1} parent=1 // pred_check_branch
      %2435 = sbr.rel (0) target = $region57
    $region56: #{tpu_custom_call.1} parent=1 // pred_region
      %s2437 = ssub.s32 256, 256
      %2438 = vsyncadd [#allocation6], %s2437
      %s2439 = sshll.u32 [#allocation13], 4
      %s2440 = int_to_ptr.vmem [resolvable:$true] %s2439
      %2445 = dma.vmem_to_hbm [thread:$0]  %s2440, 256, %s7, [#allocation6], 128, 128, 8
    $region57: #{tpu_custom_call.1} parent=1 // pred_fallthru
      _
    // Predicated region
    $region58: #{tpu_custom_call.1} parent=1 // pred_check
      _
    $region59: #{tpu_custom_call.1} parent=1 // pred_check_branch
      %2447 = sbr.rel (0) target = $region61
    $region60: #{tpu_custom_call.1} parent=1 // pred_region
      %2448 = dma.done [#allocation6], 256
    $region61: #{tpu_custom_call.1} parent=1 // pred_fallthru
      _
    %2449 = vsyncpa [#allocation5], 1
    %2450 = vsyncpa [#allocation8], 1
    %2451 = vsyncpa [#allocation11], 1
    %2452 = vsyncpa [#allocation6], 1

</llo_original>
